<compile_context>
chip_gen: v6e
topology: v6e:2x2x1
jax: 0.10.0
libtpu: 0.0.40
codegen_flags: <defaults>
</compile_context>

<pallas_src>
import jax
import jax.numpy as jnp
from jax.experimental import pallas as pl
from jax.experimental.pallas import tpu as pltpu


def _round_up(n, m):
    return ((n + m - 1) // m) * m


def linear_regression_forward(x, weight, bias):
    """y = x @ weight.T + bias with weight (1, D), bias (1,). Returns (B, 1)."""
    B, D = x.shape
    out_dtype = x.dtype
    itemsize = jnp.dtype(x.dtype).itemsize

    LANE = 128
    OUT_GRAN = 8 * LANE                 # tb granularity -> (8, tb//8) out block aligned
    X_TILE_BUDGET = 4 * 1024 * 1024     # bytes per x block (double-buffered ~8 MiB)

    # --- D tile: keep full D if a 1024-row block fits the budget, else tile D. ---
    if OUT_GRAN * D * itemsize <= X_TILE_BUDGET:
        td = D
    else:
        td = max(LANE, (X_TILE_BUDGET // (OUT_GRAN * itemsize) // LANE) * LANE)
    num_d = -(-D // td)
    rem = D % td                        # static; nonzero only when D is tiled

    # --- Batch tile: as big as the budget allows (multiple of 1024 rows). ---
    bytes_per_row = max(1, td * itemsize)
    tb = (X_TILE_BUDGET // bytes_per_row // OUT_GRAN) * OUT_GRAN
    tb = int(max(OUT_GRAN, min(tb, 32 * 1024)))      # 32K cap keeps acc/out tiny
    tb = min(tb, _round_up(B, OUT_GRAN))             # no bigger than what covers B
    if B >= 2 * OUT_GRAN:                            # v7x: >=2 tiles -> both TCs busy
        tb = min(tb, _round_up(-(-B // 2), OUT_GRAN))
    num_b = -(-B // tb)

    def kernel(x_ref, w_ref, b_ref, o_ref, acc_ref):
        # x_ref: (tb, td) VMEM | w_ref: (1, td) VMEM | b_ref: (1,) SMEM
        # o_ref: (8, tb//8) VMEM (sublane/lane-dense) | acc_ref: (1, tb) f32 VMEM
        d = pl.program_id(1)
        nd = pl.num_programs(1)

        @pl.when(d == 0)
        def _():
            acc_ref[...] = jnp.zeros_like(acc_ref)

        x_blk = x_ref[...]
        w_blk = w_ref[...]
        if rem:
            # Last D tile is padded with garbage lanes; zero both operands there
            # so nothing (not even NaN garbage) leaks into the accumulator.
            limit = jnp.where(d == nd - 1, rem, td)
            lane = jax.lax.broadcasted_iota(jnp.int32, (1, td), 1)
            keep = lane < limit
            w_blk = jnp.where(keep, w_blk, 0)
            x_blk = jnp.where(keep, x_blk, 0)

        # (1, TD) . (TB, TD) contracted over TD -> lane-dense (1, TB) on the MXU,
        # f32 accumulation (MXU is otherwise idle in this DMA-bound kernel).
        acc_ref[...] += jax.lax.dot_general(
            w_blk, x_blk,
            dimension_numbers=(((1,), (1,)), ((), ())),
            preferred_element_type=jnp.float32,
            precision=jax.lax.Precision.HIGHEST,
        )

        @pl.when(d == nd - 1)
        def _():
            y = acc_ref[...] + b_ref[0]               # scalar bias from SMEM
            o_ref[...] = y.reshape(o_ref.shape).astype(o_ref.dtype)

    out = pl.pallas_call(
        kernel,
        out_shape=jax.ShapeDtypeStruct((num_b * 8, tb // 8), out_dtype),
        grid=(num_b, num_d),
        in_specs=[
            pl.BlockSpec((tb, td), lambda i, d: (i, d)),           # x: pipelined tiles
            pl.BlockSpec((1, td), lambda i, d: (0, d)),            # weight row
            pl.BlockSpec(memory_space=pltpu.MemorySpace.SMEM),     # bias: SMEM scalar
        ],
        out_specs=pl.BlockSpec((8, tb // 8), lambda i, d: (i, 0)),  # dense out block
        scratch_shapes=[pltpu.VMEM((1, tb), jnp.float32)],          # f32 accumulator
        compiler_params=pltpu.CompilerParams(
            dimension_semantics=("parallel", "arbitrary"),
        ),
        cost_estimate=pl.CostEstimate(
            flops=2 * B * D,
            transcendentals=0,
            bytes_accessed=B * D * itemsize + D * itemsize
                           + B * jnp.dtype(out_dtype).itemsize,
        ),
    )(x, weight, bias)

    # (num_b*8, tb//8) flattens row-major back to per-tile batch order;
    # drop the tail-block garbage rows and restore the PyTorch (B, 1) layout.
    return out.reshape(-1)[:B].reshape(B, 1)


if __name__ == "__main__":
    key = jax.random.PRNGKey(0)
    kx, kw, kb = jax.random.split(key, 3)

    batch, input_dim = 8, 32
    x = jax.random.normal(kx, (batch, input_dim), dtype=jnp.float32)

    # Deterministic parameter init (mimics nn.Linear's uniform(-1/sqrt(D), 1/sqrt(D)))
    bound = 1.0 / jnp.sqrt(jnp.float32(input_dim))
    weight = jax.random.uniform(kw, (1, input_dim), minval=-bound, maxval=bound,
                                dtype=jnp.float32)
    bias = jax.random.uniform(kb, (1,), minval=-bound, maxval=bound,
                              dtype=jnp.float32)

    y = linear_regression_forward(x, weight, bias)
    jax.block_until_ready(y)

    # Exact-f32 elementwise reference of the PyTorch forward.
    y_ref = jnp.sum(x * weight, axis=-1, keepdims=True) + bias
    assert y.shape == (batch, 1)
    assert jnp.allclose(y, y_ref, atol=1e-4, rtol=1e-4), "mismatch vs reference"

    print("KERNEL_OK")
</pallas_src>

<mosaic_0001>
module attributes {stable_mosaic.version = 11 : i64} {
  func.func @kernel(%arg0: i32, %arg1: i32, %arg2: memref<1024x32xf32, #tpu.memory_space<vmem>>, %arg3: memref<1x32xf32, #tpu.memory_space<vmem>>, %arg4: memref<1xf32, #tpu.memory_space<smem>>, %arg5: memref<8x128xf32, #tpu.memory_space<vmem>>, %arg6: memref<1x1024xf32, #tpu.memory_space<vmem>>) attributes {dimension_semantics = [#tpu.dimension_semantics<parallel>, #tpu.dimension_semantics<arbitrary>], iteration_bounds = array<i64: 1, 1>, scalar_prefetch = 0 : i64, scratch_operands = 1 : i64, tpu.core_type = #tpu.core_type<tc>, window_params = [{transform_indices = @transform_0, window_bounds = array<i64: 1024, 32>}, {transform_indices = @transform_1, window_bounds = array<i64: 1, 32>}, {transform_indices = @transform_2, window_bounds = array<i64: 1>}, {transform_indices = @transform_3, window_bounds = array<i64: 8, 128>}]} {
    %c0_i32 = arith.constant 0 : i32
    %0 = arith.cmpi eq, %arg1, %c0_i32 : i32
    %1 = arith.extui %0 : i1 to i32
    %c0_i32_0 = arith.constant 0 : i32
    %2 = arith.cmpi ne, %1, %c0_i32_0 : i32
    scf.if %2 {
      %cst_10 = arith.constant 0.000000e+00 : f32
      %12 = vector.broadcast %cst_10 : f32 to vector<1x1024xf32>
      %c0_11 = arith.constant 0 : index
      %c0_12 = arith.constant 0 : index
      %13 = vector.load %arg6[%c0_11, %c0_12] : memref<1x1024xf32, #tpu.memory_space<vmem>>, vector<1x1024xf32>
      tpu.vector_store %arg6[%c0_11, %c0_12], %12 {strides = array<i32>} : memref<1x1024xf32, #tpu.memory_space<vmem>>, vector<1x1024xf32>,
    } else {
    }
    %c0 = arith.constant 0 : index
    %c0_1 = arith.constant 0 : index
    %3 = vector.load %arg2[%c0, %c0_1] : memref<1024x32xf32, #tpu.memory_space<vmem>>, vector<1024x32xf32>
    %c0_2 = arith.constant 0 : index
    %c0_3 = arith.constant 0 : index
    %4 = vector.load %arg3[%c0_2, %c0_3] : memref<1x32xf32, #tpu.memory_space<vmem>>, vector<1x32xf32>
    %c0_4 = arith.constant 0 : index
    %c0_5 = arith.constant 0 : index
    %5 = vector.load %arg6[%c0_4, %c0_5] : memref<1x1024xf32, #tpu.memory_space<vmem>>, vector<1x1024xf32>
    %cst = arith.constant dense<0.000000e+00> : vector<1x1024xf32>
    %6 = tpu.matmul %4, %3, %cst {dimension_numbers = #tpu.dot_dimension_numbers<[1], [1], [0], [0], [0, 0, 1, 0], [], []>, precision = #tpu.contract_precision<fp32>} : vector<1x32xf32>, vector<1024x32xf32>, vector<1x1024xf32> -> vector<1x1024xf32>
    %7 = arith.addf %5, %6 : vector<1x1024xf32>
    %c0_6 = arith.constant 0 : index
    %c0_7 = arith.constant 0 : index
    %8 = vector.load %arg6[%c0_6, %c0_7] : memref<1x1024xf32, #tpu.memory_space<vmem>>, vector<1x1024xf32>
    tpu.vector_store %arg6[%c0_6, %c0_7], %7 {strides = array<i32>} : memref<1x1024xf32, #tpu.memory_space<vmem>>, vector<1x1024xf32>,
    %c0_i32_8 = arith.constant 0 : i32
    %9 = arith.cmpi eq, %arg1, %c0_i32_8 : i32
    %10 = arith.extui %9 : i1 to i32
    %c0_i32_9 = arith.constant 0 : i32
    %11 = arith.cmpi ne, %10, %c0_i32_9 : i32
    scf.if %11 {
      %c0_10 = arith.constant 0 : index
      %c0_11 = arith.constant 0 : index
      %12 = vector.load %arg6[%c0_10, %c0_11] : memref<1x1024xf32, #tpu.memory_space<vmem>>, vector<1x1024xf32>
      %c0_12 = arith.constant 0 : index
      %13 = memref.load %arg4[%c0_12] : memref<1xf32, #tpu.memory_space<smem>>
      %14 = vector.broadcast %13 : f32 to vector<1x1024xf32>
      %15 = arith.addf %12, %14 : vector<1x1024xf32>
      %16 = vector.shape_cast %15 : vector<1x1024xf32> to vector<8x128xf32>
      %c0_13 = arith.constant 0 : index
      %c0_14 = arith.constant 0 : index
      %17 = vector.load %arg5[%c0_13, %c0_14] : memref<8x128xf32, #tpu.memory_space<vmem>>, vector<8x128xf32>
      tpu.vector_store %arg5[%c0_13, %c0_14], %16 {strides = array<i32>} : memref<8x128xf32, #tpu.memory_space<vmem>>, vector<8x128xf32>,
    } else {
    }
    return
  }
  func.func @transform_0(%arg0: i32, %arg1: i32) -> (i32, i32) {
    %c0_i32 = arith.constant 0 : i32
    return %arg0, %arg1 : i32, i32
  }
  func.func @transform_1(%arg0: i32, %arg1: i32) -> (i32, i32) {
    %c0_i32 = arith.constant 0 : i32
    %c0_i32_0 = arith.constant 0 : i32
    return %c0_i32, %arg1 : i32, i32
  }
  func.func @transform_2(%arg0: i32, %arg1: i32) -> i32 {
    %c0_i32 = arith.constant 0 : i32
    %c0_i32_0 = arith.constant 0 : i32
    return %c0_i32 : i32
  }
  func.func @transform_3(%arg0: i32, %arg1: i32) -> (i32, i32) {
    %c0_i32 = arith.constant 0 : i32
    %c0_i32_0 = arith.constant 0 : i32
    return %arg0, %c0_i32 : i32, i32
  }
}

</mosaic_0001>

<llo_original>
// kernel: tpu_custom_call.1
$region0: #{tpu_custom_call.1}
  #allocation0 [shape = 'u32[]', space=smem, size = 0x4, offset = 0x4, fixed_abs, tag = 'smem constant byte address 0x4 - core index']
  #allocation1 [shape = 'u32[144,128]{1,0:T(1,128)}', space=vmem, size = 0x12000, scoped, tag = 'internal scratch']
  #allocation2 [shape = 'f32[1,1024]{1,0:T(1,128)}', space=vmem, size = 0x1000, scoped, tag = 'scratch operand']
  #allocation3 [shape = 'f32[1]{0:T(128)S(6)}', space=smem, size = 0x200, scoped, tag = 'scoped memory for tpu_custom_call.1']
  %s0 = inlined_call_operand.hbm [shape: f32[8,32], index: 0, kind: input, shape index: {}]
  %s1 = inlined_call_operand.vmem [shape: f32[1,32], index: 1, kind: input, shape index: {}]
  %s2 = inlined_call_operand.<no memory space> [shape: f32[1], index: 2, kind: input, shape index: {}]
  %s3 = inlined_call_operand.hbm [shape: f32[8,128], index: 3, kind: output, shape index: {}]
  %s4 = sld [smem:[#allocation0]]
  $region34: #{tpu_custom_call.1} parent=0
    _
  %s6 = ssub.s32 1, %s4
  %s7 = scalar_select 0, %s6, %s4
  %8 = sst [smem:[#allocation3]] %s2
  $region1: #{tpu_custom_call.1} parent=0
    #allocation4 [shape = 'u8[524288]{0}', space=vmem, size = 0x80000, scoped, tag = 'input window, operand 0, single buffered']
    #allocation5 [shape = 's32[1]{0}', space=sflag, size = 0x4, scoped, tag = 'scoped memory for tpu_custom_call.1']
    #allocation6 [shape = 's32[1]{0}', space=sflag, size = 0x4, scoped, tag = 'scoped memory for tpu_custom_call.1']
    #allocation7 [shape = 'u8[4096]{0}', space=vmem, size = 0x1000, scoped, tag = 'output window, operand 0, single buffered']
    %9 = vsyncpa [#allocation5], 0
    %10 = vsyncpa [#allocation6], 0
    // Predicated region
    $region2: #{tpu_custom_call.1} parent=1 // pred_check
      _
    $region3: #{tpu_custom_call.1} parent=1 // pred_check_branch
      %12 = sbr.rel (0) target = $region5
    $region4: #{tpu_custom_call.1} parent=1 // pred_region
      %s14 = ssub.s32 16384, 128
      %15 = vsyncadd [#allocation5], %s14
      %s16 = sshll.u32 [#allocation4], 4
      %s17 = int_to_ptr.vmem [resolvable:$true] %s16
      %22 = dma.hbm_to_vmem [thread:$0]  %s0, 128, %s17, [#allocation5], 128, 128, 8
    $region5: #{tpu_custom_call.1} parent=1 // pred_fallthru
      _
    // Predicated region
    $region6: #{tpu_custom_call.1} parent=1 // pred_check
      _
    $region7: #{tpu_custom_call.1} parent=1 // pred_check_branch
      %24 = sbr.rel (0) target = $region9
    $region8: #{tpu_custom_call.1} parent=1 // pred_region
      _
    $region9: #{tpu_custom_call.1} parent=1 // pred_fallthru
      _
    // Predicated region
    $region10: #{tpu_custom_call.1} parent=1 // pred_check
      _
    $region11: #{tpu_custom_call.1} parent=1 // pred_check_branch
      %26 = sbr.rel (0) target = $region13
    $region12: #{tpu_custom_call.1} parent=1 // pred_region
      _
    $region13: #{tpu_custom_call.1} parent=1 // pred_fallthru
      _
    // Predicated region
    $region14: #{tpu_custom_call.1} parent=1 // pred_check
      _
    $region15: #{tpu_custom_call.1} parent=1 // pred_check_branch
      %28 = sbr.rel (0) target = $region17
    $region16: #{tpu_custom_call.1} parent=1 // pred_region
      %29 = dma.done [#allocation5], 16384
    $region17: #{tpu_custom_call.1} parent=1 // pred_fallthru
      _
    %p30 = scmp.eq.s32.totalorder 0, 0
    // Predicated region
    $region18: #{tpu_custom_call.1} parent=1 // pred_check
      %p31 = pneg %p30
    $region19: #{tpu_custom_call.1} parent=1 // pred_check_branch
      %33 = sbr.rel (%p31) target = $region21
    $region20: #{tpu_custom_call.1} parent=1 // pred_region
      %34 = vst [vmem:[#allocation2] sm:$0xff] 0.0
    $region21: #{tpu_custom_call.1} parent=1 // pred_fallthru
      _
    %v35 = vld [vmem:[#allocation4] sm:$0xff]
    %v36 = vld [vmem:[#allocation4 + $0x8] sm:$0xff]
    %v37 = vld [vmem:[#allocation4 + $0x10] sm:$0xff]
    %v38 = vld [vmem:[#allocation4 + $0x18] sm:$0xff]
    %v39 = vld [vmem:[#allocation4 + $0x20] sm:$0xff]
    %v40 = vld [vmem:[#allocation4 + $0x28] sm:$0xff]
    %v41 = vld [vmem:[#allocation4 + $0x30] sm:$0xff]
    %v42 = vld [vmem:[#allocation4 + $0x38] sm:$0xff]
    %v43 = vld [vmem:[#allocation4 + $0x40] sm:$0xff]
    %v44 = vld [vmem:[#allocation4 + $0x48] sm:$0xff]
    %v45 = vld [vmem:[#allocation4 + $0x50] sm:$0xff]
    %v46 = vld [vmem:[#allocation4 + $0x58] sm:$0xff]
    %v47 = vld [vmem:[#allocation4 + $0x60] sm:$0xff]
    %v48 = vld [vmem:[#allocation4 + $0x68] sm:$0xff]
    %v49 = vld [vmem:[#allocation4 + $0x70] sm:$0xff]
    %v50 = vld [vmem:[#allocation4 + $0x78] sm:$0xff]
    %v51 = vld [vmem:[#allocation4 + $0x80] sm:$0xff]
    %v52 = vld [vmem:[#allocation4 + $0x88] sm:$0xff]
    %v53 = vld [vmem:[#allocation4 + $0x90] sm:$0xff]
    %v54 = vld [vmem:[#allocation4 + $0x98] sm:$0xff]
    %v55 = vld [vmem:[#allocation4 + $0xa0] sm:$0xff]
    %v56 = vld [vmem:[#allocation4 + $0xa8] sm:$0xff]
    %v57 = vld [vmem:[#allocation4 + $0xb0] sm:$0xff]
    %v58 = vld [vmem:[#allocation4 + $0xb8] sm:$0xff]
    %v59 = vld [vmem:[#allocation4 + $0xc0] sm:$0xff]
    %v60 = vld [vmem:[#allocation4 + $0xc8] sm:$0xff]
    %v61 = vld [vmem:[#allocation4 + $0xd0] sm:$0xff]
    %v62 = vld [vmem:[#allocation4 + $0xd8] sm:$0xff]
    %v63 = vld [vmem:[#allocation4 + $0xe0] sm:$0xff]
    %v64 = vld [vmem:[#allocation4 + $0xe8] sm:$0xff]
    %v65 = vld [vmem:[#allocation4 + $0xf0] sm:$0xff]
    %v66 = vld [vmem:[#allocation4 + $0xf8] sm:$0xff]
    %v67 = vld [vmem:[#allocation4 + $0x100] sm:$0xff]
    %v68 = vld [vmem:[#allocation4 + $0x108] sm:$0xff]
    %v69 = vld [vmem:[#allocation4 + $0x110] sm:$0xff]
    %v70 = vld [vmem:[#allocation4 + $0x118] sm:$0xff]
    %v71 = vld [vmem:[#allocation4 + $0x120] sm:$0xff]
    %v72 = vld [vmem:[#allocation4 + $0x128] sm:$0xff]
    %v73 = vld [vmem:[#allocation4 + $0x130] sm:$0xff]
    %v74 = vld [vmem:[#allocation4 + $0x138] sm:$0xff]
    %v75 = vld [vmem:[#allocation4 + $0x140] sm:$0xff]
    %v76 = vld [vmem:[#allocation4 + $0x148] sm:$0xff]
    %v77 = vld [vmem:[#allocation4 + $0x150] sm:$0xff]
    %v78 = vld [vmem:[#allocation4 + $0x158] sm:$0xff]
    %v79 = vld [vmem:[#allocation4 + $0x160] sm:$0xff]
    %v80 = vld [vmem:[#allocation4 + $0x168] sm:$0xff]
    %v81 = vld [vmem:[#allocation4 + $0x170] sm:$0xff]
    %v82 = vld [vmem:[#allocation4 + $0x178] sm:$0xff]
    %v83 = vld [vmem:[#allocation4 + $0x180] sm:$0xff]
    %v84 = vld [vmem:[#allocation4 + $0x188] sm:$0xff]
    %v85 = vld [vmem:[#allocation4 + $0x190] sm:$0xff]
    %v86 = vld [vmem:[#allocation4 + $0x198] sm:$0xff]
    %v87 = vld [vmem:[#allocation4 + $0x1a0] sm:$0xff]
    %v88 = vld [vmem:[#allocation4 + $0x1a8] sm:$0xff]
    %v89 = vld [vmem:[#allocation4 + $0x1b0] sm:$0xff]
    %v90 = vld [vmem:[#allocation4 + $0x1b8] sm:$0xff]
    %v91 = vld [vmem:[#allocation4 + $0x1c0] sm:$0xff]
    %v92 = vld [vmem:[#allocation4 + $0x1c8] sm:$0xff]
    %v93 = vld [vmem:[#allocation4 + $0x1d0] sm:$0xff]
    %v94 = vld [vmem:[#allocation4 + $0x1d8] sm:$0xff]
    %v95 = vld [vmem:[#allocation4 + $0x1e0] sm:$0xff]
    %v96 = vld [vmem:[#allocation4 + $0x1e8] sm:$0xff]
    %v97 = vld [vmem:[#allocation4 + $0x1f0] sm:$0xff]
    %v98 = vld [vmem:[#allocation4 + $0x1f8] sm:$0xff]
    %v99 = vld [vmem:[#allocation4 + $0x200] sm:$0xff]
    %v100 = vld [vmem:[#allocation4 + $0x208] sm:$0xff]
    %v101 = vld [vmem:[#allocation4 + $0x210] sm:$0xff]
    %v102 = vld [vmem:[#allocation4 + $0x218] sm:$0xff]
    %v103 = vld [vmem:[#allocation4 + $0x220] sm:$0xff]
    %v104 = vld [vmem:[#allocation4 + $0x228] sm:$0xff]
    %v105 = vld [vmem:[#allocation4 + $0x230] sm:$0xff]
    %v106 = vld [vmem:[#allocation4 + $0x238] sm:$0xff]
    %v107 = vld [vmem:[#allocation4 + $0x240] sm:$0xff]
    %v108 = vld [vmem:[#allocation4 + $0x248] sm:$0xff]
    %v109 = vld [vmem:[#allocation4 + $0x250] sm:$0xff]
    %v110 = vld [vmem:[#allocation4 + $0x258] sm:$0xff]
    %v111 = vld [vmem:[#allocation4 + $0x260] sm:$0xff]
    %v112 = vld [vmem:[#allocation4 + $0x268] sm:$0xff]
    %v113 = vld [vmem:[#allocation4 + $0x270] sm:$0xff]
    %v114 = vld [vmem:[#allocation4 + $0x278] sm:$0xff]
    %v115 = vld [vmem:[#allocation4 + $0x280] sm:$0xff]
    %v116 = vld [vmem:[#allocation4 + $0x288] sm:$0xff]
    %v117 = vld [vmem:[#allocation4 + $0x290] sm:$0xff]
    %v118 = vld [vmem:[#allocation4 + $0x298] sm:$0xff]
    %v119 = vld [vmem:[#allocation4 + $0x2a0] sm:$0xff]
    %v120 = vld [vmem:[#allocation4 + $0x2a8] sm:$0xff]
    %v121 = vld [vmem:[#allocation4 + $0x2b0] sm:$0xff]
    %v122 = vld [vmem:[#allocation4 + $0x2b8] sm:$0xff]
    %v123 = vld [vmem:[#allocation4 + $0x2c0] sm:$0xff]
    %v124 = vld [vmem:[#allocation4 + $0x2c8] sm:$0xff]
    %v125 = vld [vmem:[#allocation4 + $0x2d0] sm:$0xff]
    %v126 = vld [vmem:[#allocation4 + $0x2d8] sm:$0xff]
    %v127 = vld [vmem:[#allocation4 + $0x2e0] sm:$0xff]
    %v128 = vld [vmem:[#allocation4 + $0x2e8] sm:$0xff]
    %v129 = vld [vmem:[#allocation4 + $0x2f0] sm:$0xff]
    %v130 = vld [vmem:[#allocation4 + $0x2f8] sm:$0xff]
    %v131 = vld [vmem:[#allocation4 + $0x300] sm:$0xff]
    %v132 = vld [vmem:[#allocation4 + $0x308] sm:$0xff]
    %v133 = vld [vmem:[#allocation4 + $0x310] sm:$0xff]
    %v134 = vld [vmem:[#allocation4 + $0x318] sm:$0xff]
    %v135 = vld [vmem:[#allocation4 + $0x320] sm:$0xff]
    %v136 = vld [vmem:[#allocation4 + $0x328] sm:$0xff]
    %v137 = vld [vmem:[#allocation4 + $0x330] sm:$0xff]
    %v138 = vld [vmem:[#allocation4 + $0x338] sm:$0xff]
    %v139 = vld [vmem:[#allocation4 + $0x340] sm:$0xff]
    %v140 = vld [vmem:[#allocation4 + $0x348] sm:$0xff]
    %v141 = vld [vmem:[#allocation4 + $0x350] sm:$0xff]
    %v142 = vld [vmem:[#allocation4 + $0x358] sm:$0xff]
    %v143 = vld [vmem:[#allocation4 + $0x360] sm:$0xff]
    %v144 = vld [vmem:[#allocation4 + $0x368] sm:$0xff]
    %v145 = vld [vmem:[#allocation4 + $0x370] sm:$0xff]
    %v146 = vld [vmem:[#allocation4 + $0x378] sm:$0xff]
    %v147 = vld [vmem:[#allocation4 + $0x380] sm:$0xff]
    %v148 = vld [vmem:[#allocation4 + $0x388] sm:$0xff]
    %v149 = vld [vmem:[#allocation4 + $0x390] sm:$0xff]
    %v150 = vld [vmem:[#allocation4 + $0x398] sm:$0xff]
    %v151 = vld [vmem:[#allocation4 + $0x3a0] sm:$0xff]
    %v152 = vld [vmem:[#allocation4 + $0x3a8] sm:$0xff]
    %v153 = vld [vmem:[#allocation4 + $0x3b0] sm:$0xff]
    %v154 = vld [vmem:[#allocation4 + $0x3b8] sm:$0xff]
    %v155 = vld [vmem:[#allocation4 + $0x3c0] sm:$0xff]
    %v156 = vld [vmem:[#allocation4 + $0x3c8] sm:$0xff]
    %v157 = vld [vmem:[#allocation4 + $0x3d0] sm:$0xff]
    %v158 = vld [vmem:[#allocation4 + $0x3d8] sm:$0xff]
    %v159 = vld [vmem:[#allocation4 + $0x3e0] sm:$0xff]
    %v160 = vld [vmem:[#allocation4 + $0x3e8] sm:$0xff]
    %v161 = vld [vmem:[#allocation4 + $0x3f0] sm:$0xff]
    %v162 = vld [vmem:[#allocation4 + $0x3f8] sm:$0xff]
    %v163 = vld [vmem:[%s1] sm:$0x1]
    %v164 = vld [vmem:[#allocation2] sm:$0xff]
    %vm165 = vcmask 261120
    %v167 = vsel %vm165, %v163, 0
    %v170 = vsel %vm165, %v35, 0
    %v173 = vsel %vm165, %v36, 0
    %v176 = vsel %vm165, %v37, 0
    %v179 = vsel %vm165, %v38, 0
    %v182 = vsel %vm165, %v39, 0
    %v185 = vsel %vm165, %v40, 0
    %v188 = vsel %vm165, %v41, 0
    %v191 = vsel %vm165, %v42, 0
    %v194 = vsel %vm165, %v43, 0
    %v197 = vsel %vm165, %v44, 0
    %v200 = vsel %vm165, %v45, 0
    %v203 = vsel %vm165, %v46, 0
    %v206 = vsel %vm165, %v47, 0
    %v209 = vsel %vm165, %v48, 0
    %v212 = vsel %vm165, %v49, 0
    %v215 = vsel %vm165, %v50, 0
    %v218 = vsel %vm165, %v51, 0
    %v221 = vsel %vm165, %v52, 0
    %v224 = vsel %vm165, %v53, 0
    %v227 = vsel %vm165, %v54, 0
    %v230 = vsel %vm165, %v55, 0
    %v233 = vsel %vm165, %v56, 0
    %v236 = vsel %vm165, %v57, 0
    %v239 = vsel %vm165, %v58, 0
    %v242 = vsel %vm165, %v59, 0
    %v245 = vsel %vm165, %v60, 0
    %v248 = vsel %vm165, %v61, 0
    %v251 = vsel %vm165, %v62, 0
    %v254 = vsel %vm165, %v63, 0
    %v257 = vsel %vm165, %v64, 0
    %v260 = vsel %vm165, %v65, 0
    %v263 = vsel %vm165, %v66, 0
    %v266 = vsel %vm165, %v67, 0
    %v269 = vsel %vm165, %v68, 0
    %v272 = vsel %vm165, %v69, 0
    %v275 = vsel %vm165, %v70, 0
    %v278 = vsel %vm165, %v71, 0
    %v281 = vsel %vm165, %v72, 0
    %v284 = vsel %vm165, %v73, 0
    %v287 = vsel %vm165, %v74, 0
    %v290 = vsel %vm165, %v75, 0
    %v293 = vsel %vm165, %v76, 0
    %v296 = vsel %vm165, %v77, 0
    %v299 = vsel %vm165, %v78, 0
    %v302 = vsel %vm165, %v79, 0
    %v305 = vsel %vm165, %v80, 0
    %v308 = vsel %vm165, %v81, 0
    %v311 = vsel %vm165, %v82, 0
    %v314 = vsel %vm165, %v83, 0
    %v317 = vsel %vm165, %v84, 0
    %v320 = vsel %vm165, %v85, 0
    %v323 = vsel %vm165, %v86, 0
    %v326 = vsel %vm165, %v87, 0
    %v329 = vsel %vm165, %v88, 0
    %v332 = vsel %vm165, %v89, 0
    %v335 = vsel %vm165, %v90, 0
    %v338 = vsel %vm165, %v91, 0
    %v341 = vsel %vm165, %v92, 0
    %v344 = vsel %vm165, %v93, 0
    %v347 = vsel %vm165, %v94, 0
    %v350 = vsel %vm165, %v95, 0
    %v353 = vsel %vm165, %v96, 0
    %v356 = vsel %vm165, %v97, 0
    %v359 = vsel %vm165, %v98, 0
    %v362 = vsel %vm165, %v99, 0
    %v365 = vsel %vm165, %v100, 0
    %v368 = vsel %vm165, %v101, 0
    %v371 = vsel %vm165, %v102, 0
    %v374 = vsel %vm165, %v103, 0
    %v377 = vsel %vm165, %v104, 0
    %v380 = vsel %vm165, %v105, 0
    %v383 = vsel %vm165, %v106, 0
    %v386 = vsel %vm165, %v107, 0
    %v389 = vsel %vm165, %v108, 0
    %v392 = vsel %vm165, %v109, 0
    %v395 = vsel %vm165, %v110, 0
    %v398 = vsel %vm165, %v111, 0
    %v401 = vsel %vm165, %v112, 0
    %v404 = vsel %vm165, %v113, 0
    %v407 = vsel %vm165, %v114, 0
    %v410 = vsel %vm165, %v115, 0
    %v413 = vsel %vm165, %v116, 0
    %v416 = vsel %vm165, %v117, 0
    %v419 = vsel %vm165, %v118, 0
    %v422 = vsel %vm165, %v119, 0
    %v425 = vsel %vm165, %v120, 0
    %v428 = vsel %vm165, %v121, 0
    %v431 = vsel %vm165, %v122, 0
    %v434 = vsel %vm165, %v123, 0
    %v437 = vsel %vm165, %v124, 0
    %v440 = vsel %vm165, %v125, 0
    %v443 = vsel %vm165, %v126, 0
    %v446 = vsel %vm165, %v127, 0
    %v449 = vsel %vm165, %v128, 0
    %v452 = vsel %vm165, %v129, 0
    %v455 = vsel %vm165, %v130, 0
    %v458 = vsel %vm165, %v131, 0
    %v461 = vsel %vm165, %v132, 0
    %v464 = vsel %vm165, %v133, 0
    %v467 = vsel %vm165, %v134, 0
    %v470 = vsel %vm165, %v135, 0
    %v473 = vsel %vm165, %v136, 0
    %v476 = vsel %vm165, %v137, 0
    %v479 = vsel %vm165, %v138, 0
    %v482 = vsel %vm165, %v139, 0
    %v485 = vsel %vm165, %v140, 0
    %v488 = vsel %vm165, %v141, 0
    %v491 = vsel %vm165, %v142, 0
    %v494 = vsel %vm165, %v143, 0
    %v497 = vsel %vm165, %v144, 0
    %v500 = vsel %vm165, %v145, 0
    %v503 = vsel %vm165, %v146, 0
    %v506 = vsel %vm165, %v147, 0
    %v509 = vsel %vm165, %v148, 0
    %v512 = vsel %vm165, %v149, 0
    %v515 = vsel %vm165, %v150, 0
    %v518 = vsel %vm165, %v151, 0
    %v521 = vsel %vm165, %v152, 0
    %v524 = vsel %vm165, %v153, 0
    %v527 = vsel %vm165, %v154, 0
    %v530 = vsel %vm165, %v155, 0
    %v533 = vsel %vm165, %v156, 0
    %v536 = vsel %vm165, %v157, 0
    %v539 = vsel %vm165, %v158, 0
    %v542 = vsel %vm165, %v159, 0
    %v545 = vsel %vm165, %v160, 0
    %v548 = vsel %vm165, %v161, 0
    %v551 = vsel %vm165, %v162, 0
    %553 = vmatprep.subr.mxu0 0.0
    %v554 = vand.u32 %v215, 4294901760
    %555 = vmatpush1.xpose.msra.mxu0 %v554
    %556 = vmatprep.subr.mxu0 0.0
    %v557 = vand.u32 %v212, 4294901760
    %558 = vmatpush1.xpose.msra.mxu0 %v557
    %559 = vmatprep.subr.mxu0 0.0
    %v560 = vand.u32 %v209, 4294901760
    %561 = vmatpush1.xpose.msra.mxu0 %v560
    %562 = vmatprep.subr.mxu0 0.0
    %v563 = vand.u32 %v206, 4294901760
    %564 = vmatpush1.xpose.msra.mxu0 %v563
    %565 = vmatprep.subr.mxu0 0.0
    %v566 = vand.u32 %v203, 4294901760
    %567 = vmatpush1.xpose.msra.mxu0 %v566
    %568 = vmatprep.subr.mxu0 0.0
    %v569 = vand.u32 %v200, 4294901760
    %570 = vmatpush1.xpose.msra.mxu0 %v569
    %571 = vmatprep.subr.mxu0 0.0
    %v572 = vand.u32 %v197, 4294901760
    %573 = vmatpush1.xpose.msra.mxu0 %v572
    %574 = vmatprep.subr.mxu0 0.0
    %v575 = vand.u32 %v194, 4294901760
    %576 = vmatpush1.xpose.msra.mxu0 %v575
    %577 = vmatprep.subr.mxu0 0.0
    %v578 = vand.u32 %v191, 4294901760
    %579 = vmatpush1.xpose.msra.mxu0 %v578
    %580 = vmatprep.subr.mxu0 0.0
    %v581 = vand.u32 %v188, 4294901760
    %582 = vmatpush1.xpose.msra.mxu0 %v581
    %583 = vmatprep.subr.mxu0 0.0
    %v584 = vand.u32 %v185, 4294901760
    %585 = vmatpush1.xpose.msra.mxu0 %v584
    %586 = vmatprep.subr.mxu0 0.0
    %v587 = vand.u32 %v182, 4294901760
    %588 = vmatpush1.xpose.msra.mxu0 %v587
    %589 = vmatprep.subr.mxu0 0.0
    %v590 = vand.u32 %v179, 4294901760
    %591 = vmatpush1.xpose.msra.mxu0 %v590
    %592 = vmatprep.subr.mxu0 0.0
    %v593 = vand.u32 %v176, 4294901760
    %594 = vmatpush1.xpose.msra.mxu0 %v593
    %595 = vmatprep.subr.mxu0 0.0
    %v596 = vand.u32 %v173, 4294901760
    %597 = vmatpush1.xpose.msra.mxu0 %v596
    %598 = vmatprep.subr.mxu0 0.0
    %v599 = vand.u32 %v170, 4294901760
    %600 = vmatpush1.xpose.msra.mxu0 %v599
    %601 = vmatprep.subr.mxu0 0.0
    %v602 = vand.u32 %v263, 4294901760
    %603 = vmatpush2.xpose.msra.mxu0 %v602
    %604 = vmatprep.subr.mxu0 0.0
    %v605 = vand.u32 %v260, 4294901760
    %606 = vmatpush2.xpose.msra.mxu0 %v605
    %607 = vmatprep.subr.mxu0 0.0
    %v608 = vand.u32 %v257, 4294901760
    %609 = vmatpush2.xpose.msra.mxu0 %v608
    %610 = vmatprep.subr.mxu0 0.0
    %v611 = vand.u32 %v254, 4294901760
    %612 = vmatpush2.xpose.msra.mxu0 %v611
    %613 = vmatprep.subr.mxu0 0.0
    %v614 = vand.u32 %v251, 4294901760
    %615 = vmatpush2.xpose.msra.mxu0 %v614
    %616 = vmatprep.subr.mxu0 0.0
    %v617 = vand.u32 %v248, 4294901760
    %618 = vmatpush2.xpose.msra.mxu0 %v617
    %619 = vmatprep.subr.mxu0 0.0
    %v620 = vand.u32 %v245, 4294901760
    %621 = vmatpush2.xpose.msra.mxu0 %v620
    %622 = vmatprep.subr.mxu0 0.0
    %v623 = vand.u32 %v242, 4294901760
    %624 = vmatpush2.xpose.msra.mxu0 %v623
    %625 = vmatprep.subr.mxu0 0.0
    %v626 = vand.u32 %v239, 4294901760
    %627 = vmatpush2.xpose.msra.mxu0 %v626
    %628 = vmatprep.subr.mxu0 0.0
    %v629 = vand.u32 %v236, 4294901760
    %630 = vmatpush2.xpose.msra.mxu0 %v629
    %631 = vmatprep.subr.mxu0 0.0
    %v632 = vand.u32 %v233, 4294901760
    %633 = vmatpush2.xpose.msra.mxu0 %v632
    %634 = vmatprep.subr.mxu0 0.0
    %v635 = vand.u32 %v230, 4294901760
    %636 = vmatpush2.xpose.msra.mxu0 %v635
    %637 = vmatprep.subr.mxu0 0.0
    %v638 = vand.u32 %v227, 4294901760
    %639 = vmatpush2.xpose.msra.mxu0 %v638
    %640 = vmatprep.subr.mxu0 0.0
    %v641 = vand.u32 %v224, 4294901760
    %642 = vmatpush2.xpose.msra.mxu0 %v641
    %643 = vmatprep.subr.mxu0 0.0
    %v644 = vand.u32 %v221, 4294901760
    %645 = vmatpush2.xpose.msra.mxu0 %v644
    %646 = vmatprep.subr.mxu0 0.0
    %v647 = vand.u32 %v218, 4294901760
    %648 = vmatpush2.xpose.msra.mxu0 %v647
    %649 = vmatprep.mubr.f32.mxu0 0.0
    %v650 = vand.u32 %v167, 4294901760
    %v651 = vsub.f32 %v167, %v650
    %v652 = vand.u32 %v651, 4294901760
    %v653 = vsub.f32 %v651, %v652
    %v654 = vand.u32 %v653, 4294901760
    %655 = vmatmul.mubr.f32.gmra.mxu0 %v654
    %v656 = vpop.f32.mrf.mxu0
    %v657 = vadd.f32 0.0, %v656
    %v658 = vpop.f32.mrf.mxu0
    %v659 = vadd.f32 0.0, %v658
    %660 = vdwg.mxu0
    %661 = vmatprep.subr.mxu0 0.0
    %v662 = vand.u32 %v215, 4294901760
    %v663 = vsub.f32 %v215, %v662
    %v664 = vand.u32 %v663, 4294901760
    %v665 = vsub.f32 %v663, %v664
    %v666 = vand.u32 %v665, 4294901760
    %667 = vmatpush1.xpose.msra.mxu0 %v666
    %668 = vmatprep.subr.mxu0 0.0
    %v669 = vand.u32 %v212, 4294901760
    %v670 = vsub.f32 %v212, %v669
    %v671 = vand.u32 %v670, 4294901760
    %v672 = vsub.f32 %v670, %v671
    %v673 = vand.u32 %v672, 4294901760
    %674 = vmatpush1.xpose.msra.mxu0 %v673
    %675 = vmatprep.subr.mxu0 0.0
    %v676 = vand.u32 %v209, 4294901760
    %v677 = vsub.f32 %v209, %v676
    %v678 = vand.u32 %v677, 4294901760
    %v679 = vsub.f32 %v677, %v678
    %v680 = vand.u32 %v679, 4294901760
    %681 = vmatpush1.xpose.msra.mxu0 %v680
    %682 = vmatprep.subr.mxu0 0.0
    %v683 = vand.u32 %v206, 4294901760
    %v684 = vsub.f32 %v206, %v683
    %v685 = vand.u32 %v684, 4294901760
    %v686 = vsub.f32 %v684, %v685
    %v687 = vand.u32 %v686, 4294901760
    %688 = vmatpush1.xpose.msra.mxu0 %v687
    %689 = vmatprep.subr.mxu0 0.0
    %v690 = vand.u32 %v203, 4294901760
    %v691 = vsub.f32 %v203, %v690
    %v692 = vand.u32 %v691, 4294901760
    %v693 = vsub.f32 %v691, %v692
    %v694 = vand.u32 %v693, 4294901760
    %695 = vmatpush1.xpose.msra.mxu0 %v694
    %696 = vmatprep.subr.mxu0 0.0
    %v697 = vand.u32 %v200, 4294901760
    %v698 = vsub.f32 %v200, %v697
    %v699 = vand.u32 %v698, 4294901760
    %v700 = vsub.f32 %v698, %v699
    %v701 = vand.u32 %v700, 4294901760
    %702 = vmatpush1.xpose.msra.mxu0 %v701
    %703 = vmatprep.subr.mxu0 0.0
    %v704 = vand.u32 %v197, 4294901760
    %v705 = vsub.f32 %v197, %v704
    %v706 = vand.u32 %v705, 4294901760
    %v707 = vsub.f32 %v705, %v706
    %v708 = vand.u32 %v707, 4294901760
    %709 = vmatpush1.xpose.msra.mxu0 %v708
    %710 = vmatprep.subr.mxu0 0.0
    %v711 = vand.u32 %v194, 4294901760
    %v712 = vsub.f32 %v194, %v711
    %v713 = vand.u32 %v712, 4294901760
    %v714 = vsub.f32 %v712, %v713
    %v715 = vand.u32 %v714, 4294901760
    %716 = vmatpush1.xpose.msra.mxu0 %v715
    %717 = vmatprep.subr.mxu0 0.0
    %v718 = vand.u32 %v191, 4294901760
    %v719 = vsub.f32 %v191, %v718
    %v720 = vand.u32 %v719, 4294901760
    %v721 = vsub.f32 %v719, %v720
    %v722 = vand.u32 %v721, 4294901760
    %723 = vmatpush1.xpose.msra.mxu0 %v722
    %724 = vmatprep.subr.mxu0 0.0
    %v725 = vand.u32 %v188, 4294901760
    %v726 = vsub.f32 %v188, %v725
    %v727 = vand.u32 %v726, 4294901760
    %v728 = vsub.f32 %v726, %v727
    %v729 = vand.u32 %v728, 4294901760
    %730 = vmatpush1.xpose.msra.mxu0 %v729
    %731 = vmatprep.subr.mxu0 0.0
    %v732 = vand.u32 %v185, 4294901760
    %v733 = vsub.f32 %v185, %v732
    %v734 = vand.u32 %v733, 4294901760
    %v735 = vsub.f32 %v733, %v734
    %v736 = vand.u32 %v735, 4294901760
    %737 = vmatpush1.xpose.msra.mxu0 %v736
    %738 = vmatprep.subr.mxu0 0.0
    %v739 = vand.u32 %v182, 4294901760
    %v740 = vsub.f32 %v182, %v739
    %v741 = vand.u32 %v740, 4294901760
    %v742 = vsub.f32 %v740, %v741
    %v743 = vand.u32 %v742, 4294901760
    %744 = vmatpush1.xpose.msra.mxu0 %v743
    %745 = vmatprep.subr.mxu0 0.0
    %v746 = vand.u32 %v179, 4294901760
    %v747 = vsub.f32 %v179, %v746
    %v748 = vand.u32 %v747, 4294901760
    %v749 = vsub.f32 %v747, %v748
    %v750 = vand.u32 %v749, 4294901760
    %751 = vmatpush1.xpose.msra.mxu0 %v750
    %752 = vmatprep.subr.mxu0 0.0
    %v753 = vand.u32 %v176, 4294901760
    %v754 = vsub.f32 %v176, %v753
    %v755 = vand.u32 %v754, 4294901760
    %v756 = vsub.f32 %v754, %v755
    %v757 = vand.u32 %v756, 4294901760
    %758 = vmatpush1.xpose.msra.mxu0 %v757
    %759 = vmatprep.subr.mxu0 0.0
    %v760 = vand.u32 %v173, 4294901760
    %v761 = vsub.f32 %v173, %v760
    %v762 = vand.u32 %v761, 4294901760
    %v763 = vsub.f32 %v761, %v762
    %v764 = vand.u32 %v763, 4294901760
    %765 = vmatpush1.xpose.msra.mxu0 %v764
    %766 = vmatprep.subr.mxu0 0.0
    %v767 = vand.u32 %v170, 4294901760
    %v768 = vsub.f32 %v170, %v767
    %v769 = vand.u32 %v768, 4294901760
    %v770 = vsub.f32 %v768, %v769
    %v771 = vand.u32 %v770, 4294901760
    %772 = vmatpush1.xpose.msra.mxu0 %v771
    %773 = vmatprep.subr.mxu0 0.0
    %v774 = vand.u32 %v263, 4294901760
    %v775 = vsub.f32 %v263, %v774
    %v776 = vand.u32 %v775, 4294901760
    %v777 = vsub.f32 %v775, %v776
    %v778 = vand.u32 %v777, 4294901760
    %779 = vmatpush2.xpose.msra.mxu0 %v778
    %780 = vmatprep.subr.mxu0 0.0
    %v781 = vand.u32 %v260, 4294901760
    %v782 = vsub.f32 %v260, %v781
    %v783 = vand.u32 %v782, 4294901760
    %v784 = vsub.f32 %v782, %v783
    %v785 = vand.u32 %v784, 4294901760
    %786 = vmatpush2.xpose.msra.mxu0 %v785
    %787 = vmatprep.subr.mxu0 0.0
    %v788 = vand.u32 %v257, 4294901760
    %v789 = vsub.f32 %v257, %v788
    %v790 = vand.u32 %v789, 4294901760
    %v791 = vsub.f32 %v789, %v790
    %v792 = vand.u32 %v791, 4294901760
    %793 = vmatpush2.xpose.msra.mxu0 %v792
    %794 = vmatprep.subr.mxu0 0.0
    %v795 = vand.u32 %v254, 4294901760
    %v796 = vsub.f32 %v254, %v795
    %v797 = vand.u32 %v796, 4294901760
    %v798 = vsub.f32 %v796, %v797
    %v799 = vand.u32 %v798, 4294901760
    %800 = vmatpush2.xpose.msra.mxu0 %v799
    %801 = vmatprep.subr.mxu0 0.0
    %v802 = vand.u32 %v251, 4294901760
    %v803 = vsub.f32 %v251, %v802
    %v804 = vand.u32 %v803, 4294901760
    %v805 = vsub.f32 %v803, %v804
    %v806 = vand.u32 %v805, 4294901760
    %807 = vmatpush2.xpose.msra.mxu0 %v806
    %808 = vmatprep.subr.mxu0 0.0
    %v809 = vand.u32 %v248, 4294901760
    %v810 = vsub.f32 %v248, %v809
    %v811 = vand.u32 %v810, 4294901760
    %v812 = vsub.f32 %v810, %v811
    %v813 = vand.u32 %v812, 4294901760
    %814 = vmatpush2.xpose.msra.mxu0 %v813
    %815 = vmatprep.subr.mxu0 0.0
    %v816 = vand.u32 %v245, 4294901760
    %v817 = vsub.f32 %v245, %v816
    %v818 = vand.u32 %v817, 4294901760
    %v819 = vsub.f32 %v817, %v818
    %v820 = vand.u32 %v819, 4294901760
    %821 = vmatpush2.xpose.msra.mxu0 %v820
    %822 = vmatprep.subr.mxu0 0.0
    %v823 = vand.u32 %v242, 4294901760
    %v824 = vsub.f32 %v242, %v823
    %v825 = vand.u32 %v824, 4294901760
    %v826 = vsub.f32 %v824, %v825
    %v827 = vand.u32 %v826, 4294901760
    %828 = vmatpush2.xpose.msra.mxu0 %v827
    %829 = vmatprep.subr.mxu0 0.0
    %v830 = vand.u32 %v239, 4294901760
    %v831 = vsub.f32 %v239, %v830
    %v832 = vand.u32 %v831, 4294901760
    %v833 = vsub.f32 %v831, %v832
    %v834 = vand.u32 %v833, 4294901760
    %835 = vmatpush2.xpose.msra.mxu0 %v834
    %836 = vmatprep.subr.mxu0 0.0
    %v837 = vand.u32 %v236, 4294901760
    %v838 = vsub.f32 %v236, %v837
    %v839 = vand.u32 %v838, 4294901760
    %v840 = vsub.f32 %v838, %v839
    %v841 = vand.u32 %v840, 4294901760
    %842 = vmatpush2.xpose.msra.mxu0 %v841
    %843 = vmatprep.subr.mxu0 0.0
    %v844 = vand.u32 %v233, 4294901760
    %v845 = vsub.f32 %v233, %v844
    %v846 = vand.u32 %v845, 4294901760
    %v847 = vsub.f32 %v845, %v846
    %v848 = vand.u32 %v847, 4294901760
    %849 = vmatpush2.xpose.msra.mxu0 %v848
    %850 = vmatprep.subr.mxu0 0.0
    %v851 = vand.u32 %v230, 4294901760
    %v852 = vsub.f32 %v230, %v851
    %v853 = vand.u32 %v852, 4294901760
    %v854 = vsub.f32 %v852, %v853
    %v855 = vand.u32 %v854, 4294901760
    %856 = vmatpush2.xpose.msra.mxu0 %v855
    %857 = vmatprep.subr.mxu0 0.0
    %v858 = vand.u32 %v227, 4294901760
    %v859 = vsub.f32 %v227, %v858
    %v860 = vand.u32 %v859, 4294901760
    %v861 = vsub.f32 %v859, %v860
    %v862 = vand.u32 %v861, 4294901760
    %863 = vmatpush2.xpose.msra.mxu0 %v862
    %864 = vmatprep.subr.mxu0 0.0
    %v865 = vand.u32 %v224, 4294901760
    %v866 = vsub.f32 %v224, %v865
    %v867 = vand.u32 %v866, 4294901760
    %v868 = vsub.f32 %v866, %v867
    %v869 = vand.u32 %v868, 4294901760
    %870 = vmatpush2.xpose.msra.mxu0 %v869
    %871 = vmatprep.subr.mxu0 0.0
    %v872 = vand.u32 %v221, 4294901760
    %v873 = vsub.f32 %v221, %v872
    %v874 = vand.u32 %v873, 4294901760
    %v875 = vsub.f32 %v873, %v874
    %v876 = vand.u32 %v875, 4294901760
    %877 = vmatpush2.xpose.msra.mxu0 %v876
    %878 = vmatprep.subr.mxu0 0.0
    %v879 = vand.u32 %v218, 4294901760
    %v880 = vsub.f32 %v218, %v879
    %v881 = vand.u32 %v880, 4294901760
    %v882 = vsub.f32 %v880, %v881
    %v883 = vand.u32 %v882, 4294901760
    %884 = vmatpush2.xpose.msra.mxu0 %v883
    %885 = vmatprep.mubr.f32.mxu0 0.0
    %v886 = vand.u32 %v167, 4294901760
    %887 = vmatmul.mubr.f32.gmra.mxu0 %v886
    %v888 = vpop.f32.mrf.mxu0
    %v889 = vadd.f32 %v657, %v888
    %v890 = vpop.f32.mrf.mxu0
    %v891 = vadd.f32 %v659, %v890
    %892 = vdwg.mxu0
    %893 = vmatprep.subr.mxu0 0.0
    %v894 = vand.u32 %v215, 4294901760
    %v895 = vsub.f32 %v215, %v894
    %896 = vmatpush1.xpose.msra.mxu0 %v895
    %897 = vmatprep.subr.mxu0 0.0
    %v898 = vand.u32 %v212, 4294901760
    %v899 = vsub.f32 %v212, %v898
    %900 = vmatpush1.xpose.msra.mxu0 %v899
    %901 = vmatprep.subr.mxu0 0.0
    %v902 = vand.u32 %v209, 4294901760
    %v903 = vsub.f32 %v209, %v902
    %904 = vmatpush1.xpose.msra.mxu0 %v903
    %905 = vmatprep.subr.mxu0 0.0
    %v906 = vand.u32 %v206, 4294901760
    %v907 = vsub.f32 %v206, %v906
    %908 = vmatpush1.xpose.msra.mxu0 %v907
    %909 = vmatprep.subr.mxu0 0.0
    %v910 = vand.u32 %v203, 4294901760
    %v911 = vsub.f32 %v203, %v910
    %912 = vmatpush1.xpose.msra.mxu0 %v911
    %913 = vmatprep.subr.mxu0 0.0
    %v914 = vand.u32 %v200, 4294901760
    %v915 = vsub.f32 %v200, %v914
    %916 = vmatpush1.xpose.msra.mxu0 %v915
    %917 = vmatprep.subr.mxu0 0.0
    %v918 = vand.u32 %v197, 4294901760
    %v919 = vsub.f32 %v197, %v918
    %920 = vmatpush1.xpose.msra.mxu0 %v919
    %921 = vmatprep.subr.mxu0 0.0
    %v922 = vand.u32 %v194, 4294901760
    %v923 = vsub.f32 %v194, %v922
    %924 = vmatpush1.xpose.msra.mxu0 %v923
    %925 = vmatprep.subr.mxu0 0.0
    %v926 = vand.u32 %v191, 4294901760
    %v927 = vsub.f32 %v191, %v926
    %928 = vmatpush1.xpose.msra.mxu0 %v927
    %929 = vmatprep.subr.mxu0 0.0
    %v930 = vand.u32 %v188, 4294901760
    %v931 = vsub.f32 %v188, %v930
    %932 = vmatpush1.xpose.msra.mxu0 %v931
    %933 = vmatprep.subr.mxu0 0.0
    %v934 = vand.u32 %v185, 4294901760
    %v935 = vsub.f32 %v185, %v934
    %936 = vmatpush1.xpose.msra.mxu0 %v935
    %937 = vmatprep.subr.mxu0 0.0
    %v938 = vand.u32 %v182, 4294901760
    %v939 = vsub.f32 %v182, %v938
    %940 = vmatpush1.xpose.msra.mxu0 %v939
    %941 = vmatprep.subr.mxu0 0.0
    %v942 = vand.u32 %v179, 4294901760
    %v943 = vsub.f32 %v179, %v942
    %944 = vmatpush1.xpose.msra.mxu0 %v943
    %945 = vmatprep.subr.mxu0 0.0
    %v946 = vand.u32 %v176, 4294901760
    %v947 = vsub.f32 %v176, %v946
    %948 = vmatpush1.xpose.msra.mxu0 %v947
    %949 = vmatprep.subr.mxu0 0.0
    %v950 = vand.u32 %v173, 4294901760
    %v951 = vsub.f32 %v173, %v950
    %952 = vmatpush1.xpose.msra.mxu0 %v951
    %953 = vmatprep.subr.mxu0 0.0
    %v954 = vand.u32 %v170, 4294901760
    %v955 = vsub.f32 %v170, %v954
    %956 = vmatpush1.xpose.msra.mxu0 %v955
    %957 = vmatprep.subr.mxu0 0.0
    %v958 = vand.u32 %v263, 4294901760
    %v959 = vsub.f32 %v263, %v958
    %960 = vmatpush2.xpose.msra.mxu0 %v959
    %961 = vmatprep.subr.mxu0 0.0
    %v962 = vand.u32 %v260, 4294901760
    %v963 = vsub.f32 %v260, %v962
    %964 = vmatpush2.xpose.msra.mxu0 %v963
    %965 = vmatprep.subr.mxu0 0.0
    %v966 = vand.u32 %v257, 4294901760
    %v967 = vsub.f32 %v257, %v966
    %968 = vmatpush2.xpose.msra.mxu0 %v967
    %969 = vmatprep.subr.mxu0 0.0
    %v970 = vand.u32 %v254, 4294901760
    %v971 = vsub.f32 %v254, %v970
    %972 = vmatpush2.xpose.msra.mxu0 %v971
    %973 = vmatprep.subr.mxu0 0.0
    %v974 = vand.u32 %v251, 4294901760
    %v975 = vsub.f32 %v251, %v974
    %976 = vmatpush2.xpose.msra.mxu0 %v975
    %977 = vmatprep.subr.mxu0 0.0
    %v978 = vand.u32 %v248, 4294901760
    %v979 = vsub.f32 %v248, %v978
    %980 = vmatpush2.xpose.msra.mxu0 %v979
    %981 = vmatprep.subr.mxu0 0.0
    %v982 = vand.u32 %v245, 4294901760
    %v983 = vsub.f32 %v245, %v982
    %984 = vmatpush2.xpose.msra.mxu0 %v983
    %985 = vmatprep.subr.mxu0 0.0
    %v986 = vand.u32 %v242, 4294901760
    %v987 = vsub.f32 %v242, %v986
    %988 = vmatpush2.xpose.msra.mxu0 %v987
    %989 = vmatprep.subr.mxu0 0.0
    %v990 = vand.u32 %v239, 4294901760
    %v991 = vsub.f32 %v239, %v990
    %992 = vmatpush2.xpose.msra.mxu0 %v991
    %993 = vmatprep.subr.mxu0 0.0
    %v994 = vand.u32 %v236, 4294901760
    %v995 = vsub.f32 %v236, %v994
    %996 = vmatpush2.xpose.msra.mxu0 %v995
    %997 = vmatprep.subr.mxu0 0.0
    %v998 = vand.u32 %v233, 4294901760
    %v999 = vsub.f32 %v233, %v998
    %1000 = vmatpush2.xpose.msra.mxu0 %v999
    %1001 = vmatprep.subr.mxu0 0.0
    %v1002 = vand.u32 %v230, 4294901760
    %v1003 = vsub.f32 %v230, %v1002
    %1004 = vmatpush2.xpose.msra.mxu0 %v1003
    %1005 = vmatprep.subr.mxu0 0.0
    %v1006 = vand.u32 %v227, 4294901760
    %v1007 = vsub.f32 %v227, %v1006
    %1008 = vmatpush2.xpose.msra.mxu0 %v1007
    %1009 = vmatprep.subr.mxu0 0.0
    %v1010 = vand.u32 %v224, 4294901760
    %v1011 = vsub.f32 %v224, %v1010
    %1012 = vmatpush2.xpose.msra.mxu0 %v1011
    %1013 = vmatprep.subr.mxu0 0.0
    %v1014 = vand.u32 %v221, 4294901760
    %v1015 = vsub.f32 %v221, %v1014
    %1016 = vmatpush2.xpose.msra.mxu0 %v1015
    %1017 = vmatprep.subr.mxu0 0.0
    %v1018 = vand.u32 %v218, 4294901760
    %v1019 = vsub.f32 %v218, %v1018
    %1020 = vmatpush2.xpose.msra.mxu0 %v1019
    %1021 = vmatprep.mubr.f32.mxu0 0.0
    %v1022 = vand.u32 %v167, 4294901760
    %v1023 = vsub.f32 %v167, %v1022
    %1024 = vmatmul.mubr.f32.gmra.mxu0 %v1023
    %v1025 = vpop.f32.mrf.mxu0
    %v1026 = vadd.f32 %v889, %v1025
    %v1027 = vpop.f32.mrf.mxu0
    %v1028 = vadd.f32 %v891, %v1027
    %1029 = vdwg.mxu0
    %1030 = vmatprep.subr.mxu0 0.0
    %v1031 = vand.u32 %v215, 4294901760
    %1032 = vmatpush1.xpose.msra.mxu0 %v1031
    %1033 = vmatprep.subr.mxu0 0.0
    %v1034 = vand.u32 %v212, 4294901760
    %1035 = vmatpush1.xpose.msra.mxu0 %v1034
    %1036 = vmatprep.subr.mxu0 0.0
    %v1037 = vand.u32 %v209, 4294901760
    %1038 = vmatpush1.xpose.msra.mxu0 %v1037
    %1039 = vmatprep.subr.mxu0 0.0
    %v1040 = vand.u32 %v206, 4294901760
    %1041 = vmatpush1.xpose.msra.mxu0 %v1040
    %1042 = vmatprep.subr.mxu0 0.0
    %v1043 = vand.u32 %v203, 4294901760
    %1044 = vmatpush1.xpose.msra.mxu0 %v1043
    %1045 = vmatprep.subr.mxu0 0.0
    %v1046 = vand.u32 %v200, 4294901760
    %1047 = vmatpush1.xpose.msra.mxu0 %v1046
    %1048 = vmatprep.subr.mxu0 0.0
    %v1049 = vand.u32 %v197, 4294901760
    %1050 = vmatpush1.xpose.msra.mxu0 %v1049
    %1051 = vmatprep.subr.mxu0 0.0
    %v1052 = vand.u32 %v194, 4294901760
    %1053 = vmatpush1.xpose.msra.mxu0 %v1052
    %1054 = vmatprep.subr.mxu0 0.0
    %v1055 = vand.u32 %v191, 4294901760
    %1056 = vmatpush1.xpose.msra.mxu0 %v1055
    %1057 = vmatprep.subr.mxu0 0.0
    %v1058 = vand.u32 %v188, 4294901760
    %1059 = vmatpush1.xpose.msra.mxu0 %v1058
    %1060 = vmatprep.subr.mxu0 0.0
    %v1061 = vand.u32 %v185, 4294901760
    %1062 = vmatpush1.xpose.msra.mxu0 %v1061
    %1063 = vmatprep.subr.mxu0 0.0
    %v1064 = vand.u32 %v182, 4294901760
    %1065 = vmatpush1.xpose.msra.mxu0 %v1064
    %1066 = vmatprep.subr.mxu0 0.0
    %v1067 = vand.u32 %v179, 4294901760
    %1068 = vmatpush1.xpose.msra.mxu0 %v1067
    %1069 = vmatprep.subr.mxu0 0.0
    %v1070 = vand.u32 %v176, 4294901760
    %1071 = vmatpush1.xpose.msra.mxu0 %v1070
    %1072 = vmatprep.subr.mxu0 0.0
    %v1073 = vand.u32 %v173, 4294901760
    %1074 = vmatpush1.xpose.msra.mxu0 %v1073
    %1075 = vmatprep.subr.mxu0 0.0
    %v1076 = vand.u32 %v170, 4294901760
    %1077 = vmatpush1.xpose.msra.mxu0 %v1076
    %1078 = vmatprep.subr.mxu0 0.0
    %v1079 = vand.u32 %v263, 4294901760
    %1080 = vmatpush2.xpose.msra.mxu0 %v1079
    %1081 = vmatprep.subr.mxu0 0.0
    %v1082 = vand.u32 %v260, 4294901760
    %1083 = vmatpush2.xpose.msra.mxu0 %v1082
    %1084 = vmatprep.subr.mxu0 0.0
    %v1085 = vand.u32 %v257, 4294901760
    %1086 = vmatpush2.xpose.msra.mxu0 %v1085
    %1087 = vmatprep.subr.mxu0 0.0
    %v1088 = vand.u32 %v254, 4294901760
    %1089 = vmatpush2.xpose.msra.mxu0 %v1088
    %1090 = vmatprep.subr.mxu0 0.0
    %v1091 = vand.u32 %v251, 4294901760
    %1092 = vmatpush2.xpose.msra.mxu0 %v1091
    %1093 = vmatprep.subr.mxu0 0.0
    %v1094 = vand.u32 %v248, 4294901760
    %1095 = vmatpush2.xpose.msra.mxu0 %v1094
    %1096 = vmatprep.subr.mxu0 0.0
    %v1097 = vand.u32 %v245, 4294901760
    %1098 = vmatpush2.xpose.msra.mxu0 %v1097
    %1099 = vmatprep.subr.mxu0 0.0
    %v1100 = vand.u32 %v242, 4294901760
    %1101 = vmatpush2.xpose.msra.mxu0 %v1100
    %1102 = vmatprep.subr.mxu0 0.0
    %v1103 = vand.u32 %v239, 4294901760
    %1104 = vmatpush2.xpose.msra.mxu0 %v1103
    %1105 = vmatprep.subr.mxu0 0.0
    %v1106 = vand.u32 %v236, 4294901760
    %1107 = vmatpush2.xpose.msra.mxu0 %v1106
    %1108 = vmatprep.subr.mxu0 0.0
    %v1109 = vand.u32 %v233, 4294901760
    %1110 = vmatpush2.xpose.msra.mxu0 %v1109
    %1111 = vmatprep.subr.mxu0 0.0
    %v1112 = vand.u32 %v230, 4294901760
    %1113 = vmatpush2.xpose.msra.mxu0 %v1112
    %1114 = vmatprep.subr.mxu0 0.0
    %v1115 = vand.u32 %v227, 4294901760
    %1116 = vmatpush2.xpose.msra.mxu0 %v1115
    %1117 = vmatprep.subr.mxu0 0.0
    %v1118 = vand.u32 %v224, 4294901760
    %1119 = vmatpush2.xpose.msra.mxu0 %v1118
    %1120 = vmatprep.subr.mxu0 0.0
    %v1121 = vand.u32 %v221, 4294901760
    %1122 = vmatpush2.xpose.msra.mxu0 %v1121
    %1123 = vmatprep.subr.mxu0 0.0
    %v1124 = vand.u32 %v218, 4294901760
    %1125 = vmatpush2.xpose.msra.mxu0 %v1124
    %1126 = vmatprep.mubr.f32.mxu0 0.0
    %v1127 = vand.u32 %v167, 4294901760
    %v1128 = vsub.f32 %v167, %v1127
    %v1129 = vand.u32 %v1128, 4294901760
    %1130 = vmatmul.mubr.f32.gmra.mxu0 %v1129
    %v1131 = vpop.f32.mrf.mxu0
    %v1132 = vadd.f32 %v1026, %v1131
    %v1133 = vpop.f32.mrf.mxu0
    %v1134 = vadd.f32 %v1028, %v1133
    %1135 = vdwg.mxu0
    %1136 = vmatprep.subr.mxu0 0.0
    %v1137 = vand.u32 %v215, 4294901760
    %v1138 = vsub.f32 %v215, %v1137
    %v1139 = vand.u32 %v1138, 4294901760
    %1140 = vmatpush1.xpose.msra.mxu0 %v1139
    %1141 = vmatprep.subr.mxu0 0.0
    %v1142 = vand.u32 %v212, 4294901760
    %v1143 = vsub.f32 %v212, %v1142
    %v1144 = vand.u32 %v1143, 4294901760
    %1145 = vmatpush1.xpose.msra.mxu0 %v1144
    %1146 = vmatprep.subr.mxu0 0.0
    %v1147 = vand.u32 %v209, 4294901760
    %v1148 = vsub.f32 %v209, %v1147
    %v1149 = vand.u32 %v1148, 4294901760
    %1150 = vmatpush1.xpose.msra.mxu0 %v1149
    %1151 = vmatprep.subr.mxu0 0.0
    %v1152 = vand.u32 %v206, 4294901760
    %v1153 = vsub.f32 %v206, %v1152
    %v1154 = vand.u32 %v1153, 4294901760
    %1155 = vmatpush1.xpose.msra.mxu0 %v1154
    %1156 = vmatprep.subr.mxu0 0.0
    %v1157 = vand.u32 %v203, 4294901760
    %v1158 = vsub.f32 %v203, %v1157
    %v1159 = vand.u32 %v1158, 4294901760
    %1160 = vmatpush1.xpose.msra.mxu0 %v1159
    %1161 = vmatprep.subr.mxu0 0.0
    %v1162 = vand.u32 %v200, 4294901760
    %v1163 = vsub.f32 %v200, %v1162
    %v1164 = vand.u32 %v1163, 4294901760
    %1165 = vmatpush1.xpose.msra.mxu0 %v1164
    %1166 = vmatprep.subr.mxu0 0.0
    %v1167 = vand.u32 %v197, 4294901760
    %v1168 = vsub.f32 %v197, %v1167
    %v1169 = vand.u32 %v1168, 4294901760
    %1170 = vmatpush1.xpose.msra.mxu0 %v1169
    %1171 = vmatprep.subr.mxu0 0.0
    %v1172 = vand.u32 %v194, 4294901760
    %v1173 = vsub.f32 %v194, %v1172
    %v1174 = vand.u32 %v1173, 4294901760
    %1175 = vmatpush1.xpose.msra.mxu0 %v1174
    %1176 = vmatprep.subr.mxu0 0.0
    %v1177 = vand.u32 %v191, 4294901760
    %v1178 = vsub.f32 %v191, %v1177
    %v1179 = vand.u32 %v1178, 4294901760
    %1180 = vmatpush1.xpose.msra.mxu0 %v1179
    %1181 = vmatprep.subr.mxu0 0.0
    %v1182 = vand.u32 %v188, 4294901760
    %v1183 = vsub.f32 %v188, %v1182
    %v1184 = vand.u32 %v1183, 4294901760
    %1185 = vmatpush1.xpose.msra.mxu0 %v1184
    %1186 = vmatprep.subr.mxu0 0.0
    %v1187 = vand.u32 %v185, 4294901760
    %v1188 = vsub.f32 %v185, %v1187
    %v1189 = vand.u32 %v1188, 4294901760
    %1190 = vmatpush1.xpose.msra.mxu0 %v1189
    %1191 = vmatprep.subr.mxu0 0.0
    %v1192 = vand.u32 %v182, 4294901760
    %v1193 = vsub.f32 %v182, %v1192
    %v1194 = vand.u32 %v1193, 4294901760
    %1195 = vmatpush1.xpose.msra.mxu0 %v1194
    %1196 = vmatprep.subr.mxu0 0.0
    %v1197 = vand.u32 %v179, 4294901760
    %v1198 = vsub.f32 %v179, %v1197
    %v1199 = vand.u32 %v1198, 4294901760
    %1200 = vmatpush1.xpose.msra.mxu0 %v1199
    %1201 = vmatprep.subr.mxu0 0.0
    %v1202 = vand.u32 %v176, 4294901760
    %v1203 = vsub.f32 %v176, %v1202
    %v1204 = vand.u32 %v1203, 4294901760
    %1205 = vmatpush1.xpose.msra.mxu0 %v1204
    %1206 = vmatprep.subr.mxu0 0.0
    %v1207 = vand.u32 %v173, 4294901760
    %v1208 = vsub.f32 %v173, %v1207
    %v1209 = vand.u32 %v1208, 4294901760
    %1210 = vmatpush1.xpose.msra.mxu0 %v1209
    %1211 = vmatprep.subr.mxu0 0.0
    %v1212 = vand.u32 %v170, 4294901760
    %v1213 = vsub.f32 %v170, %v1212
    %v1214 = vand.u32 %v1213, 4294901760
    %1215 = vmatpush1.xpose.msra.mxu0 %v1214
    %1216 = vmatprep.subr.mxu0 0.0
    %v1217 = vand.u32 %v263, 4294901760
    %v1218 = vsub.f32 %v263, %v1217
    %v1219 = vand.u32 %v1218, 4294901760
    %1220 = vmatpush2.xpose.msra.mxu0 %v1219
    %1221 = vmatprep.subr.mxu0 0.0
    %v1222 = vand.u32 %v260, 4294901760
    %v1223 = vsub.f32 %v260, %v1222
    %v1224 = vand.u32 %v1223, 4294901760
    %1225 = vmatpush2.xpose.msra.mxu0 %v1224
    %1226 = vmatprep.subr.mxu0 0.0
    %v1227 = vand.u32 %v257, 4294901760
    %v1228 = vsub.f32 %v257, %v1227
    %v1229 = vand.u32 %v1228, 4294901760
    %1230 = vmatpush2.xpose.msra.mxu0 %v1229
    %1231 = vmatprep.subr.mxu0 0.0
    %v1232 = vand.u32 %v254, 4294901760
    %v1233 = vsub.f32 %v254, %v1232
    %v1234 = vand.u32 %v1233, 4294901760
    %1235 = vmatpush2.xpose.msra.mxu0 %v1234
    %1236 = vmatprep.subr.mxu0 0.0
    %v1237 = vand.u32 %v251, 4294901760
    %v1238 = vsub.f32 %v251, %v1237
    %v1239 = vand.u32 %v1238, 4294901760
    %1240 = vmatpush2.xpose.msra.mxu0 %v1239
    %1241 = vmatprep.subr.mxu0 0.0
    %v1242 = vand.u32 %v248, 4294901760
    %v1243 = vsub.f32 %v248, %v1242
    %v1244 = vand.u32 %v1243, 4294901760
    %1245 = vmatpush2.xpose.msra.mxu0 %v1244
    %1246 = vmatprep.subr.mxu0 0.0
    %v1247 = vand.u32 %v245, 4294901760
    %v1248 = vsub.f32 %v245, %v1247
    %v1249 = vand.u32 %v1248, 4294901760
    %1250 = vmatpush2.xpose.msra.mxu0 %v1249
    %1251 = vmatprep.subr.mxu0 0.0
    %v1252 = vand.u32 %v242, 4294901760
    %v1253 = vsub.f32 %v242, %v1252
    %v1254 = vand.u32 %v1253, 4294901760
    %1255 = vmatpush2.xpose.msra.mxu0 %v1254
    %1256 = vmatprep.subr.mxu0 0.0
    %v1257 = vand.u32 %v239, 4294901760
    %v1258 = vsub.f32 %v239, %v1257
    %v1259 = vand.u32 %v1258, 4294901760
    %1260 = vmatpush2.xpose.msra.mxu0 %v1259
    %1261 = vmatprep.subr.mxu0 0.0
    %v1262 = vand.u32 %v236, 4294901760
    %v1263 = vsub.f32 %v236, %v1262
    %v1264 = vand.u32 %v1263, 4294901760
    %1265 = vmatpush2.xpose.msra.mxu0 %v1264
    %1266 = vmatprep.subr.mxu0 0.0
    %v1267 = vand.u32 %v233, 4294901760
    %v1268 = vsub.f32 %v233, %v1267
    %v1269 = vand.u32 %v1268, 4294901760
    %1270 = vmatpush2.xpose.msra.mxu0 %v1269
    %1271 = vmatprep.subr.mxu0 0.0
    %v1272 = vand.u32 %v230, 4294901760
    %v1273 = vsub.f32 %v230, %v1272
    %v1274 = vand.u32 %v1273, 4294901760
    %1275 = vmatpush2.xpose.msra.mxu0 %v1274
    %1276 = vmatprep.subr.mxu0 0.0
    %v1277 = vand.u32 %v227, 4294901760
    %v1278 = vsub.f32 %v227, %v1277
    %v1279 = vand.u32 %v1278, 4294901760
    %1280 = vmatpush2.xpose.msra.mxu0 %v1279
    %1281 = vmatprep.subr.mxu0 0.0
    %v1282 = vand.u32 %v224, 4294901760
    %v1283 = vsub.f32 %v224, %v1282
    %v1284 = vand.u32 %v1283, 4294901760
    %1285 = vmatpush2.xpose.msra.mxu0 %v1284
    %1286 = vmatprep.subr.mxu0 0.0
    %v1287 = vand.u32 %v221, 4294901760
    %v1288 = vsub.f32 %v221, %v1287
    %v1289 = vand.u32 %v1288, 4294901760
    %1290 = vmatpush2.xpose.msra.mxu0 %v1289
    %1291 = vmatprep.subr.mxu0 0.0
    %v1292 = vand.u32 %v218, 4294901760
    %v1293 = vsub.f32 %v218, %v1292
    %v1294 = vand.u32 %v1293, 4294901760
    %1295 = vmatpush2.xpose.msra.mxu0 %v1294
    %1296 = vmatprep.mubr.f32.mxu0 0.0
    %v1297 = vand.u32 %v167, 4294901760
    %1298 = vmatmul.mubr.f32.gmra.mxu0 %v1297
    %v1299 = vpop.f32.mrf.mxu0
    %v1300 = vadd.f32 %v1132, %v1299
    %v1301 = vpop.f32.mrf.mxu0
    %v1302 = vadd.f32 %v1134, %v1301
    %1303 = vdwg.mxu0
    %1304 = vmatprep.subr.mxu0 0.0
    %v1305 = vand.u32 %v215, 4294901760
    %1306 = vmatpush1.xpose.msra.mxu0 %v1305
    %1307 = vmatprep.subr.mxu0 0.0
    %v1308 = vand.u32 %v212, 4294901760
    %1309 = vmatpush1.xpose.msra.mxu0 %v1308
    %1310 = vmatprep.subr.mxu0 0.0
    %v1311 = vand.u32 %v209, 4294901760
    %1312 = vmatpush1.xpose.msra.mxu0 %v1311
    %1313 = vmatprep.subr.mxu0 0.0
    %v1314 = vand.u32 %v206, 4294901760
    %1315 = vmatpush1.xpose.msra.mxu0 %v1314
    %1316 = vmatprep.subr.mxu0 0.0
    %v1317 = vand.u32 %v203, 4294901760
    %1318 = vmatpush1.xpose.msra.mxu0 %v1317
    %1319 = vmatprep.subr.mxu0 0.0
    %v1320 = vand.u32 %v200, 4294901760
    %1321 = vmatpush1.xpose.msra.mxu0 %v1320
    %1322 = vmatprep.subr.mxu0 0.0
    %v1323 = vand.u32 %v197, 4294901760
    %1324 = vmatpush1.xpose.msra.mxu0 %v1323
    %1325 = vmatprep.subr.mxu0 0.0
    %v1326 = vand.u32 %v194, 4294901760
    %1327 = vmatpush1.xpose.msra.mxu0 %v1326
    %1328 = vmatprep.subr.mxu0 0.0
    %v1329 = vand.u32 %v191, 4294901760
    %1330 = vmatpush1.xpose.msra.mxu0 %v1329
    %1331 = vmatprep.subr.mxu0 0.0
    %v1332 = vand.u32 %v188, 4294901760
    %1333 = vmatpush1.xpose.msra.mxu0 %v1332
    %1334 = vmatprep.subr.mxu0 0.0
    %v1335 = vand.u32 %v185, 4294901760
    %1336 = vmatpush1.xpose.msra.mxu0 %v1335
    %1337 = vmatprep.subr.mxu0 0.0
    %v1338 = vand.u32 %v182, 4294901760
    %1339 = vmatpush1.xpose.msra.mxu0 %v1338
    %1340 = vmatprep.subr.mxu0 0.0
    %v1341 = vand.u32 %v179, 4294901760
    %1342 = vmatpush1.xpose.msra.mxu0 %v1341
    %1343 = vmatprep.subr.mxu0 0.0
    %v1344 = vand.u32 %v176, 4294901760
    %1345 = vmatpush1.xpose.msra.mxu0 %v1344
    %1346 = vmatprep.subr.mxu0 0.0
    %v1347 = vand.u32 %v173, 4294901760
    %1348 = vmatpush1.xpose.msra.mxu0 %v1347
    %1349 = vmatprep.subr.mxu0 0.0
    %v1350 = vand.u32 %v170, 4294901760
    %1351 = vmatpush1.xpose.msra.mxu0 %v1350
    %1352 = vmatprep.subr.mxu0 0.0
    %v1353 = vand.u32 %v263, 4294901760
    %1354 = vmatpush2.xpose.msra.mxu0 %v1353
    %1355 = vmatprep.subr.mxu0 0.0
    %v1356 = vand.u32 %v260, 4294901760
    %1357 = vmatpush2.xpose.msra.mxu0 %v1356
    %1358 = vmatprep.subr.mxu0 0.0
    %v1359 = vand.u32 %v257, 4294901760
    %1360 = vmatpush2.xpose.msra.mxu0 %v1359
    %1361 = vmatprep.subr.mxu0 0.0
    %v1362 = vand.u32 %v254, 4294901760
    %1363 = vmatpush2.xpose.msra.mxu0 %v1362
    %1364 = vmatprep.subr.mxu0 0.0
    %v1365 = vand.u32 %v251, 4294901760
    %1366 = vmatpush2.xpose.msra.mxu0 %v1365
    %1367 = vmatprep.subr.mxu0 0.0
    %v1368 = vand.u32 %v248, 4294901760
    %1369 = vmatpush2.xpose.msra.mxu0 %v1368
    %1370 = vmatprep.subr.mxu0 0.0
    %v1371 = vand.u32 %v245, 4294901760
    %1372 = vmatpush2.xpose.msra.mxu0 %v1371
    %1373 = vmatprep.subr.mxu0 0.0
    %v1374 = vand.u32 %v242, 4294901760
    %1375 = vmatpush2.xpose.msra.mxu0 %v1374
    %1376 = vmatprep.subr.mxu0 0.0
    %v1377 = vand.u32 %v239, 4294901760
    %1378 = vmatpush2.xpose.msra.mxu0 %v1377
    %1379 = vmatprep.subr.mxu0 0.0
    %v1380 = vand.u32 %v236, 4294901760
    %1381 = vmatpush2.xpose.msra.mxu0 %v1380
    %1382 = vmatprep.subr.mxu0 0.0
    %v1383 = vand.u32 %v233, 4294901760
    %1384 = vmatpush2.xpose.msra.mxu0 %v1383
    %1385 = vmatprep.subr.mxu0 0.0
    %v1386 = vand.u32 %v230, 4294901760
    %1387 = vmatpush2.xpose.msra.mxu0 %v1386
    %1388 = vmatprep.subr.mxu0 0.0
    %v1389 = vand.u32 %v227, 4294901760
    %1390 = vmatpush2.xpose.msra.mxu0 %v1389
    %1391 = vmatprep.subr.mxu0 0.0
    %v1392 = vand.u32 %v224, 4294901760
    %1393 = vmatpush2.xpose.msra.mxu0 %v1392
    %1394 = vmatprep.subr.mxu0 0.0
    %v1395 = vand.u32 %v221, 4294901760
    %1396 = vmatpush2.xpose.msra.mxu0 %v1395
    %1397 = vmatprep.subr.mxu0 0.0
    %v1398 = vand.u32 %v218, 4294901760
    %1399 = vmatpush2.xpose.msra.mxu0 %v1398
    %1400 = vmatprep.mubr.f32.mxu0 0.0
    %v1401 = vand.u32 %v167, 4294901760
    %1402 = vmatmul.mubr.f32.gmra.mxu0 %v1401
    %v1403 = vpop.f32.mrf.mxu0
    %v1404 = vadd.f32 %v1300, %v1403
    %v1405 = vpop.f32.mrf.mxu0
    %v1406 = vadd.f32 %v1302, %v1405
    %1407 = vdwg.mxu0
    %1408 = vmatprep.subr.mxu0 0.0
    %v1409 = vand.u32 %v311, 4294901760
    %1410 = vmatpush1.xpose.msra.mxu0 %v1409
    %1411 = vmatprep.subr.mxu0 0.0
    %v1412 = vand.u32 %v308, 4294901760
    %1413 = vmatpush1.xpose.msra.mxu0 %v1412
    %1414 = vmatprep.subr.mxu0 0.0
    %v1415 = vand.u32 %v305, 4294901760
    %1416 = vmatpush1.xpose.msra.mxu0 %v1415
    %1417 = vmatprep.subr.mxu0 0.0
    %v1418 = vand.u32 %v302, 4294901760
    %1419 = vmatpush1.xpose.msra.mxu0 %v1418
    %1420 = vmatprep.subr.mxu0 0.0
    %v1421 = vand.u32 %v299, 4294901760
    %1422 = vmatpush1.xpose.msra.mxu0 %v1421
    %1423 = vmatprep.subr.mxu0 0.0
    %v1424 = vand.u32 %v296, 4294901760
    %1425 = vmatpush1.xpose.msra.mxu0 %v1424
    %1426 = vmatprep.subr.mxu0 0.0
    %v1427 = vand.u32 %v293, 4294901760
    %1428 = vmatpush1.xpose.msra.mxu0 %v1427
    %1429 = vmatprep.subr.mxu0 0.0
    %v1430 = vand.u32 %v290, 4294901760
    %1431 = vmatpush1.xpose.msra.mxu0 %v1430
    %1432 = vmatprep.subr.mxu0 0.0
    %v1433 = vand.u32 %v287, 4294901760
    %1434 = vmatpush1.xpose.msra.mxu0 %v1433
    %1435 = vmatprep.subr.mxu0 0.0
    %v1436 = vand.u32 %v284, 4294901760
    %1437 = vmatpush1.xpose.msra.mxu0 %v1436
    %1438 = vmatprep.subr.mxu0 0.0
    %v1439 = vand.u32 %v281, 4294901760
    %1440 = vmatpush1.xpose.msra.mxu0 %v1439
    %1441 = vmatprep.subr.mxu0 0.0
    %v1442 = vand.u32 %v278, 4294901760
    %1443 = vmatpush1.xpose.msra.mxu0 %v1442
    %1444 = vmatprep.subr.mxu0 0.0
    %v1445 = vand.u32 %v275, 4294901760
    %1446 = vmatpush1.xpose.msra.mxu0 %v1445
    %1447 = vmatprep.subr.mxu0 0.0
    %v1448 = vand.u32 %v272, 4294901760
    %1449 = vmatpush1.xpose.msra.mxu0 %v1448
    %1450 = vmatprep.subr.mxu0 0.0
    %v1451 = vand.u32 %v269, 4294901760
    %1452 = vmatpush1.xpose.msra.mxu0 %v1451
    %1453 = vmatprep.subr.mxu0 0.0
    %v1454 = vand.u32 %v266, 4294901760
    %1455 = vmatpush1.xpose.msra.mxu0 %v1454
    %1456 = vmatprep.subr.mxu0 0.0
    %v1457 = vand.u32 %v359, 4294901760
    %1458 = vmatpush2.xpose.msra.mxu0 %v1457
    %1459 = vmatprep.subr.mxu0 0.0
    %v1460 = vand.u32 %v356, 4294901760
    %1461 = vmatpush2.xpose.msra.mxu0 %v1460
    %1462 = vmatprep.subr.mxu0 0.0
    %v1463 = vand.u32 %v353, 4294901760
    %1464 = vmatpush2.xpose.msra.mxu0 %v1463
    %1465 = vmatprep.subr.mxu0 0.0
    %v1466 = vand.u32 %v350, 4294901760
    %1467 = vmatpush2.xpose.msra.mxu0 %v1466
    %1468 = vmatprep.subr.mxu0 0.0
    %v1469 = vand.u32 %v347, 4294901760
    %1470 = vmatpush2.xpose.msra.mxu0 %v1469
    %1471 = vmatprep.subr.mxu0 0.0
    %v1472 = vand.u32 %v344, 4294901760
    %1473 = vmatpush2.xpose.msra.mxu0 %v1472
    %1474 = vmatprep.subr.mxu0 0.0
    %v1475 = vand.u32 %v341, 4294901760
    %1476 = vmatpush2.xpose.msra.mxu0 %v1475
    %1477 = vmatprep.subr.mxu0 0.0
    %v1478 = vand.u32 %v338, 4294901760
    %1479 = vmatpush2.xpose.msra.mxu0 %v1478
    %1480 = vmatprep.subr.mxu0 0.0
    %v1481 = vand.u32 %v335, 4294901760
    %1482 = vmatpush2.xpose.msra.mxu0 %v1481
    %1483 = vmatprep.subr.mxu0 0.0
    %v1484 = vand.u32 %v332, 4294901760
    %1485 = vmatpush2.xpose.msra.mxu0 %v1484
    %1486 = vmatprep.subr.mxu0 0.0
    %v1487 = vand.u32 %v329, 4294901760
    %1488 = vmatpush2.xpose.msra.mxu0 %v1487
    %1489 = vmatprep.subr.mxu0 0.0
    %v1490 = vand.u32 %v326, 4294901760
    %1491 = vmatpush2.xpose.msra.mxu0 %v1490
    %1492 = vmatprep.subr.mxu0 0.0
    %v1493 = vand.u32 %v323, 4294901760
    %1494 = vmatpush2.xpose.msra.mxu0 %v1493
    %1495 = vmatprep.subr.mxu0 0.0
    %v1496 = vand.u32 %v320, 4294901760
    %1497 = vmatpush2.xpose.msra.mxu0 %v1496
    %1498 = vmatprep.subr.mxu0 0.0
    %v1499 = vand.u32 %v317, 4294901760
    %1500 = vmatpush2.xpose.msra.mxu0 %v1499
    %1501 = vmatprep.subr.mxu0 0.0
    %v1502 = vand.u32 %v314, 4294901760
    %1503 = vmatpush2.xpose.msra.mxu0 %v1502
    %1504 = vmatprep.mubr.f32.mxu0 0.0
    %v1505 = vand.u32 %v167, 4294901760
    %v1506 = vsub.f32 %v167, %v1505
    %v1507 = vand.u32 %v1506, 4294901760
    %v1508 = vsub.f32 %v1506, %v1507
    %v1509 = vand.u32 %v1508, 4294901760
    %1510 = vmatmul.mubr.f32.gmra.mxu0 %v1509
    %v1511 = vpop.f32.mrf.mxu0
    %v1512 = vadd.f32 0.0, %v1511
    %v1513 = vpop.f32.mrf.mxu0
    %v1514 = vadd.f32 0.0, %v1513
    %1515 = vdwg.mxu0
    %1516 = vmatprep.subr.mxu0 0.0
    %v1517 = vand.u32 %v311, 4294901760
    %v1518 = vsub.f32 %v311, %v1517
    %v1519 = vand.u32 %v1518, 4294901760
    %v1520 = vsub.f32 %v1518, %v1519
    %v1521 = vand.u32 %v1520, 4294901760
    %1522 = vmatpush1.xpose.msra.mxu0 %v1521
    %1523 = vmatprep.subr.mxu0 0.0
    %v1524 = vand.u32 %v308, 4294901760
    %v1525 = vsub.f32 %v308, %v1524
    %v1526 = vand.u32 %v1525, 4294901760
    %v1527 = vsub.f32 %v1525, %v1526
    %v1528 = vand.u32 %v1527, 4294901760
    %1529 = vmatpush1.xpose.msra.mxu0 %v1528
    %1530 = vmatprep.subr.mxu0 0.0
    %v1531 = vand.u32 %v305, 4294901760
    %v1532 = vsub.f32 %v305, %v1531
    %v1533 = vand.u32 %v1532, 4294901760
    %v1534 = vsub.f32 %v1532, %v1533
    %v1535 = vand.u32 %v1534, 4294901760
    %1536 = vmatpush1.xpose.msra.mxu0 %v1535
    %1537 = vmatprep.subr.mxu0 0.0
    %v1538 = vand.u32 %v302, 4294901760
    %v1539 = vsub.f32 %v302, %v1538
    %v1540 = vand.u32 %v1539, 4294901760
    %v1541 = vsub.f32 %v1539, %v1540
    %v1542 = vand.u32 %v1541, 4294901760
    %1543 = vmatpush1.xpose.msra.mxu0 %v1542
    %1544 = vmatprep.subr.mxu0 0.0
    %v1545 = vand.u32 %v299, 4294901760
    %v1546 = vsub.f32 %v299, %v1545
    %v1547 = vand.u32 %v1546, 4294901760
    %v1548 = vsub.f32 %v1546, %v1547
    %v1549 = vand.u32 %v1548, 4294901760
    %1550 = vmatpush1.xpose.msra.mxu0 %v1549
    %1551 = vmatprep.subr.mxu0 0.0
    %v1552 = vand.u32 %v296, 4294901760
    %v1553 = vsub.f32 %v296, %v1552
    %v1554 = vand.u32 %v1553, 4294901760
    %v1555 = vsub.f32 %v1553, %v1554
    %v1556 = vand.u32 %v1555, 4294901760
    %1557 = vmatpush1.xpose.msra.mxu0 %v1556
    %1558 = vmatprep.subr.mxu0 0.0
    %v1559 = vand.u32 %v293, 4294901760
    %v1560 = vsub.f32 %v293, %v1559
    %v1561 = vand.u32 %v1560, 4294901760
    %v1562 = vsub.f32 %v1560, %v1561
    %v1563 = vand.u32 %v1562, 4294901760
    %1564 = vmatpush1.xpose.msra.mxu0 %v1563
    %1565 = vmatprep.subr.mxu0 0.0
    %v1566 = vand.u32 %v290, 4294901760
    %v1567 = vsub.f32 %v290, %v1566
    %v1568 = vand.u32 %v1567, 4294901760
    %v1569 = vsub.f32 %v1567, %v1568
    %v1570 = vand.u32 %v1569, 4294901760
    %1571 = vmatpush1.xpose.msra.mxu0 %v1570
    %1572 = vmatprep.subr.mxu0 0.0
    %v1573 = vand.u32 %v287, 4294901760
    %v1574 = vsub.f32 %v287, %v1573
    %v1575 = vand.u32 %v1574, 4294901760
    %v1576 = vsub.f32 %v1574, %v1575
    %v1577 = vand.u32 %v1576, 4294901760
    %1578 = vmatpush1.xpose.msra.mxu0 %v1577
    %1579 = vmatprep.subr.mxu0 0.0
    %v1580 = vand.u32 %v284, 4294901760
    %v1581 = vsub.f32 %v284, %v1580
    %v1582 = vand.u32 %v1581, 4294901760
    %v1583 = vsub.f32 %v1581, %v1582
    %v1584 = vand.u32 %v1583, 4294901760
    %1585 = vmatpush1.xpose.msra.mxu0 %v1584
    %1586 = vmatprep.subr.mxu0 0.0
    %v1587 = vand.u32 %v281, 4294901760
    %v1588 = vsub.f32 %v281, %v1587
    %v1589 = vand.u32 %v1588, 4294901760
    %v1590 = vsub.f32 %v1588, %v1589
    %v1591 = vand.u32 %v1590, 4294901760
    %1592 = vmatpush1.xpose.msra.mxu0 %v1591
    %1593 = vmatprep.subr.mxu0 0.0
    %v1594 = vand.u32 %v278, 4294901760
    %v1595 = vsub.f32 %v278, %v1594
    %v1596 = vand.u32 %v1595, 4294901760
    %v1597 = vsub.f32 %v1595, %v1596
    %v1598 = vand.u32 %v1597, 4294901760
    %1599 = vmatpush1.xpose.msra.mxu0 %v1598
    %1600 = vmatprep.subr.mxu0 0.0
    %v1601 = vand.u32 %v275, 4294901760
    %v1602 = vsub.f32 %v275, %v1601
    %v1603 = vand.u32 %v1602, 4294901760
    %v1604 = vsub.f32 %v1602, %v1603
    %v1605 = vand.u32 %v1604, 4294901760
    %1606 = vmatpush1.xpose.msra.mxu0 %v1605
    %1607 = vmatprep.subr.mxu0 0.0
    %v1608 = vand.u32 %v272, 4294901760
    %v1609 = vsub.f32 %v272, %v1608
    %v1610 = vand.u32 %v1609, 4294901760
    %v1611 = vsub.f32 %v1609, %v1610
    %v1612 = vand.u32 %v1611, 4294901760
    %1613 = vmatpush1.xpose.msra.mxu0 %v1612
    %1614 = vmatprep.subr.mxu0 0.0
    %v1615 = vand.u32 %v269, 4294901760
    %v1616 = vsub.f32 %v269, %v1615
    %v1617 = vand.u32 %v1616, 4294901760
    %v1618 = vsub.f32 %v1616, %v1617
    %v1619 = vand.u32 %v1618, 4294901760
    %1620 = vmatpush1.xpose.msra.mxu0 %v1619
    %1621 = vmatprep.subr.mxu0 0.0
    %v1622 = vand.u32 %v266, 4294901760
    %v1623 = vsub.f32 %v266, %v1622
    %v1624 = vand.u32 %v1623, 4294901760
    %v1625 = vsub.f32 %v1623, %v1624
    %v1626 = vand.u32 %v1625, 4294901760
    %1627 = vmatpush1.xpose.msra.mxu0 %v1626
    %1628 = vmatprep.subr.mxu0 0.0
    %v1629 = vand.u32 %v359, 4294901760
    %v1630 = vsub.f32 %v359, %v1629
    %v1631 = vand.u32 %v1630, 4294901760
    %v1632 = vsub.f32 %v1630, %v1631
    %v1633 = vand.u32 %v1632, 4294901760
    %1634 = vmatpush2.xpose.msra.mxu0 %v1633
    %1635 = vmatprep.subr.mxu0 0.0
    %v1636 = vand.u32 %v356, 4294901760
    %v1637 = vsub.f32 %v356, %v1636
    %v1638 = vand.u32 %v1637, 4294901760
    %v1639 = vsub.f32 %v1637, %v1638
    %v1640 = vand.u32 %v1639, 4294901760
    %1641 = vmatpush2.xpose.msra.mxu0 %v1640
    %1642 = vmatprep.subr.mxu0 0.0
    %v1643 = vand.u32 %v353, 4294901760
    %v1644 = vsub.f32 %v353, %v1643
    %v1645 = vand.u32 %v1644, 4294901760
    %v1646 = vsub.f32 %v1644, %v1645
    %v1647 = vand.u32 %v1646, 4294901760
    %1648 = vmatpush2.xpose.msra.mxu0 %v1647
    %1649 = vmatprep.subr.mxu0 0.0
    %v1650 = vand.u32 %v350, 4294901760
    %v1651 = vsub.f32 %v350, %v1650
    %v1652 = vand.u32 %v1651, 4294901760
    %v1653 = vsub.f32 %v1651, %v1652
    %v1654 = vand.u32 %v1653, 4294901760
    %1655 = vmatpush2.xpose.msra.mxu0 %v1654
    %1656 = vmatprep.subr.mxu0 0.0
    %v1657 = vand.u32 %v347, 4294901760
    %v1658 = vsub.f32 %v347, %v1657
    %v1659 = vand.u32 %v1658, 4294901760
    %v1660 = vsub.f32 %v1658, %v1659
    %v1661 = vand.u32 %v1660, 4294901760
    %1662 = vmatpush2.xpose.msra.mxu0 %v1661
    %1663 = vmatprep.subr.mxu0 0.0
    %v1664 = vand.u32 %v344, 4294901760
    %v1665 = vsub.f32 %v344, %v1664
    %v1666 = vand.u32 %v1665, 4294901760
    %v1667 = vsub.f32 %v1665, %v1666
    %v1668 = vand.u32 %v1667, 4294901760
    %1669 = vmatpush2.xpose.msra.mxu0 %v1668
    %1670 = vmatprep.subr.mxu0 0.0
    %v1671 = vand.u32 %v341, 4294901760
    %v1672 = vsub.f32 %v341, %v1671
    %v1673 = vand.u32 %v1672, 4294901760
    %v1674 = vsub.f32 %v1672, %v1673
    %v1675 = vand.u32 %v1674, 4294901760
    %1676 = vmatpush2.xpose.msra.mxu0 %v1675
    %1677 = vmatprep.subr.mxu0 0.0
    %v1678 = vand.u32 %v338, 4294901760
    %v1679 = vsub.f32 %v338, %v1678
    %v1680 = vand.u32 %v1679, 4294901760
    %v1681 = vsub.f32 %v1679, %v1680
    %v1682 = vand.u32 %v1681, 4294901760
    %1683 = vmatpush2.xpose.msra.mxu0 %v1682
    %1684 = vmatprep.subr.mxu0 0.0
    %v1685 = vand.u32 %v335, 4294901760
    %v1686 = vsub.f32 %v335, %v1685
    %v1687 = vand.u32 %v1686, 4294901760
    %v1688 = vsub.f32 %v1686, %v1687
    %v1689 = vand.u32 %v1688, 4294901760
    %1690 = vmatpush2.xpose.msra.mxu0 %v1689
    %1691 = vmatprep.subr.mxu0 0.0
    %v1692 = vand.u32 %v332, 4294901760
    %v1693 = vsub.f32 %v332, %v1692
    %v1694 = vand.u32 %v1693, 4294901760
    %v1695 = vsub.f32 %v1693, %v1694
    %v1696 = vand.u32 %v1695, 4294901760
    %1697 = vmatpush2.xpose.msra.mxu0 %v1696
    %1698 = vmatprep.subr.mxu0 0.0
    %v1699 = vand.u32 %v329, 4294901760
    %v1700 = vsub.f32 %v329, %v1699
    %v1701 = vand.u32 %v1700, 4294901760
    %v1702 = vsub.f32 %v1700, %v1701
    %v1703 = vand.u32 %v1702, 4294901760
    %1704 = vmatpush2.xpose.msra.mxu0 %v1703
    %1705 = vmatprep.subr.mxu0 0.0
    %v1706 = vand.u32 %v326, 4294901760
    %v1707 = vsub.f32 %v326, %v1706
    %v1708 = vand.u32 %v1707, 4294901760
    %v1709 = vsub.f32 %v1707, %v1708
    %v1710 = vand.u32 %v1709, 4294901760
    %1711 = vmatpush2.xpose.msra.mxu0 %v1710
    %1712 = vmatprep.subr.mxu0 0.0
    %v1713 = vand.u32 %v323, 4294901760
    %v1714 = vsub.f32 %v323, %v1713
    %v1715 = vand.u32 %v1714, 4294901760
    %v1716 = vsub.f32 %v1714, %v1715
    %v1717 = vand.u32 %v1716, 4294901760
    %1718 = vmatpush2.xpose.msra.mxu0 %v1717
    %1719 = vmatprep.subr.mxu0 0.0
    %v1720 = vand.u32 %v320, 4294901760
    %v1721 = vsub.f32 %v320, %v1720
    %v1722 = vand.u32 %v1721, 4294901760
    %v1723 = vsub.f32 %v1721, %v1722
    %v1724 = vand.u32 %v1723, 4294901760
    %1725 = vmatpush2.xpose.msra.mxu0 %v1724
    %1726 = vmatprep.subr.mxu0 0.0
    %v1727 = vand.u32 %v317, 4294901760
    %v1728 = vsub.f32 %v317, %v1727
    %v1729 = vand.u32 %v1728, 4294901760
    %v1730 = vsub.f32 %v1728, %v1729
    %v1731 = vand.u32 %v1730, 4294901760
    %1732 = vmatpush2.xpose.msra.mxu0 %v1731
    %1733 = vmatprep.subr.mxu0 0.0
    %v1734 = vand.u32 %v314, 4294901760
    %v1735 = vsub.f32 %v314, %v1734
    %v1736 = vand.u32 %v1735, 4294901760
    %v1737 = vsub.f32 %v1735, %v1736
    %v1738 = vand.u32 %v1737, 4294901760
    %1739 = vmatpush2.xpose.msra.mxu0 %v1738
    %1740 = vmatprep.mubr.f32.mxu0 0.0
    %v1741 = vand.u32 %v167, 4294901760
    %1742 = vmatmul.mubr.f32.gmra.mxu0 %v1741
    %v1743 = vpop.f32.mrf.mxu0
    %v1744 = vadd.f32 %v1512, %v1743
    %v1745 = vpop.f32.mrf.mxu0
    %v1746 = vadd.f32 %v1514, %v1745
    %1747 = vdwg.mxu0
    %1748 = vmatprep.subr.mxu0 0.0
    %v1749 = vand.u32 %v311, 4294901760
    %v1750 = vsub.f32 %v311, %v1749
    %1751 = vmatpush1.xpose.msra.mxu0 %v1750
    %1752 = vmatprep.subr.mxu0 0.0
    %v1753 = vand.u32 %v308, 4294901760
    %v1754 = vsub.f32 %v308, %v1753
    %1755 = vmatpush1.xpose.msra.mxu0 %v1754
    %1756 = vmatprep.subr.mxu0 0.0
    %v1757 = vand.u32 %v305, 4294901760
    %v1758 = vsub.f32 %v305, %v1757
    %1759 = vmatpush1.xpose.msra.mxu0 %v1758
    %1760 = vmatprep.subr.mxu0 0.0
    %v1761 = vand.u32 %v302, 4294901760
    %v1762 = vsub.f32 %v302, %v1761
    %1763 = vmatpush1.xpose.msra.mxu0 %v1762
    %1764 = vmatprep.subr.mxu0 0.0
    %v1765 = vand.u32 %v299, 4294901760
    %v1766 = vsub.f32 %v299, %v1765
    %1767 = vmatpush1.xpose.msra.mxu0 %v1766
    %1768 = vmatprep.subr.mxu0 0.0
    %v1769 = vand.u32 %v296, 4294901760
    %v1770 = vsub.f32 %v296, %v1769
    %1771 = vmatpush1.xpose.msra.mxu0 %v1770
    %1772 = vmatprep.subr.mxu0 0.0
    %v1773 = vand.u32 %v293, 4294901760
    %v1774 = vsub.f32 %v293, %v1773
    %1775 = vmatpush1.xpose.msra.mxu0 %v1774
    %1776 = vmatprep.subr.mxu0 0.0
    %v1777 = vand.u32 %v290, 4294901760
    %v1778 = vsub.f32 %v290, %v1777
    %1779 = vmatpush1.xpose.msra.mxu0 %v1778
    %1780 = vmatprep.subr.mxu0 0.0
    %v1781 = vand.u32 %v287, 4294901760
    %v1782 = vsub.f32 %v287, %v1781
    %1783 = vmatpush1.xpose.msra.mxu0 %v1782
    %1784 = vmatprep.subr.mxu0 0.0
    %v1785 = vand.u32 %v284, 4294901760
    %v1786 = vsub.f32 %v284, %v1785
    %1787 = vmatpush1.xpose.msra.mxu0 %v1786
    %1788 = vmatprep.subr.mxu0 0.0
    %v1789 = vand.u32 %v281, 4294901760
    %v1790 = vsub.f32 %v281, %v1789
    %1791 = vmatpush1.xpose.msra.mxu0 %v1790
    %1792 = vmatprep.subr.mxu0 0.0
    %v1793 = vand.u32 %v278, 4294901760
    %v1794 = vsub.f32 %v278, %v1793
    %1795 = vmatpush1.xpose.msra.mxu0 %v1794
    %1796 = vmatprep.subr.mxu0 0.0
    %v1797 = vand.u32 %v275, 4294901760
    %v1798 = vsub.f32 %v275, %v1797
    %1799 = vmatpush1.xpose.msra.mxu0 %v1798
    %1800 = vmatprep.subr.mxu0 0.0
    %v1801 = vand.u32 %v272, 4294901760
    %v1802 = vsub.f32 %v272, %v1801
    %1803 = vmatpush1.xpose.msra.mxu0 %v1802
    %1804 = vmatprep.subr.mxu0 0.0
    %v1805 = vand.u32 %v269, 4294901760
    %v1806 = vsub.f32 %v269, %v1805
    %1807 = vmatpush1.xpose.msra.mxu0 %v1806
    %1808 = vmatprep.subr.mxu0 0.0
    %v1809 = vand.u32 %v266, 4294901760
    %v1810 = vsub.f32 %v266, %v1809
    %1811 = vmatpush1.xpose.msra.mxu0 %v1810
    %1812 = vmatprep.subr.mxu0 0.0
    %v1813 = vand.u32 %v359, 4294901760
    %v1814 = vsub.f32 %v359, %v1813
    %1815 = vmatpush2.xpose.msra.mxu0 %v1814
    %1816 = vmatprep.subr.mxu0 0.0
    %v1817 = vand.u32 %v356, 4294901760
    %v1818 = vsub.f32 %v356, %v1817
    %1819 = vmatpush2.xpose.msra.mxu0 %v1818
    %1820 = vmatprep.subr.mxu0 0.0
    %v1821 = vand.u32 %v353, 4294901760
    %v1822 = vsub.f32 %v353, %v1821
    %1823 = vmatpush2.xpose.msra.mxu0 %v1822
    %1824 = vmatprep.subr.mxu0 0.0
    %v1825 = vand.u32 %v350, 4294901760
    %v1826 = vsub.f32 %v350, %v1825
    %1827 = vmatpush2.xpose.msra.mxu0 %v1826
    %1828 = vmatprep.subr.mxu0 0.0
    %v1829 = vand.u32 %v347, 4294901760
    %v1830 = vsub.f32 %v347, %v1829
    %1831 = vmatpush2.xpose.msra.mxu0 %v1830
    %1832 = vmatprep.subr.mxu0 0.0
    %v1833 = vand.u32 %v344, 4294901760
    %v1834 = vsub.f32 %v344, %v1833
    %1835 = vmatpush2.xpose.msra.mxu0 %v1834
    %1836 = vmatprep.subr.mxu0 0.0
    %v1837 = vand.u32 %v341, 4294901760
    %v1838 = vsub.f32 %v341, %v1837
    %1839 = vmatpush2.xpose.msra.mxu0 %v1838
    %1840 = vmatprep.subr.mxu0 0.0
    %v1841 = vand.u32 %v338, 4294901760
    %v1842 = vsub.f32 %v338, %v1841
    %1843 = vmatpush2.xpose.msra.mxu0 %v1842
    %1844 = vmatprep.subr.mxu0 0.0
    %v1845 = vand.u32 %v335, 4294901760
    %v1846 = vsub.f32 %v335, %v1845
    %1847 = vmatpush2.xpose.msra.mxu0 %v1846
    %1848 = vmatprep.subr.mxu0 0.0
    %v1849 = vand.u32 %v332, 4294901760
    %v1850 = vsub.f32 %v332, %v1849
    %1851 = vmatpush2.xpose.msra.mxu0 %v1850
    %1852 = vmatprep.subr.mxu0 0.0
    %v1853 = vand.u32 %v329, 4294901760
    %v1854 = vsub.f32 %v329, %v1853
    %1855 = vmatpush2.xpose.msra.mxu0 %v1854
    %1856 = vmatprep.subr.mxu0 0.0
    %v1857 = vand.u32 %v326, 4294901760
    %v1858 = vsub.f32 %v326, %v1857
    %1859 = vmatpush2.xpose.msra.mxu0 %v1858
    %1860 = vmatprep.subr.mxu0 0.0
    %v1861 = vand.u32 %v323, 4294901760
    %v1862 = vsub.f32 %v323, %v1861
    %1863 = vmatpush2.xpose.msra.mxu0 %v1862
    %1864 = vmatprep.subr.mxu0 0.0
    %v1865 = vand.u32 %v320, 4294901760
    %v1866 = vsub.f32 %v320, %v1865
    %1867 = vmatpush2.xpose.msra.mxu0 %v1866
    %1868 = vmatprep.subr.mxu0 0.0
    %v1869 = vand.u32 %v317, 4294901760
    %v1870 = vsub.f32 %v317, %v1869
    %1871 = vmatpush2.xpose.msra.mxu0 %v1870
    %1872 = vmatprep.subr.mxu0 0.0
    %v1873 = vand.u32 %v314, 4294901760
    %v1874 = vsub.f32 %v314, %v1873
    %1875 = vmatpush2.xpose.msra.mxu0 %v1874
    %1876 = vmatprep.mubr.f32.mxu0 0.0
    %v1877 = vand.u32 %v167, 4294901760
    %v1878 = vsub.f32 %v167, %v1877
    %1879 = vmatmul.mubr.f32.gmra.mxu0 %v1878
    %v1880 = vpop.f32.mrf.mxu0
    %v1881 = vadd.f32 %v1744, %v1880
    %v1882 = vpop.f32.mrf.mxu0
    %v1883 = vadd.f32 %v1746, %v1882
    %1884 = vdwg.mxu0
    %1885 = vmatprep.subr.mxu0 0.0
    %v1886 = vand.u32 %v311, 4294901760
    %1887 = vmatpush1.xpose.msra.mxu0 %v1886
    %1888 = vmatprep.subr.mxu0 0.0
    %v1889 = vand.u32 %v308, 4294901760
    %1890 = vmatpush1.xpose.msra.mxu0 %v1889
    %1891 = vmatprep.subr.mxu0 0.0
    %v1892 = vand.u32 %v305, 4294901760
    %1893 = vmatpush1.xpose.msra.mxu0 %v1892
    %1894 = vmatprep.subr.mxu0 0.0
    %v1895 = vand.u32 %v302, 4294901760
    %1896 = vmatpush1.xpose.msra.mxu0 %v1895
    %1897 = vmatprep.subr.mxu0 0.0
    %v1898 = vand.u32 %v299, 4294901760
    %1899 = vmatpush1.xpose.msra.mxu0 %v1898
    %1900 = vmatprep.subr.mxu0 0.0
    %v1901 = vand.u32 %v296, 4294901760
    %1902 = vmatpush1.xpose.msra.mxu0 %v1901
    %1903 = vmatprep.subr.mxu0 0.0
    %v1904 = vand.u32 %v293, 4294901760
    %1905 = vmatpush1.xpose.msra.mxu0 %v1904
    %1906 = vmatprep.subr.mxu0 0.0
    %v1907 = vand.u32 %v290, 4294901760
    %1908 = vmatpush1.xpose.msra.mxu0 %v1907
    %1909 = vmatprep.subr.mxu0 0.0
    %v1910 = vand.u32 %v287, 4294901760
    %1911 = vmatpush1.xpose.msra.mxu0 %v1910
    %1912 = vmatprep.subr.mxu0 0.0
    %v1913 = vand.u32 %v284, 4294901760
    %1914 = vmatpush1.xpose.msra.mxu0 %v1913
    %1915 = vmatprep.subr.mxu0 0.0
    %v1916 = vand.u32 %v281, 4294901760
    %1917 = vmatpush1.xpose.msra.mxu0 %v1916
    %1918 = vmatprep.subr.mxu0 0.0
    %v1919 = vand.u32 %v278, 4294901760
    %1920 = vmatpush1.xpose.msra.mxu0 %v1919
    %1921 = vmatprep.subr.mxu0 0.0
    %v1922 = vand.u32 %v275, 4294901760
    %1923 = vmatpush1.xpose.msra.mxu0 %v1922
    %1924 = vmatprep.subr.mxu0 0.0
    %v1925 = vand.u32 %v272, 4294901760
    %1926 = vmatpush1.xpose.msra.mxu0 %v1925
    %1927 = vmatprep.subr.mxu0 0.0
    %v1928 = vand.u32 %v269, 4294901760
    %1929 = vmatpush1.xpose.msra.mxu0 %v1928
    %1930 = vmatprep.subr.mxu0 0.0
    %v1931 = vand.u32 %v266, 4294901760
    %1932 = vmatpush1.xpose.msra.mxu0 %v1931
    %1933 = vmatprep.subr.mxu0 0.0
    %v1934 = vand.u32 %v359, 4294901760
    %1935 = vmatpush2.xpose.msra.mxu0 %v1934
    %1936 = vmatprep.subr.mxu0 0.0
    %v1937 = vand.u32 %v356, 4294901760
    %1938 = vmatpush2.xpose.msra.mxu0 %v1937
    %1939 = vmatprep.subr.mxu0 0.0
    %v1940 = vand.u32 %v353, 4294901760
    %1941 = vmatpush2.xpose.msra.mxu0 %v1940
    %1942 = vmatprep.subr.mxu0 0.0
    %v1943 = vand.u32 %v350, 4294901760
    %1944 = vmatpush2.xpose.msra.mxu0 %v1943
    %1945 = vmatprep.subr.mxu0 0.0
    %v1946 = vand.u32 %v347, 4294901760
    %1947 = vmatpush2.xpose.msra.mxu0 %v1946
    %1948 = vmatprep.subr.mxu0 0.0
    %v1949 = vand.u32 %v344, 4294901760
    %1950 = vmatpush2.xpose.msra.mxu0 %v1949
    %1951 = vmatprep.subr.mxu0 0.0
    %v1952 = vand.u32 %v341, 4294901760
    %1953 = vmatpush2.xpose.msra.mxu0 %v1952
    %1954 = vmatprep.subr.mxu0 0.0
    %v1955 = vand.u32 %v338, 4294901760
    %1956 = vmatpush2.xpose.msra.mxu0 %v1955
    %1957 = vmatprep.subr.mxu0 0.0
    %v1958 = vand.u32 %v335, 4294901760
    %1959 = vmatpush2.xpose.msra.mxu0 %v1958
    %1960 = vmatprep.subr.mxu0 0.0
    %v1961 = vand.u32 %v332, 4294901760
    %1962 = vmatpush2.xpose.msra.mxu0 %v1961
    %1963 = vmatprep.subr.mxu0 0.0
    %v1964 = vand.u32 %v329, 4294901760
    %1965 = vmatpush2.xpose.msra.mxu0 %v1964
    %1966 = vmatprep.subr.mxu0 0.0
    %v1967 = vand.u32 %v326, 4294901760
    %1968 = vmatpush2.xpose.msra.mxu0 %v1967
    %1969 = vmatprep.subr.mxu0 0.0
    %v1970 = vand.u32 %v323, 4294901760
    %1971 = vmatpush2.xpose.msra.mxu0 %v1970
    %1972 = vmatprep.subr.mxu0 0.0
    %v1973 = vand.u32 %v320, 4294901760
    %1974 = vmatpush2.xpose.msra.mxu0 %v1973
    %1975 = vmatprep.subr.mxu0 0.0
    %v1976 = vand.u32 %v317, 4294901760
    %1977 = vmatpush2.xpose.msra.mxu0 %v1976
    %1978 = vmatprep.subr.mxu0 0.0
    %v1979 = vand.u32 %v314, 4294901760
    %1980 = vmatpush2.xpose.msra.mxu0 %v1979
    %1981 = vmatprep.mubr.f32.mxu0 0.0
    %v1982 = vand.u32 %v167, 4294901760
    %v1983 = vsub.f32 %v167, %v1982
    %v1984 = vand.u32 %v1983, 4294901760
    %1985 = vmatmul.mubr.f32.gmra.mxu0 %v1984
    %v1986 = vpop.f32.mrf.mxu0
    %v1987 = vadd.f32 %v1881, %v1986
    %v1988 = vpop.f32.mrf.mxu0
    %v1989 = vadd.f32 %v1883, %v1988
    %1990 = vdwg.mxu0
    %1991 = vmatprep.subr.mxu0 0.0
    %v1992 = vand.u32 %v311, 4294901760
    %v1993 = vsub.f32 %v311, %v1992
    %v1994 = vand.u32 %v1993, 4294901760
    %1995 = vmatpush1.xpose.msra.mxu0 %v1994
    %1996 = vmatprep.subr.mxu0 0.0
    %v1997 = vand.u32 %v308, 4294901760
    %v1998 = vsub.f32 %v308, %v1997
    %v1999 = vand.u32 %v1998, 4294901760
    %2000 = vmatpush1.xpose.msra.mxu0 %v1999
    %2001 = vmatprep.subr.mxu0 0.0
    %v2002 = vand.u32 %v305, 4294901760
    %v2003 = vsub.f32 %v305, %v2002
    %v2004 = vand.u32 %v2003, 4294901760
    %2005 = vmatpush1.xpose.msra.mxu0 %v2004
    %2006 = vmatprep.subr.mxu0 0.0
    %v2007 = vand.u32 %v302, 4294901760
    %v2008 = vsub.f32 %v302, %v2007
    %v2009 = vand.u32 %v2008, 4294901760
    %2010 = vmatpush1.xpose.msra.mxu0 %v2009
    %2011 = vmatprep.subr.mxu0 0.0
    %v2012 = vand.u32 %v299, 4294901760
    %v2013 = vsub.f32 %v299, %v2012
    %v2014 = vand.u32 %v2013, 4294901760
    %2015 = vmatpush1.xpose.msra.mxu0 %v2014
    %2016 = vmatprep.subr.mxu0 0.0
    %v2017 = vand.u32 %v296, 4294901760
    %v2018 = vsub.f32 %v296, %v2017
    %v2019 = vand.u32 %v2018, 4294901760
    %2020 = vmatpush1.xpose.msra.mxu0 %v2019
    %2021 = vmatprep.subr.mxu0 0.0
    %v2022 = vand.u32 %v293, 4294901760
    %v2023 = vsub.f32 %v293, %v2022
    %v2024 = vand.u32 %v2023, 4294901760
    %2025 = vmatpush1.xpose.msra.mxu0 %v2024
    %2026 = vmatprep.subr.mxu0 0.0
    %v2027 = vand.u32 %v290, 4294901760
    %v2028 = vsub.f32 %v290, %v2027
    %v2029 = vand.u32 %v2028, 4294901760
    %2030 = vmatpush1.xpose.msra.mxu0 %v2029
    %2031 = vmatprep.subr.mxu0 0.0
    %v2032 = vand.u32 %v287, 4294901760
    %v2033 = vsub.f32 %v287, %v2032
    %v2034 = vand.u32 %v2033, 4294901760
    %2035 = vmatpush1.xpose.msra.mxu0 %v2034
    %2036 = vmatprep.subr.mxu0 0.0
    %v2037 = vand.u32 %v284, 4294901760
    %v2038 = vsub.f32 %v284, %v2037
    %v2039 = vand.u32 %v2038, 4294901760
    %2040 = vmatpush1.xpose.msra.mxu0 %v2039
    %2041 = vmatprep.subr.mxu0 0.0
    %v2042 = vand.u32 %v281, 4294901760
    %v2043 = vsub.f32 %v281, %v2042
    %v2044 = vand.u32 %v2043, 4294901760
    %2045 = vmatpush1.xpose.msra.mxu0 %v2044
    %2046 = vmatprep.subr.mxu0 0.0
    %v2047 = vand.u32 %v278, 4294901760
    %v2048 = vsub.f32 %v278, %v2047
    %v2049 = vand.u32 %v2048, 4294901760
    %2050 = vmatpush1.xpose.msra.mxu0 %v2049
    %2051 = vmatprep.subr.mxu0 0.0
    %v2052 = vand.u32 %v275, 4294901760
    %v2053 = vsub.f32 %v275, %v2052
    %v2054 = vand.u32 %v2053, 4294901760
    %2055 = vmatpush1.xpose.msra.mxu0 %v2054
    %2056 = vmatprep.subr.mxu0 0.0
    %v2057 = vand.u32 %v272, 4294901760
    %v2058 = vsub.f32 %v272, %v2057
    %v2059 = vand.u32 %v2058, 4294901760
    %2060 = vmatpush1.xpose.msra.mxu0 %v2059
    %2061 = vmatprep.subr.mxu0 0.0
    %v2062 = vand.u32 %v269, 4294901760
    %v2063 = vsub.f32 %v269, %v2062
    %v2064 = vand.u32 %v2063, 4294901760
    %2065 = vmatpush1.xpose.msra.mxu0 %v2064
    %2066 = vmatprep.subr.mxu0 0.0
    %v2067 = vand.u32 %v266, 4294901760
    %v2068 = vsub.f32 %v266, %v2067
    %v2069 = vand.u32 %v2068, 4294901760
    %2070 = vmatpush1.xpose.msra.mxu0 %v2069
    %2071 = vmatprep.subr.mxu0 0.0
    %v2072 = vand.u32 %v359, 4294901760
    %v2073 = vsub.f32 %v359, %v2072
    %v2074 = vand.u32 %v2073, 4294901760
    %2075 = vmatpush2.xpose.msra.mxu0 %v2074
    %2076 = vmatprep.subr.mxu0 0.0
    %v2077 = vand.u32 %v356, 4294901760
    %v2078 = vsub.f32 %v356, %v2077
    %v2079 = vand.u32 %v2078, 4294901760
    %2080 = vmatpush2.xpose.msra.mxu0 %v2079
    %2081 = vmatprep.subr.mxu0 0.0
    %v2082 = vand.u32 %v353, 4294901760
    %v2083 = vsub.f32 %v353, %v2082
    %v2084 = vand.u32 %v2083, 4294901760
    %2085 = vmatpush2.xpose.msra.mxu0 %v2084
    %2086 = vmatprep.subr.mxu0 0.0
    %v2087 = vand.u32 %v350, 4294901760
    %v2088 = vsub.f32 %v350, %v2087
    %v2089 = vand.u32 %v2088, 4294901760
    %2090 = vmatpush2.xpose.msra.mxu0 %v2089
    %2091 = vmatprep.subr.mxu0 0.0
    %v2092 = vand.u32 %v347, 4294901760
    %v2093 = vsub.f32 %v347, %v2092
    %v2094 = vand.u32 %v2093, 4294901760
    %2095 = vmatpush2.xpose.msra.mxu0 %v2094
    %2096 = vmatprep.subr.mxu0 0.0
    %v2097 = vand.u32 %v344, 4294901760
    %v2098 = vsub.f32 %v344, %v2097
    %v2099 = vand.u32 %v2098, 4294901760
    %2100 = vmatpush2.xpose.msra.mxu0 %v2099
    %2101 = vmatprep.subr.mxu0 0.0
    %v2102 = vand.u32 %v341, 4294901760
    %v2103 = vsub.f32 %v341, %v2102
    %v2104 = vand.u32 %v2103, 4294901760
    %2105 = vmatpush2.xpose.msra.mxu0 %v2104
    %2106 = vmatprep.subr.mxu0 0.0
    %v2107 = vand.u32 %v338, 4294901760
    %v2108 = vsub.f32 %v338, %v2107
    %v2109 = vand.u32 %v2108, 4294901760
    %2110 = vmatpush2.xpose.msra.mxu0 %v2109
    %2111 = vmatprep.subr.mxu0 0.0
    %v2112 = vand.u32 %v335, 4294901760
    %v2113 = vsub.f32 %v335, %v2112
    %v2114 = vand.u32 %v2113, 4294901760
    %2115 = vmatpush2.xpose.msra.mxu0 %v2114
    %2116 = vmatprep.subr.mxu0 0.0
    %v2117 = vand.u32 %v332, 4294901760
    %v2118 = vsub.f32 %v332, %v2117
    %v2119 = vand.u32 %v2118, 4294901760
    %2120 = vmatpush2.xpose.msra.mxu0 %v2119
    %2121 = vmatprep.subr.mxu0 0.0
    %v2122 = vand.u32 %v329, 4294901760
    %v2123 = vsub.f32 %v329, %v2122
    %v2124 = vand.u32 %v2123, 4294901760
    %2125 = vmatpush2.xpose.msra.mxu0 %v2124
    %2126 = vmatprep.subr.mxu0 0.0
    %v2127 = vand.u32 %v326, 4294901760
    %v2128 = vsub.f32 %v326, %v2127
    %v2129 = vand.u32 %v2128, 4294901760
    %2130 = vmatpush2.xpose.msra.mxu0 %v2129
    %2131 = vmatprep.subr.mxu0 0.0
    %v2132 = vand.u32 %v323, 4294901760
    %v2133 = vsub.f32 %v323, %v2132
    %v2134 = vand.u32 %v2133, 4294901760
    %2135 = vmatpush2.xpose.msra.mxu0 %v2134
    %2136 = vmatprep.subr.mxu0 0.0
    %v2137 = vand.u32 %v320, 4294901760
    %v2138 = vsub.f32 %v320, %v2137
    %v2139 = vand.u32 %v2138, 4294901760
    %2140 = vmatpush2.xpose.msra.mxu0 %v2139
    %2141 = vmatprep.subr.mxu0 0.0
    %v2142 = vand.u32 %v317, 4294901760
    %v2143 = vsub.f32 %v317, %v2142
    %v2144 = vand.u32 %v2143, 4294901760
    %2145 = vmatpush2.xpose.msra.mxu0 %v2144
    %2146 = vmatprep.subr.mxu0 0.0
    %v2147 = vand.u32 %v314, 4294901760
    %v2148 = vsub.f32 %v314, %v2147
    %v2149 = vand.u32 %v2148, 4294901760
    %2150 = vmatpush2.xpose.msra.mxu0 %v2149
    %2151 = vmatprep.mubr.f32.mxu0 0.0
    %v2152 = vand.u32 %v167, 4294901760
    %2153 = vmatmul.mubr.f32.gmra.mxu0 %v2152
    %v2154 = vpop.f32.mrf.mxu0
    %v2155 = vadd.f32 %v1987, %v2154
    %v2156 = vpop.f32.mrf.mxu0
    %v2157 = vadd.f32 %v1989, %v2156
    %2158 = vdwg.mxu0
    %2159 = vmatprep.subr.mxu0 0.0
    %v2160 = vand.u32 %v311, 4294901760
    %2161 = vmatpush1.xpose.msra.mxu0 %v2160
    %2162 = vmatprep.subr.mxu0 0.0
    %v2163 = vand.u32 %v308, 4294901760
    %2164 = vmatpush1.xpose.msra.mxu0 %v2163
    %2165 = vmatprep.subr.mxu0 0.0
    %v2166 = vand.u32 %v305, 4294901760
    %2167 = vmatpush1.xpose.msra.mxu0 %v2166
    %2168 = vmatprep.subr.mxu0 0.0
    %v2169 = vand.u32 %v302, 4294901760
    %2170 = vmatpush1.xpose.msra.mxu0 %v2169
    %2171 = vmatprep.subr.mxu0 0.0
    %v2172 = vand.u32 %v299, 4294901760
    %2173 = vmatpush1.xpose.msra.mxu0 %v2172
    %2174 = vmatprep.subr.mxu0 0.0
    %v2175 = vand.u32 %v296, 4294901760
    %2176 = vmatpush1.xpose.msra.mxu0 %v2175
    %2177 = vmatprep.subr.mxu0 0.0
    %v2178 = vand.u32 %v293, 4294901760
    %2179 = vmatpush1.xpose.msra.mxu0 %v2178
    %2180 = vmatprep.subr.mxu0 0.0
    %v2181 = vand.u32 %v290, 4294901760
    %2182 = vmatpush1.xpose.msra.mxu0 %v2181
    %2183 = vmatprep.subr.mxu0 0.0
    %v2184 = vand.u32 %v287, 4294901760
    %2185 = vmatpush1.xpose.msra.mxu0 %v2184
    %2186 = vmatprep.subr.mxu0 0.0
    %v2187 = vand.u32 %v284, 4294901760
    %2188 = vmatpush1.xpose.msra.mxu0 %v2187
    %2189 = vmatprep.subr.mxu0 0.0
    %v2190 = vand.u32 %v281, 4294901760
    %2191 = vmatpush1.xpose.msra.mxu0 %v2190
    %2192 = vmatprep.subr.mxu0 0.0
    %v2193 = vand.u32 %v278, 4294901760
    %2194 = vmatpush1.xpose.msra.mxu0 %v2193
    %2195 = vmatprep.subr.mxu0 0.0
    %v2196 = vand.u32 %v275, 4294901760
    %2197 = vmatpush1.xpose.msra.mxu0 %v2196
    %2198 = vmatprep.subr.mxu0 0.0
    %v2199 = vand.u32 %v272, 4294901760
    %2200 = vmatpush1.xpose.msra.mxu0 %v2199
    %2201 = vmatprep.subr.mxu0 0.0
    %v2202 = vand.u32 %v269, 4294901760
    %2203 = vmatpush1.xpose.msra.mxu0 %v2202
    %2204 = vmatprep.subr.mxu0 0.0
    %v2205 = vand.u32 %v266, 4294901760
    %2206 = vmatpush1.xpose.msra.mxu0 %v2205
    %2207 = vmatprep.subr.mxu0 0.0
    %v2208 = vand.u32 %v359, 4294901760
    %2209 = vmatpush2.xpose.msra.mxu0 %v2208
    %2210 = vmatprep.subr.mxu0 0.0
    %v2211 = vand.u32 %v356, 4294901760
    %2212 = vmatpush2.xpose.msra.mxu0 %v2211
    %2213 = vmatprep.subr.mxu0 0.0
    %v2214 = vand.u32 %v353, 4294901760
    %2215 = vmatpush2.xpose.msra.mxu0 %v2214
    %2216 = vmatprep.subr.mxu0 0.0
    %v2217 = vand.u32 %v350, 4294901760
    %2218 = vmatpush2.xpose.msra.mxu0 %v2217
    %2219 = vmatprep.subr.mxu0 0.0
    %v2220 = vand.u32 %v347, 4294901760
    %2221 = vmatpush2.xpose.msra.mxu0 %v2220
    %2222 = vmatprep.subr.mxu0 0.0
    %v2223 = vand.u32 %v344, 4294901760
    %2224 = vmatpush2.xpose.msra.mxu0 %v2223
    %2225 = vmatprep.subr.mxu0 0.0
    %v2226 = vand.u32 %v341, 4294901760
    %2227 = vmatpush2.xpose.msra.mxu0 %v2226
    %2228 = vmatprep.subr.mxu0 0.0
    %v2229 = vand.u32 %v338, 4294901760
    %2230 = vmatpush2.xpose.msra.mxu0 %v2229
    %2231 = vmatprep.subr.mxu0 0.0
    %v2232 = vand.u32 %v335, 4294901760
    %2233 = vmatpush2.xpose.msra.mxu0 %v2232
    %2234 = vmatprep.subr.mxu0 0.0
    %v2235 = vand.u32 %v332, 4294901760
    %2236 = vmatpush2.xpose.msra.mxu0 %v2235
    %2237 = vmatprep.subr.mxu0 0.0
    %v2238 = vand.u32 %v329, 4294901760
    %2239 = vmatpush2.xpose.msra.mxu0 %v2238
    %2240 = vmatprep.subr.mxu0 0.0
    %v2241 = vand.u32 %v326, 4294901760
    %2242 = vmatpush2.xpose.msra.mxu0 %v2241
    %2243 = vmatprep.subr.mxu0 0.0
    %v2244 = vand.u32 %v323, 4294901760
    %2245 = vmatpush2.xpose.msra.mxu0 %v2244
    %2246 = vmatprep.subr.mxu0 0.0
    %v2247 = vand.u32 %v320, 4294901760
    %2248 = vmatpush2.xpose.msra.mxu0 %v2247
    %2249 = vmatprep.subr.mxu0 0.0
    %v2250 = vand.u32 %v317, 4294901760
    %2251 = vmatpush2.xpose.msra.mxu0 %v2250
    %2252 = vmatprep.subr.mxu0 0.0
    %v2253 = vand.u32 %v314, 4294901760
    %2254 = vmatpush2.xpose.msra.mxu0 %v2253
    %2255 = vmatprep.mubr.f32.mxu0 0.0
    %v2256 = vand.u32 %v167, 4294901760
    %2257 = vmatmul.mubr.f32.gmra.mxu0 %v2256
    %v2258 = vpop.f32.mrf.mxu0
    %v2259 = vadd.f32 %v2155, %v2258
    %v2260 = vpop.f32.mrf.mxu0
    %v2261 = vadd.f32 %v2157, %v2260
    %2262 = vdwg.mxu0
    %2263 = vmatprep.subr.mxu0 0.0
    %v2264 = vand.u32 %v407, 4294901760
    %2265 = vmatpush1.xpose.msra.mxu0 %v2264
    %2266 = vmatprep.subr.mxu0 0.0
    %v2267 = vand.u32 %v404, 4294901760
    %2268 = vmatpush1.xpose.msra.mxu0 %v2267
    %2269 = vmatprep.subr.mxu0 0.0
    %v2270 = vand.u32 %v401, 4294901760
    %2271 = vmatpush1.xpose.msra.mxu0 %v2270
    %2272 = vmatprep.subr.mxu0 0.0
    %v2273 = vand.u32 %v398, 4294901760
    %2274 = vmatpush1.xpose.msra.mxu0 %v2273
    %2275 = vmatprep.subr.mxu0 0.0
    %v2276 = vand.u32 %v395, 4294901760
    %2277 = vmatpush1.xpose.msra.mxu0 %v2276
    %2278 = vmatprep.subr.mxu0 0.0
    %v2279 = vand.u32 %v392, 4294901760
    %2280 = vmatpush1.xpose.msra.mxu0 %v2279
    %2281 = vmatprep.subr.mxu0 0.0
    %v2282 = vand.u32 %v389, 4294901760
    %2283 = vmatpush1.xpose.msra.mxu0 %v2282
    %2284 = vmatprep.subr.mxu0 0.0
    %v2285 = vand.u32 %v386, 4294901760
    %2286 = vmatpush1.xpose.msra.mxu0 %v2285
    %2287 = vmatprep.subr.mxu0 0.0
    %v2288 = vand.u32 %v383, 4294901760
    %2289 = vmatpush1.xpose.msra.mxu0 %v2288
    %2290 = vmatprep.subr.mxu0 0.0
    %v2291 = vand.u32 %v380, 4294901760
    %2292 = vmatpush1.xpose.msra.mxu0 %v2291
    %2293 = vmatprep.subr.mxu0 0.0
    %v2294 = vand.u32 %v377, 4294901760
    %2295 = vmatpush1.xpose.msra.mxu0 %v2294
    %2296 = vmatprep.subr.mxu0 0.0
    %v2297 = vand.u32 %v374, 4294901760
    %2298 = vmatpush1.xpose.msra.mxu0 %v2297
    %2299 = vmatprep.subr.mxu0 0.0
    %v2300 = vand.u32 %v371, 4294901760
    %2301 = vmatpush1.xpose.msra.mxu0 %v2300
    %2302 = vmatprep.subr.mxu0 0.0
    %v2303 = vand.u32 %v368, 4294901760
    %2304 = vmatpush1.xpose.msra.mxu0 %v2303
    %2305 = vmatprep.subr.mxu0 0.0
    %v2306 = vand.u32 %v365, 4294901760
    %2307 = vmatpush1.xpose.msra.mxu0 %v2306
    %2308 = vmatprep.subr.mxu0 0.0
    %v2309 = vand.u32 %v362, 4294901760
    %2310 = vmatpush1.xpose.msra.mxu0 %v2309
    %2311 = vmatprep.subr.mxu0 0.0
    %v2312 = vand.u32 %v455, 4294901760
    %2313 = vmatpush2.xpose.msra.mxu0 %v2312
    %2314 = vmatprep.subr.mxu0 0.0
    %v2315 = vand.u32 %v452, 4294901760
    %2316 = vmatpush2.xpose.msra.mxu0 %v2315
    %2317 = vmatprep.subr.mxu0 0.0
    %v2318 = vand.u32 %v449, 4294901760
    %2319 = vmatpush2.xpose.msra.mxu0 %v2318
    %2320 = vmatprep.subr.mxu0 0.0
    %v2321 = vand.u32 %v446, 4294901760
    %2322 = vmatpush2.xpose.msra.mxu0 %v2321
    %2323 = vmatprep.subr.mxu0 0.0
    %v2324 = vand.u32 %v443, 4294901760
    %2325 = vmatpush2.xpose.msra.mxu0 %v2324
    %2326 = vmatprep.subr.mxu0 0.0
    %v2327 = vand.u32 %v440, 4294901760
    %2328 = vmatpush2.xpose.msra.mxu0 %v2327
    %2329 = vmatprep.subr.mxu0 0.0
    %v2330 = vand.u32 %v437, 4294901760
    %2331 = vmatpush2.xpose.msra.mxu0 %v2330
    %2332 = vmatprep.subr.mxu0 0.0
    %v2333 = vand.u32 %v434, 4294901760
    %2334 = vmatpush2.xpose.msra.mxu0 %v2333
    %2335 = vmatprep.subr.mxu0 0.0
    %v2336 = vand.u32 %v431, 4294901760
    %2337 = vmatpush2.xpose.msra.mxu0 %v2336
    %2338 = vmatprep.subr.mxu0 0.0
    %v2339 = vand.u32 %v428, 4294901760
    %2340 = vmatpush2.xpose.msra.mxu0 %v2339
    %2341 = vmatprep.subr.mxu0 0.0
    %v2342 = vand.u32 %v425, 4294901760
    %2343 = vmatpush2.xpose.msra.mxu0 %v2342
    %2344 = vmatprep.subr.mxu0 0.0
    %v2345 = vand.u32 %v422, 4294901760
    %2346 = vmatpush2.xpose.msra.mxu0 %v2345
    %2347 = vmatprep.subr.mxu0 0.0
    %v2348 = vand.u32 %v419, 4294901760
    %2349 = vmatpush2.xpose.msra.mxu0 %v2348
    %2350 = vmatprep.subr.mxu0 0.0
    %v2351 = vand.u32 %v416, 4294901760
    %2352 = vmatpush2.xpose.msra.mxu0 %v2351
    %2353 = vmatprep.subr.mxu0 0.0
    %v2354 = vand.u32 %v413, 4294901760
    %2355 = vmatpush2.xpose.msra.mxu0 %v2354
    %2356 = vmatprep.subr.mxu0 0.0
    %v2357 = vand.u32 %v410, 4294901760
    %2358 = vmatpush2.xpose.msra.mxu0 %v2357
    %2359 = vmatprep.mubr.f32.mxu0 0.0
    %v2360 = vand.u32 %v167, 4294901760
    %v2361 = vsub.f32 %v167, %v2360
    %v2362 = vand.u32 %v2361, 4294901760
    %v2363 = vsub.f32 %v2361, %v2362
    %v2364 = vand.u32 %v2363, 4294901760
    %2365 = vmatmul.mubr.f32.gmra.mxu0 %v2364
    %v2366 = vpop.f32.mrf.mxu0
    %v2367 = vadd.f32 0.0, %v2366
    %v2368 = vpop.f32.mrf.mxu0
    %v2369 = vadd.f32 0.0, %v2368
    %2370 = vdwg.mxu0
    %2371 = vmatprep.subr.mxu0 0.0
    %v2372 = vand.u32 %v407, 4294901760
    %v2373 = vsub.f32 %v407, %v2372
    %v2374 = vand.u32 %v2373, 4294901760
    %v2375 = vsub.f32 %v2373, %v2374
    %v2376 = vand.u32 %v2375, 4294901760
    %2377 = vmatpush1.xpose.msra.mxu0 %v2376
    %2378 = vmatprep.subr.mxu0 0.0
    %v2379 = vand.u32 %v404, 4294901760
    %v2380 = vsub.f32 %v404, %v2379
    %v2381 = vand.u32 %v2380, 4294901760
    %v2382 = vsub.f32 %v2380, %v2381
    %v2383 = vand.u32 %v2382, 4294901760
    %2384 = vmatpush1.xpose.msra.mxu0 %v2383
    %2385 = vmatprep.subr.mxu0 0.0
    %v2386 = vand.u32 %v401, 4294901760
    %v2387 = vsub.f32 %v401, %v2386
    %v2388 = vand.u32 %v2387, 4294901760
    %v2389 = vsub.f32 %v2387, %v2388
    %v2390 = vand.u32 %v2389, 4294901760
    %2391 = vmatpush1.xpose.msra.mxu0 %v2390
    %2392 = vmatprep.subr.mxu0 0.0
    %v2393 = vand.u32 %v398, 4294901760
    %v2394 = vsub.f32 %v398, %v2393
    %v2395 = vand.u32 %v2394, 4294901760
    %v2396 = vsub.f32 %v2394, %v2395
    %v2397 = vand.u32 %v2396, 4294901760
    %2398 = vmatpush1.xpose.msra.mxu0 %v2397
    %2399 = vmatprep.subr.mxu0 0.0
    %v2400 = vand.u32 %v395, 4294901760
    %v2401 = vsub.f32 %v395, %v2400
    %v2402 = vand.u32 %v2401, 4294901760
    %v2403 = vsub.f32 %v2401, %v2402
    %v2404 = vand.u32 %v2403, 4294901760
    %2405 = vmatpush1.xpose.msra.mxu0 %v2404
    %2406 = vmatprep.subr.mxu0 0.0
    %v2407 = vand.u32 %v392, 4294901760
    %v2408 = vsub.f32 %v392, %v2407
    %v2409 = vand.u32 %v2408, 4294901760
    %v2410 = vsub.f32 %v2408, %v2409
    %v2411 = vand.u32 %v2410, 4294901760
    %2412 = vmatpush1.xpose.msra.mxu0 %v2411
    %2413 = vmatprep.subr.mxu0 0.0
    %v2414 = vand.u32 %v389, 4294901760
    %v2415 = vsub.f32 %v389, %v2414
    %v2416 = vand.u32 %v2415, 4294901760
    %v2417 = vsub.f32 %v2415, %v2416
    %v2418 = vand.u32 %v2417, 4294901760
    %2419 = vmatpush1.xpose.msra.mxu0 %v2418
    %2420 = vmatprep.subr.mxu0 0.0
    %v2421 = vand.u32 %v386, 4294901760
    %v2422 = vsub.f32 %v386, %v2421
    %v2423 = vand.u32 %v2422, 4294901760
    %v2424 = vsub.f32 %v2422, %v2423
    %v2425 = vand.u32 %v2424, 4294901760
    %2426 = vmatpush1.xpose.msra.mxu0 %v2425
    %2427 = vmatprep.subr.mxu0 0.0
    %v2428 = vand.u32 %v383, 4294901760
    %v2429 = vsub.f32 %v383, %v2428
    %v2430 = vand.u32 %v2429, 4294901760
    %v2431 = vsub.f32 %v2429, %v2430
    %v2432 = vand.u32 %v2431, 4294901760
    %2433 = vmatpush1.xpose.msra.mxu0 %v2432
    %2434 = vmatprep.subr.mxu0 0.0
    %v2435 = vand.u32 %v380, 4294901760
    %v2436 = vsub.f32 %v380, %v2435
    %v2437 = vand.u32 %v2436, 4294901760
    %v2438 = vsub.f32 %v2436, %v2437
    %v2439 = vand.u32 %v2438, 4294901760
    %2440 = vmatpush1.xpose.msra.mxu0 %v2439
    %2441 = vmatprep.subr.mxu0 0.0
    %v2442 = vand.u32 %v377, 4294901760
    %v2443 = vsub.f32 %v377, %v2442
    %v2444 = vand.u32 %v2443, 4294901760
    %v2445 = vsub.f32 %v2443, %v2444
    %v2446 = vand.u32 %v2445, 4294901760
    %2447 = vmatpush1.xpose.msra.mxu0 %v2446
    %2448 = vmatprep.subr.mxu0 0.0
    %v2449 = vand.u32 %v374, 4294901760
    %v2450 = vsub.f32 %v374, %v2449
    %v2451 = vand.u32 %v2450, 4294901760
    %v2452 = vsub.f32 %v2450, %v2451
    %v2453 = vand.u32 %v2452, 4294901760
    %2454 = vmatpush1.xpose.msra.mxu0 %v2453
    %2455 = vmatprep.subr.mxu0 0.0
    %v2456 = vand.u32 %v371, 4294901760
    %v2457 = vsub.f32 %v371, %v2456
    %v2458 = vand.u32 %v2457, 4294901760
    %v2459 = vsub.f32 %v2457, %v2458
    %v2460 = vand.u32 %v2459, 4294901760
    %2461 = vmatpush1.xpose.msra.mxu0 %v2460
    %2462 = vmatprep.subr.mxu0 0.0
    %v2463 = vand.u32 %v368, 4294901760
    %v2464 = vsub.f32 %v368, %v2463
    %v2465 = vand.u32 %v2464, 4294901760
    %v2466 = vsub.f32 %v2464, %v2465
    %v2467 = vand.u32 %v2466, 4294901760
    %2468 = vmatpush1.xpose.msra.mxu0 %v2467
    %2469 = vmatprep.subr.mxu0 0.0
    %v2470 = vand.u32 %v365, 4294901760
    %v2471 = vsub.f32 %v365, %v2470
    %v2472 = vand.u32 %v2471, 4294901760
    %v2473 = vsub.f32 %v2471, %v2472
    %v2474 = vand.u32 %v2473, 4294901760
    %2475 = vmatpush1.xpose.msra.mxu0 %v2474
    %2476 = vmatprep.subr.mxu0 0.0
    %v2477 = vand.u32 %v362, 4294901760
    %v2478 = vsub.f32 %v362, %v2477
    %v2479 = vand.u32 %v2478, 4294901760
    %v2480 = vsub.f32 %v2478, %v2479
    %v2481 = vand.u32 %v2480, 4294901760
    %2482 = vmatpush1.xpose.msra.mxu0 %v2481
    %2483 = vmatprep.subr.mxu0 0.0
    %v2484 = vand.u32 %v455, 4294901760
    %v2485 = vsub.f32 %v455, %v2484
    %v2486 = vand.u32 %v2485, 4294901760
    %v2487 = vsub.f32 %v2485, %v2486
    %v2488 = vand.u32 %v2487, 4294901760
    %2489 = vmatpush2.xpose.msra.mxu0 %v2488
    %2490 = vmatprep.subr.mxu0 0.0
    %v2491 = vand.u32 %v452, 4294901760
    %v2492 = vsub.f32 %v452, %v2491
    %v2493 = vand.u32 %v2492, 4294901760
    %v2494 = vsub.f32 %v2492, %v2493
    %v2495 = vand.u32 %v2494, 4294901760
    %2496 = vmatpush2.xpose.msra.mxu0 %v2495
    %2497 = vmatprep.subr.mxu0 0.0
    %v2498 = vand.u32 %v449, 4294901760
    %v2499 = vsub.f32 %v449, %v2498
    %v2500 = vand.u32 %v2499, 4294901760
    %v2501 = vsub.f32 %v2499, %v2500
    %v2502 = vand.u32 %v2501, 4294901760
    %2503 = vmatpush2.xpose.msra.mxu0 %v2502
    %2504 = vmatprep.subr.mxu0 0.0
    %v2505 = vand.u32 %v446, 4294901760
    %v2506 = vsub.f32 %v446, %v2505
    %v2507 = vand.u32 %v2506, 4294901760
    %v2508 = vsub.f32 %v2506, %v2507
    %v2509 = vand.u32 %v2508, 4294901760
    %2510 = vmatpush2.xpose.msra.mxu0 %v2509
    %2511 = vmatprep.subr.mxu0 0.0
    %v2512 = vand.u32 %v443, 4294901760
    %v2513 = vsub.f32 %v443, %v2512
    %v2514 = vand.u32 %v2513, 4294901760
    %v2515 = vsub.f32 %v2513, %v2514
    %v2516 = vand.u32 %v2515, 4294901760
    %2517 = vmatpush2.xpose.msra.mxu0 %v2516
    %2518 = vmatprep.subr.mxu0 0.0
    %v2519 = vand.u32 %v440, 4294901760
    %v2520 = vsub.f32 %v440, %v2519
    %v2521 = vand.u32 %v2520, 4294901760
    %v2522 = vsub.f32 %v2520, %v2521
    %v2523 = vand.u32 %v2522, 4294901760
    %2524 = vmatpush2.xpose.msra.mxu0 %v2523
    %2525 = vmatprep.subr.mxu0 0.0
    %v2526 = vand.u32 %v437, 4294901760
    %v2527 = vsub.f32 %v437, %v2526
    %v2528 = vand.u32 %v2527, 4294901760
    %v2529 = vsub.f32 %v2527, %v2528
    %v2530 = vand.u32 %v2529, 4294901760
    %2531 = vmatpush2.xpose.msra.mxu0 %v2530
    %2532 = vmatprep.subr.mxu0 0.0
    %v2533 = vand.u32 %v434, 4294901760
    %v2534 = vsub.f32 %v434, %v2533
    %v2535 = vand.u32 %v2534, 4294901760
    %v2536 = vsub.f32 %v2534, %v2535
    %v2537 = vand.u32 %v2536, 4294901760
    %2538 = vmatpush2.xpose.msra.mxu0 %v2537
    %2539 = vmatprep.subr.mxu0 0.0
    %v2540 = vand.u32 %v431, 4294901760
    %v2541 = vsub.f32 %v431, %v2540
    %v2542 = vand.u32 %v2541, 4294901760
    %v2543 = vsub.f32 %v2541, %v2542
    %v2544 = vand.u32 %v2543, 4294901760
    %2545 = vmatpush2.xpose.msra.mxu0 %v2544
    %2546 = vmatprep.subr.mxu0 0.0
    %v2547 = vand.u32 %v428, 4294901760
    %v2548 = vsub.f32 %v428, %v2547
    %v2549 = vand.u32 %v2548, 4294901760
    %v2550 = vsub.f32 %v2548, %v2549
    %v2551 = vand.u32 %v2550, 4294901760
    %2552 = vmatpush2.xpose.msra.mxu0 %v2551
    %2553 = vmatprep.subr.mxu0 0.0
    %v2554 = vand.u32 %v425, 4294901760
    %v2555 = vsub.f32 %v425, %v2554
    %v2556 = vand.u32 %v2555, 4294901760
    %v2557 = vsub.f32 %v2555, %v2556
    %v2558 = vand.u32 %v2557, 4294901760
    %2559 = vmatpush2.xpose.msra.mxu0 %v2558
    %2560 = vmatprep.subr.mxu0 0.0
    %v2561 = vand.u32 %v422, 4294901760
    %v2562 = vsub.f32 %v422, %v2561
    %v2563 = vand.u32 %v2562, 4294901760
    %v2564 = vsub.f32 %v2562, %v2563
    %v2565 = vand.u32 %v2564, 4294901760
    %2566 = vmatpush2.xpose.msra.mxu0 %v2565
    %2567 = vmatprep.subr.mxu0 0.0
    %v2568 = vand.u32 %v419, 4294901760
    %v2569 = vsub.f32 %v419, %v2568
    %v2570 = vand.u32 %v2569, 4294901760
    %v2571 = vsub.f32 %v2569, %v2570
    %v2572 = vand.u32 %v2571, 4294901760
    %2573 = vmatpush2.xpose.msra.mxu0 %v2572
    %2574 = vmatprep.subr.mxu0 0.0
    %v2575 = vand.u32 %v416, 4294901760
    %v2576 = vsub.f32 %v416, %v2575
    %v2577 = vand.u32 %v2576, 4294901760
    %v2578 = vsub.f32 %v2576, %v2577
    %v2579 = vand.u32 %v2578, 4294901760
    %2580 = vmatpush2.xpose.msra.mxu0 %v2579
    %2581 = vmatprep.subr.mxu0 0.0
    %v2582 = vand.u32 %v413, 4294901760
    %v2583 = vsub.f32 %v413, %v2582
    %v2584 = vand.u32 %v2583, 4294901760
    %v2585 = vsub.f32 %v2583, %v2584
    %v2586 = vand.u32 %v2585, 4294901760
    %2587 = vmatpush2.xpose.msra.mxu0 %v2586
    %2588 = vmatprep.subr.mxu0 0.0
    %v2589 = vand.u32 %v410, 4294901760
    %v2590 = vsub.f32 %v410, %v2589
    %v2591 = vand.u32 %v2590, 4294901760
    %v2592 = vsub.f32 %v2590, %v2591
    %v2593 = vand.u32 %v2592, 4294901760
    %2594 = vmatpush2.xpose.msra.mxu0 %v2593
    %2595 = vmatprep.mubr.f32.mxu0 0.0
    %v2596 = vand.u32 %v167, 4294901760
    %2597 = vmatmul.mubr.f32.gmra.mxu0 %v2596
    %v2598 = vpop.f32.mrf.mxu0
    %v2599 = vadd.f32 %v2367, %v2598
    %v2600 = vpop.f32.mrf.mxu0
    %v2601 = vadd.f32 %v2369, %v2600
    %2602 = vdwg.mxu0
    %2603 = vmatprep.subr.mxu0 0.0
    %v2604 = vand.u32 %v407, 4294901760
    %v2605 = vsub.f32 %v407, %v2604
    %2606 = vmatpush1.xpose.msra.mxu0 %v2605
    %2607 = vmatprep.subr.mxu0 0.0
    %v2608 = vand.u32 %v404, 4294901760
    %v2609 = vsub.f32 %v404, %v2608
    %2610 = vmatpush1.xpose.msra.mxu0 %v2609
    %2611 = vmatprep.subr.mxu0 0.0
    %v2612 = vand.u32 %v401, 4294901760
    %v2613 = vsub.f32 %v401, %v2612
    %2614 = vmatpush1.xpose.msra.mxu0 %v2613
    %2615 = vmatprep.subr.mxu0 0.0
    %v2616 = vand.u32 %v398, 4294901760
    %v2617 = vsub.f32 %v398, %v2616
    %2618 = vmatpush1.xpose.msra.mxu0 %v2617
    %2619 = vmatprep.subr.mxu0 0.0
    %v2620 = vand.u32 %v395, 4294901760
    %v2621 = vsub.f32 %v395, %v2620
    %2622 = vmatpush1.xpose.msra.mxu0 %v2621
    %2623 = vmatprep.subr.mxu0 0.0
    %v2624 = vand.u32 %v392, 4294901760
    %v2625 = vsub.f32 %v392, %v2624
    %2626 = vmatpush1.xpose.msra.mxu0 %v2625
    %2627 = vmatprep.subr.mxu0 0.0
    %v2628 = vand.u32 %v389, 4294901760
    %v2629 = vsub.f32 %v389, %v2628
    %2630 = vmatpush1.xpose.msra.mxu0 %v2629
    %2631 = vmatprep.subr.mxu0 0.0
    %v2632 = vand.u32 %v386, 4294901760
    %v2633 = vsub.f32 %v386, %v2632
    %2634 = vmatpush1.xpose.msra.mxu0 %v2633
    %2635 = vmatprep.subr.mxu0 0.0
    %v2636 = vand.u32 %v383, 4294901760
    %v2637 = vsub.f32 %v383, %v2636
    %2638 = vmatpush1.xpose.msra.mxu0 %v2637
    %2639 = vmatprep.subr.mxu0 0.0
    %v2640 = vand.u32 %v380, 4294901760
    %v2641 = vsub.f32 %v380, %v2640
    %2642 = vmatpush1.xpose.msra.mxu0 %v2641
    %2643 = vmatprep.subr.mxu0 0.0
    %v2644 = vand.u32 %v377, 4294901760
    %v2645 = vsub.f32 %v377, %v2644
    %2646 = vmatpush1.xpose.msra.mxu0 %v2645
    %2647 = vmatprep.subr.mxu0 0.0
    %v2648 = vand.u32 %v374, 4294901760
    %v2649 = vsub.f32 %v374, %v2648
    %2650 = vmatpush1.xpose.msra.mxu0 %v2649
    %2651 = vmatprep.subr.mxu0 0.0
    %v2652 = vand.u32 %v371, 4294901760
    %v2653 = vsub.f32 %v371, %v2652
    %2654 = vmatpush1.xpose.msra.mxu0 %v2653
    %2655 = vmatprep.subr.mxu0 0.0
    %v2656 = vand.u32 %v368, 4294901760
    %v2657 = vsub.f32 %v368, %v2656
    %2658 = vmatpush1.xpose.msra.mxu0 %v2657
    %2659 = vmatprep.subr.mxu0 0.0
    %v2660 = vand.u32 %v365, 4294901760
    %v2661 = vsub.f32 %v365, %v2660
    %2662 = vmatpush1.xpose.msra.mxu0 %v2661
    %2663 = vmatprep.subr.mxu0 0.0
    %v2664 = vand.u32 %v362, 4294901760
    %v2665 = vsub.f32 %v362, %v2664
    %2666 = vmatpush1.xpose.msra.mxu0 %v2665
    %2667 = vmatprep.subr.mxu0 0.0
    %v2668 = vand.u32 %v455, 4294901760
    %v2669 = vsub.f32 %v455, %v2668
    %2670 = vmatpush2.xpose.msra.mxu0 %v2669
    %2671 = vmatprep.subr.mxu0 0.0
    %v2672 = vand.u32 %v452, 4294901760
    %v2673 = vsub.f32 %v452, %v2672
    %2674 = vmatpush2.xpose.msra.mxu0 %v2673
    %2675 = vmatprep.subr.mxu0 0.0
    %v2676 = vand.u32 %v449, 4294901760
    %v2677 = vsub.f32 %v449, %v2676
    %2678 = vmatpush2.xpose.msra.mxu0 %v2677
    %2679 = vmatprep.subr.mxu0 0.0
    %v2680 = vand.u32 %v446, 4294901760
    %v2681 = vsub.f32 %v446, %v2680
    %2682 = vmatpush2.xpose.msra.mxu0 %v2681
    %2683 = vmatprep.subr.mxu0 0.0
    %v2684 = vand.u32 %v443, 4294901760
    %v2685 = vsub.f32 %v443, %v2684
    %2686 = vmatpush2.xpose.msra.mxu0 %v2685
    %2687 = vmatprep.subr.mxu0 0.0
    %v2688 = vand.u32 %v440, 4294901760
    %v2689 = vsub.f32 %v440, %v2688
    %2690 = vmatpush2.xpose.msra.mxu0 %v2689
    %2691 = vmatprep.subr.mxu0 0.0
    %v2692 = vand.u32 %v437, 4294901760
    %v2693 = vsub.f32 %v437, %v2692
    %2694 = vmatpush2.xpose.msra.mxu0 %v2693
    %2695 = vmatprep.subr.mxu0 0.0
    %v2696 = vand.u32 %v434, 4294901760
    %v2697 = vsub.f32 %v434, %v2696
    %2698 = vmatpush2.xpose.msra.mxu0 %v2697
    %2699 = vmatprep.subr.mxu0 0.0
    %v2700 = vand.u32 %v431, 4294901760
    %v2701 = vsub.f32 %v431, %v2700
    %2702 = vmatpush2.xpose.msra.mxu0 %v2701
    %2703 = vmatprep.subr.mxu0 0.0
    %v2704 = vand.u32 %v428, 4294901760
    %v2705 = vsub.f32 %v428, %v2704
    %2706 = vmatpush2.xpose.msra.mxu0 %v2705
    %2707 = vmatprep.subr.mxu0 0.0
    %v2708 = vand.u32 %v425, 4294901760
    %v2709 = vsub.f32 %v425, %v2708
    %2710 = vmatpush2.xpose.msra.mxu0 %v2709
    %2711 = vmatprep.subr.mxu0 0.0
    %v2712 = vand.u32 %v422, 4294901760
    %v2713 = vsub.f32 %v422, %v2712
    %2714 = vmatpush2.xpose.msra.mxu0 %v2713
    %2715 = vmatprep.subr.mxu0 0.0
    %v2716 = vand.u32 %v419, 4294901760
    %v2717 = vsub.f32 %v419, %v2716
    %2718 = vmatpush2.xpose.msra.mxu0 %v2717
    %2719 = vmatprep.subr.mxu0 0.0
    %v2720 = vand.u32 %v416, 4294901760
    %v2721 = vsub.f32 %v416, %v2720
    %2722 = vmatpush2.xpose.msra.mxu0 %v2721
    %2723 = vmatprep.subr.mxu0 0.0
    %v2724 = vand.u32 %v413, 4294901760
    %v2725 = vsub.f32 %v413, %v2724
    %2726 = vmatpush2.xpose.msra.mxu0 %v2725
    %2727 = vmatprep.subr.mxu0 0.0
    %v2728 = vand.u32 %v410, 4294901760
    %v2729 = vsub.f32 %v410, %v2728
    %2730 = vmatpush2.xpose.msra.mxu0 %v2729
    %2731 = vmatprep.mubr.f32.mxu0 0.0
    %v2732 = vand.u32 %v167, 4294901760
    %v2733 = vsub.f32 %v167, %v2732
    %2734 = vmatmul.mubr.f32.gmra.mxu0 %v2733
    %v2735 = vpop.f32.mrf.mxu0
    %v2736 = vadd.f32 %v2599, %v2735
    %v2737 = vpop.f32.mrf.mxu0
    %v2738 = vadd.f32 %v2601, %v2737
    %2739 = vdwg.mxu0
    %2740 = vmatprep.subr.mxu0 0.0
    %v2741 = vand.u32 %v407, 4294901760
    %2742 = vmatpush1.xpose.msra.mxu0 %v2741
    %2743 = vmatprep.subr.mxu0 0.0
    %v2744 = vand.u32 %v404, 4294901760
    %2745 = vmatpush1.xpose.msra.mxu0 %v2744
    %2746 = vmatprep.subr.mxu0 0.0
    %v2747 = vand.u32 %v401, 4294901760
    %2748 = vmatpush1.xpose.msra.mxu0 %v2747
    %2749 = vmatprep.subr.mxu0 0.0
    %v2750 = vand.u32 %v398, 4294901760
    %2751 = vmatpush1.xpose.msra.mxu0 %v2750
    %2752 = vmatprep.subr.mxu0 0.0
    %v2753 = vand.u32 %v395, 4294901760
    %2754 = vmatpush1.xpose.msra.mxu0 %v2753
    %2755 = vmatprep.subr.mxu0 0.0
    %v2756 = vand.u32 %v392, 4294901760
    %2757 = vmatpush1.xpose.msra.mxu0 %v2756
    %2758 = vmatprep.subr.mxu0 0.0
    %v2759 = vand.u32 %v389, 4294901760
    %2760 = vmatpush1.xpose.msra.mxu0 %v2759
    %2761 = vmatprep.subr.mxu0 0.0
    %v2762 = vand.u32 %v386, 4294901760
    %2763 = vmatpush1.xpose.msra.mxu0 %v2762
    %2764 = vmatprep.subr.mxu0 0.0
    %v2765 = vand.u32 %v383, 4294901760
    %2766 = vmatpush1.xpose.msra.mxu0 %v2765
    %2767 = vmatprep.subr.mxu0 0.0
    %v2768 = vand.u32 %v380, 4294901760
    %2769 = vmatpush1.xpose.msra.mxu0 %v2768
    %2770 = vmatprep.subr.mxu0 0.0
    %v2771 = vand.u32 %v377, 4294901760
    %2772 = vmatpush1.xpose.msra.mxu0 %v2771
    %2773 = vmatprep.subr.mxu0 0.0
    %v2774 = vand.u32 %v374, 4294901760
    %2775 = vmatpush1.xpose.msra.mxu0 %v2774
    %2776 = vmatprep.subr.mxu0 0.0
    %v2777 = vand.u32 %v371, 4294901760
    %2778 = vmatpush1.xpose.msra.mxu0 %v2777
    %2779 = vmatprep.subr.mxu0 0.0
    %v2780 = vand.u32 %v368, 4294901760
    %2781 = vmatpush1.xpose.msra.mxu0 %v2780
    %2782 = vmatprep.subr.mxu0 0.0
    %v2783 = vand.u32 %v365, 4294901760
    %2784 = vmatpush1.xpose.msra.mxu0 %v2783
    %2785 = vmatprep.subr.mxu0 0.0
    %v2786 = vand.u32 %v362, 4294901760
    %2787 = vmatpush1.xpose.msra.mxu0 %v2786
    %2788 = vmatprep.subr.mxu0 0.0
    %v2789 = vand.u32 %v455, 4294901760
    %2790 = vmatpush2.xpose.msra.mxu0 %v2789
    %2791 = vmatprep.subr.mxu0 0.0
    %v2792 = vand.u32 %v452, 4294901760
    %2793 = vmatpush2.xpose.msra.mxu0 %v2792
    %2794 = vmatprep.subr.mxu0 0.0
    %v2795 = vand.u32 %v449, 4294901760
    %2796 = vmatpush2.xpose.msra.mxu0 %v2795
    %2797 = vmatprep.subr.mxu0 0.0
    %v2798 = vand.u32 %v446, 4294901760
    %2799 = vmatpush2.xpose.msra.mxu0 %v2798
    %2800 = vmatprep.subr.mxu0 0.0
    %v2801 = vand.u32 %v443, 4294901760
    %2802 = vmatpush2.xpose.msra.mxu0 %v2801
    %2803 = vmatprep.subr.mxu0 0.0
    %v2804 = vand.u32 %v440, 4294901760
    %2805 = vmatpush2.xpose.msra.mxu0 %v2804
    %2806 = vmatprep.subr.mxu0 0.0
    %v2807 = vand.u32 %v437, 4294901760
    %2808 = vmatpush2.xpose.msra.mxu0 %v2807
    %2809 = vmatprep.subr.mxu0 0.0
    %v2810 = vand.u32 %v434, 4294901760
    %2811 = vmatpush2.xpose.msra.mxu0 %v2810
    %2812 = vmatprep.subr.mxu0 0.0
    %v2813 = vand.u32 %v431, 4294901760
    %2814 = vmatpush2.xpose.msra.mxu0 %v2813
    %2815 = vmatprep.subr.mxu0 0.0
    %v2816 = vand.u32 %v428, 4294901760
    %2817 = vmatpush2.xpose.msra.mxu0 %v2816
    %2818 = vmatprep.subr.mxu0 0.0
    %v2819 = vand.u32 %v425, 4294901760
    %2820 = vmatpush2.xpose.msra.mxu0 %v2819
    %2821 = vmatprep.subr.mxu0 0.0
    %v2822 = vand.u32 %v422, 4294901760
    %2823 = vmatpush2.xpose.msra.mxu0 %v2822
    %2824 = vmatprep.subr.mxu0 0.0
    %v2825 = vand.u32 %v419, 4294901760
    %2826 = vmatpush2.xpose.msra.mxu0 %v2825
    %2827 = vmatprep.subr.mxu0 0.0
    %v2828 = vand.u32 %v416, 4294901760
    %2829 = vmatpush2.xpose.msra.mxu0 %v2828
    %2830 = vmatprep.subr.mxu0 0.0
    %v2831 = vand.u32 %v413, 4294901760
    %2832 = vmatpush2.xpose.msra.mxu0 %v2831
    %2833 = vmatprep.subr.mxu0 0.0
    %v2834 = vand.u32 %v410, 4294901760
    %2835 = vmatpush2.xpose.msra.mxu0 %v2834
    %2836 = vmatprep.mubr.f32.mxu0 0.0
    %v2837 = vand.u32 %v167, 4294901760
    %v2838 = vsub.f32 %v167, %v2837
    %v2839 = vand.u32 %v2838, 4294901760
    %2840 = vmatmul.mubr.f32.gmra.mxu0 %v2839
    %v2841 = vpop.f32.mrf.mxu0
    %v2842 = vadd.f32 %v2736, %v2841
    %v2843 = vpop.f32.mrf.mxu0
    %v2844 = vadd.f32 %v2738, %v2843
    %2845 = vdwg.mxu0
    %2846 = vmatprep.subr.mxu0 0.0
    %v2847 = vand.u32 %v407, 4294901760
    %v2848 = vsub.f32 %v407, %v2847
    %v2849 = vand.u32 %v2848, 4294901760
    %2850 = vmatpush1.xpose.msra.mxu0 %v2849
    %2851 = vmatprep.subr.mxu0 0.0
    %v2852 = vand.u32 %v404, 4294901760
    %v2853 = vsub.f32 %v404, %v2852
    %v2854 = vand.u32 %v2853, 4294901760
    %2855 = vmatpush1.xpose.msra.mxu0 %v2854
    %2856 = vmatprep.subr.mxu0 0.0
    %v2857 = vand.u32 %v401, 4294901760
    %v2858 = vsub.f32 %v401, %v2857
    %v2859 = vand.u32 %v2858, 4294901760
    %2860 = vmatpush1.xpose.msra.mxu0 %v2859
    %2861 = vmatprep.subr.mxu0 0.0
    %v2862 = vand.u32 %v398, 4294901760
    %v2863 = vsub.f32 %v398, %v2862
    %v2864 = vand.u32 %v2863, 4294901760
    %2865 = vmatpush1.xpose.msra.mxu0 %v2864
    %2866 = vmatprep.subr.mxu0 0.0
    %v2867 = vand.u32 %v395, 4294901760
    %v2868 = vsub.f32 %v395, %v2867
    %v2869 = vand.u32 %v2868, 4294901760
    %2870 = vmatpush1.xpose.msra.mxu0 %v2869
    %2871 = vmatprep.subr.mxu0 0.0
    %v2872 = vand.u32 %v392, 4294901760
    %v2873 = vsub.f32 %v392, %v2872
    %v2874 = vand.u32 %v2873, 4294901760
    %2875 = vmatpush1.xpose.msra.mxu0 %v2874
    %2876 = vmatprep.subr.mxu0 0.0
    %v2877 = vand.u32 %v389, 4294901760
    %v2878 = vsub.f32 %v389, %v2877
    %v2879 = vand.u32 %v2878, 4294901760
    %2880 = vmatpush1.xpose.msra.mxu0 %v2879
    %2881 = vmatprep.subr.mxu0 0.0
    %v2882 = vand.u32 %v386, 4294901760
    %v2883 = vsub.f32 %v386, %v2882
    %v2884 = vand.u32 %v2883, 4294901760
    %2885 = vmatpush1.xpose.msra.mxu0 %v2884
    %2886 = vmatprep.subr.mxu0 0.0
    %v2887 = vand.u32 %v383, 4294901760
    %v2888 = vsub.f32 %v383, %v2887
    %v2889 = vand.u32 %v2888, 4294901760
    %2890 = vmatpush1.xpose.msra.mxu0 %v2889
    %2891 = vmatprep.subr.mxu0 0.0
    %v2892 = vand.u32 %v380, 4294901760
    %v2893 = vsub.f32 %v380, %v2892
    %v2894 = vand.u32 %v2893, 4294901760
    %2895 = vmatpush1.xpose.msra.mxu0 %v2894
    %2896 = vmatprep.subr.mxu0 0.0
    %v2897 = vand.u32 %v377, 4294901760
    %v2898 = vsub.f32 %v377, %v2897
    %v2899 = vand.u32 %v2898, 4294901760
    %2900 = vmatpush1.xpose.msra.mxu0 %v2899
    %2901 = vmatprep.subr.mxu0 0.0
    %v2902 = vand.u32 %v374, 4294901760
    %v2903 = vsub.f32 %v374, %v2902
    %v2904 = vand.u32 %v2903, 4294901760
    %2905 = vmatpush1.xpose.msra.mxu0 %v2904
    %2906 = vmatprep.subr.mxu0 0.0
    %v2907 = vand.u32 %v371, 4294901760
    %v2908 = vsub.f32 %v371, %v2907
    %v2909 = vand.u32 %v2908, 4294901760
    %2910 = vmatpush1.xpose.msra.mxu0 %v2909
    %2911 = vmatprep.subr.mxu0 0.0
    %v2912 = vand.u32 %v368, 4294901760
    %v2913 = vsub.f32 %v368, %v2912
    %v2914 = vand.u32 %v2913, 4294901760
    %2915 = vmatpush1.xpose.msra.mxu0 %v2914
    %2916 = vmatprep.subr.mxu0 0.0
    %v2917 = vand.u32 %v365, 4294901760
    %v2918 = vsub.f32 %v365, %v2917
    %v2919 = vand.u32 %v2918, 4294901760
    %2920 = vmatpush1.xpose.msra.mxu0 %v2919
    %2921 = vmatprep.subr.mxu0 0.0
    %v2922 = vand.u32 %v362, 4294901760
    %v2923 = vsub.f32 %v362, %v2922
    %v2924 = vand.u32 %v2923, 4294901760
    %2925 = vmatpush1.xpose.msra.mxu0 %v2924
    %2926 = vmatprep.subr.mxu0 0.0
    %v2927 = vand.u32 %v455, 4294901760
    %v2928 = vsub.f32 %v455, %v2927
    %v2929 = vand.u32 %v2928, 4294901760
    %2930 = vmatpush2.xpose.msra.mxu0 %v2929
    %2931 = vmatprep.subr.mxu0 0.0
    %v2932 = vand.u32 %v452, 4294901760
    %v2933 = vsub.f32 %v452, %v2932
    %v2934 = vand.u32 %v2933, 4294901760
    %2935 = vmatpush2.xpose.msra.mxu0 %v2934
    %2936 = vmatprep.subr.mxu0 0.0
    %v2937 = vand.u32 %v449, 4294901760
    %v2938 = vsub.f32 %v449, %v2937
    %v2939 = vand.u32 %v2938, 4294901760
    %2940 = vmatpush2.xpose.msra.mxu0 %v2939
    %2941 = vmatprep.subr.mxu0 0.0
    %v2942 = vand.u32 %v446, 4294901760
    %v2943 = vsub.f32 %v446, %v2942
    %v2944 = vand.u32 %v2943, 4294901760
    %2945 = vmatpush2.xpose.msra.mxu0 %v2944
    %2946 = vmatprep.subr.mxu0 0.0
    %v2947 = vand.u32 %v443, 4294901760
    %v2948 = vsub.f32 %v443, %v2947
    %v2949 = vand.u32 %v2948, 4294901760
    %2950 = vmatpush2.xpose.msra.mxu0 %v2949
    %2951 = vmatprep.subr.mxu0 0.0
    %v2952 = vand.u32 %v440, 4294901760
    %v2953 = vsub.f32 %v440, %v2952
    %v2954 = vand.u32 %v2953, 4294901760
    %2955 = vmatpush2.xpose.msra.mxu0 %v2954
    %2956 = vmatprep.subr.mxu0 0.0
    %v2957 = vand.u32 %v437, 4294901760
    %v2958 = vsub.f32 %v437, %v2957
    %v2959 = vand.u32 %v2958, 4294901760
    %2960 = vmatpush2.xpose.msra.mxu0 %v2959
    %2961 = vmatprep.subr.mxu0 0.0
    %v2962 = vand.u32 %v434, 4294901760
    %v2963 = vsub.f32 %v434, %v2962
    %v2964 = vand.u32 %v2963, 4294901760
    %2965 = vmatpush2.xpose.msra.mxu0 %v2964
    %2966 = vmatprep.subr.mxu0 0.0
    %v2967 = vand.u32 %v431, 4294901760
    %v2968 = vsub.f32 %v431, %v2967
    %v2969 = vand.u32 %v2968, 4294901760
    %2970 = vmatpush2.xpose.msra.mxu0 %v2969
    %2971 = vmatprep.subr.mxu0 0.0
    %v2972 = vand.u32 %v428, 4294901760
    %v2973 = vsub.f32 %v428, %v2972
    %v2974 = vand.u32 %v2973, 4294901760
    %2975 = vmatpush2.xpose.msra.mxu0 %v2974
    %2976 = vmatprep.subr.mxu0 0.0
    %v2977 = vand.u32 %v425, 4294901760
    %v2978 = vsub.f32 %v425, %v2977
    %v2979 = vand.u32 %v2978, 4294901760
    %2980 = vmatpush2.xpose.msra.mxu0 %v2979
    %2981 = vmatprep.subr.mxu0 0.0
    %v2982 = vand.u32 %v422, 4294901760
    %v2983 = vsub.f32 %v422, %v2982
    %v2984 = vand.u32 %v2983, 4294901760
    %2985 = vmatpush2.xpose.msra.mxu0 %v2984
    %2986 = vmatprep.subr.mxu0 0.0
    %v2987 = vand.u32 %v419, 4294901760
    %v2988 = vsub.f32 %v419, %v2987
    %v2989 = vand.u32 %v2988, 4294901760
    %2990 = vmatpush2.xpose.msra.mxu0 %v2989
    %2991 = vmatprep.subr.mxu0 0.0
    %v2992 = vand.u32 %v416, 4294901760
    %v2993 = vsub.f32 %v416, %v2992
    %v2994 = vand.u32 %v2993, 4294901760
    %2995 = vmatpush2.xpose.msra.mxu0 %v2994
    %2996 = vmatprep.subr.mxu0 0.0
    %v2997 = vand.u32 %v413, 4294901760
    %v2998 = vsub.f32 %v413, %v2997
    %v2999 = vand.u32 %v2998, 4294901760
    %3000 = vmatpush2.xpose.msra.mxu0 %v2999
    %3001 = vmatprep.subr.mxu0 0.0
    %v3002 = vand.u32 %v410, 4294901760
    %v3003 = vsub.f32 %v410, %v3002
    %v3004 = vand.u32 %v3003, 4294901760
    %3005 = vmatpush2.xpose.msra.mxu0 %v3004
    %3006 = vmatprep.mubr.f32.mxu0 0.0
    %v3007 = vand.u32 %v167, 4294901760
    %3008 = vmatmul.mubr.f32.gmra.mxu0 %v3007
    %v3009 = vpop.f32.mrf.mxu0
    %v3010 = vadd.f32 %v2842, %v3009
    %v3011 = vpop.f32.mrf.mxu0
    %v3012 = vadd.f32 %v2844, %v3011
    %3013 = vdwg.mxu0
    %3014 = vmatprep.subr.mxu0 0.0
    %v3015 = vand.u32 %v407, 4294901760
    %3016 = vmatpush1.xpose.msra.mxu0 %v3015
    %3017 = vmatprep.subr.mxu0 0.0
    %v3018 = vand.u32 %v404, 4294901760
    %3019 = vmatpush1.xpose.msra.mxu0 %v3018
    %3020 = vmatprep.subr.mxu0 0.0
    %v3021 = vand.u32 %v401, 4294901760
    %3022 = vmatpush1.xpose.msra.mxu0 %v3021
    %3023 = vmatprep.subr.mxu0 0.0
    %v3024 = vand.u32 %v398, 4294901760
    %3025 = vmatpush1.xpose.msra.mxu0 %v3024
    %3026 = vmatprep.subr.mxu0 0.0
    %v3027 = vand.u32 %v395, 4294901760
    %3028 = vmatpush1.xpose.msra.mxu0 %v3027
    %3029 = vmatprep.subr.mxu0 0.0
    %v3030 = vand.u32 %v392, 4294901760
    %3031 = vmatpush1.xpose.msra.mxu0 %v3030
    %3032 = vmatprep.subr.mxu0 0.0
    %v3033 = vand.u32 %v389, 4294901760
    %3034 = vmatpush1.xpose.msra.mxu0 %v3033
    %3035 = vmatprep.subr.mxu0 0.0
    %v3036 = vand.u32 %v386, 4294901760
    %3037 = vmatpush1.xpose.msra.mxu0 %v3036
    %3038 = vmatprep.subr.mxu0 0.0
    %v3039 = vand.u32 %v383, 4294901760
    %3040 = vmatpush1.xpose.msra.mxu0 %v3039
    %3041 = vmatprep.subr.mxu0 0.0
    %v3042 = vand.u32 %v380, 4294901760
    %3043 = vmatpush1.xpose.msra.mxu0 %v3042
    %3044 = vmatprep.subr.mxu0 0.0
    %v3045 = vand.u32 %v377, 4294901760
    %3046 = vmatpush1.xpose.msra.mxu0 %v3045
    %3047 = vmatprep.subr.mxu0 0.0
    %v3048 = vand.u32 %v374, 4294901760
    %3049 = vmatpush1.xpose.msra.mxu0 %v3048
    %3050 = vmatprep.subr.mxu0 0.0
    %v3051 = vand.u32 %v371, 4294901760
    %3052 = vmatpush1.xpose.msra.mxu0 %v3051
    %3053 = vmatprep.subr.mxu0 0.0
    %v3054 = vand.u32 %v368, 4294901760
    %3055 = vmatpush1.xpose.msra.mxu0 %v3054
    %3056 = vmatprep.subr.mxu0 0.0
    %v3057 = vand.u32 %v365, 4294901760
    %3058 = vmatpush1.xpose.msra.mxu0 %v3057
    %3059 = vmatprep.subr.mxu0 0.0
    %v3060 = vand.u32 %v362, 4294901760
    %3061 = vmatpush1.xpose.msra.mxu0 %v3060
    %3062 = vmatprep.subr.mxu0 0.0
    %v3063 = vand.u32 %v455, 4294901760
    %3064 = vmatpush2.xpose.msra.mxu0 %v3063
    %3065 = vmatprep.subr.mxu0 0.0
    %v3066 = vand.u32 %v452, 4294901760
    %3067 = vmatpush2.xpose.msra.mxu0 %v3066
    %3068 = vmatprep.subr.mxu0 0.0
    %v3069 = vand.u32 %v449, 4294901760
    %3070 = vmatpush2.xpose.msra.mxu0 %v3069
    %3071 = vmatprep.subr.mxu0 0.0
    %v3072 = vand.u32 %v446, 4294901760
    %3073 = vmatpush2.xpose.msra.mxu0 %v3072
    %3074 = vmatprep.subr.mxu0 0.0
    %v3075 = vand.u32 %v443, 4294901760
    %3076 = vmatpush2.xpose.msra.mxu0 %v3075
    %3077 = vmatprep.subr.mxu0 0.0
    %v3078 = vand.u32 %v440, 4294901760
    %3079 = vmatpush2.xpose.msra.mxu0 %v3078
    %3080 = vmatprep.subr.mxu0 0.0
    %v3081 = vand.u32 %v437, 4294901760
    %3082 = vmatpush2.xpose.msra.mxu0 %v3081
    %3083 = vmatprep.subr.mxu0 0.0
    %v3084 = vand.u32 %v434, 4294901760
    %3085 = vmatpush2.xpose.msra.mxu0 %v3084
    %3086 = vmatprep.subr.mxu0 0.0
    %v3087 = vand.u32 %v431, 4294901760
    %3088 = vmatpush2.xpose.msra.mxu0 %v3087
    %3089 = vmatprep.subr.mxu0 0.0
    %v3090 = vand.u32 %v428, 4294901760
    %3091 = vmatpush2.xpose.msra.mxu0 %v3090
    %3092 = vmatprep.subr.mxu0 0.0
    %v3093 = vand.u32 %v425, 4294901760
    %3094 = vmatpush2.xpose.msra.mxu0 %v3093
    %3095 = vmatprep.subr.mxu0 0.0
    %v3096 = vand.u32 %v422, 4294901760
    %3097 = vmatpush2.xpose.msra.mxu0 %v3096
    %3098 = vmatprep.subr.mxu0 0.0
    %v3099 = vand.u32 %v419, 4294901760
    %3100 = vmatpush2.xpose.msra.mxu0 %v3099
    %3101 = vmatprep.subr.mxu0 0.0
    %v3102 = vand.u32 %v416, 4294901760
    %3103 = vmatpush2.xpose.msra.mxu0 %v3102
    %3104 = vmatprep.subr.mxu0 0.0
    %v3105 = vand.u32 %v413, 4294901760
    %3106 = vmatpush2.xpose.msra.mxu0 %v3105
    %3107 = vmatprep.subr.mxu0 0.0
    %v3108 = vand.u32 %v410, 4294901760
    %3109 = vmatpush2.xpose.msra.mxu0 %v3108
    %3110 = vmatprep.mubr.f32.mxu0 0.0
    %v3111 = vand.u32 %v167, 4294901760
    %3112 = vmatmul.mubr.f32.gmra.mxu0 %v3111
    %v3113 = vpop.f32.mrf.mxu0
    %v3114 = vadd.f32 %v3010, %v3113
    %v3115 = vpop.f32.mrf.mxu0
    %v3116 = vadd.f32 %v3012, %v3115
    %3117 = vdwg.mxu0
    %3118 = vmatprep.subr.mxu0 0.0
    %v3119 = vand.u32 %v503, 4294901760
    %3120 = vmatpush1.xpose.msra.mxu0 %v3119
    %3121 = vmatprep.subr.mxu0 0.0
    %v3122 = vand.u32 %v500, 4294901760
    %3123 = vmatpush1.xpose.msra.mxu0 %v3122
    %3124 = vmatprep.subr.mxu0 0.0
    %v3125 = vand.u32 %v497, 4294901760
    %3126 = vmatpush1.xpose.msra.mxu0 %v3125
    %3127 = vmatprep.subr.mxu0 0.0
    %v3128 = vand.u32 %v494, 4294901760
    %3129 = vmatpush1.xpose.msra.mxu0 %v3128
    %3130 = vmatprep.subr.mxu0 0.0
    %v3131 = vand.u32 %v491, 4294901760
    %3132 = vmatpush1.xpose.msra.mxu0 %v3131
    %3133 = vmatprep.subr.mxu0 0.0
    %v3134 = vand.u32 %v488, 4294901760
    %3135 = vmatpush1.xpose.msra.mxu0 %v3134
    %3136 = vmatprep.subr.mxu0 0.0
    %v3137 = vand.u32 %v485, 4294901760
    %3138 = vmatpush1.xpose.msra.mxu0 %v3137
    %3139 = vmatprep.subr.mxu0 0.0
    %v3140 = vand.u32 %v482, 4294901760
    %3141 = vmatpush1.xpose.msra.mxu0 %v3140
    %3142 = vmatprep.subr.mxu0 0.0
    %v3143 = vand.u32 %v479, 4294901760
    %3144 = vmatpush1.xpose.msra.mxu0 %v3143
    %3145 = vmatprep.subr.mxu0 0.0
    %v3146 = vand.u32 %v476, 4294901760
    %3147 = vmatpush1.xpose.msra.mxu0 %v3146
    %3148 = vmatprep.subr.mxu0 0.0
    %v3149 = vand.u32 %v473, 4294901760
    %3150 = vmatpush1.xpose.msra.mxu0 %v3149
    %3151 = vmatprep.subr.mxu0 0.0
    %v3152 = vand.u32 %v470, 4294901760
    %3153 = vmatpush1.xpose.msra.mxu0 %v3152
    %3154 = vmatprep.subr.mxu0 0.0
    %v3155 = vand.u32 %v467, 4294901760
    %3156 = vmatpush1.xpose.msra.mxu0 %v3155
    %3157 = vmatprep.subr.mxu0 0.0
    %v3158 = vand.u32 %v464, 4294901760
    %3159 = vmatpush1.xpose.msra.mxu0 %v3158
    %3160 = vmatprep.subr.mxu0 0.0
    %v3161 = vand.u32 %v461, 4294901760
    %3162 = vmatpush1.xpose.msra.mxu0 %v3161
    %3163 = vmatprep.subr.mxu0 0.0
    %v3164 = vand.u32 %v458, 4294901760
    %3165 = vmatpush1.xpose.msra.mxu0 %v3164
    %3166 = vmatprep.subr.mxu0 0.0
    %v3167 = vand.u32 %v551, 4294901760
    %3168 = vmatpush2.xpose.msra.mxu0 %v3167
    %3169 = vmatprep.subr.mxu0 0.0
    %v3170 = vand.u32 %v548, 4294901760
    %3171 = vmatpush2.xpose.msra.mxu0 %v3170
    %3172 = vmatprep.subr.mxu0 0.0
    %v3173 = vand.u32 %v545, 4294901760
    %3174 = vmatpush2.xpose.msra.mxu0 %v3173
    %3175 = vmatprep.subr.mxu0 0.0
    %v3176 = vand.u32 %v542, 4294901760
    %3177 = vmatpush2.xpose.msra.mxu0 %v3176
    %3178 = vmatprep.subr.mxu0 0.0
    %v3179 = vand.u32 %v539, 4294901760
    %3180 = vmatpush2.xpose.msra.mxu0 %v3179
    %3181 = vmatprep.subr.mxu0 0.0
    %v3182 = vand.u32 %v536, 4294901760
    %3183 = vmatpush2.xpose.msra.mxu0 %v3182
    %3184 = vmatprep.subr.mxu0 0.0
    %v3185 = vand.u32 %v533, 4294901760
    %3186 = vmatpush2.xpose.msra.mxu0 %v3185
    %3187 = vmatprep.subr.mxu0 0.0
    %v3188 = vand.u32 %v530, 4294901760
    %3189 = vmatpush2.xpose.msra.mxu0 %v3188
    %3190 = vmatprep.subr.mxu0 0.0
    %v3191 = vand.u32 %v527, 4294901760
    %3192 = vmatpush2.xpose.msra.mxu0 %v3191
    %3193 = vmatprep.subr.mxu0 0.0
    %v3194 = vand.u32 %v524, 4294901760
    %3195 = vmatpush2.xpose.msra.mxu0 %v3194
    %3196 = vmatprep.subr.mxu0 0.0
    %v3197 = vand.u32 %v521, 4294901760
    %3198 = vmatpush2.xpose.msra.mxu0 %v3197
    %3199 = vmatprep.subr.mxu0 0.0
    %v3200 = vand.u32 %v518, 4294901760
    %3201 = vmatpush2.xpose.msra.mxu0 %v3200
    %3202 = vmatprep.subr.mxu0 0.0
    %v3203 = vand.u32 %v515, 4294901760
    %3204 = vmatpush2.xpose.msra.mxu0 %v3203
    %3205 = vmatprep.subr.mxu0 0.0
    %v3206 = vand.u32 %v512, 4294901760
    %3207 = vmatpush2.xpose.msra.mxu0 %v3206
    %3208 = vmatprep.subr.mxu0 0.0
    %v3209 = vand.u32 %v509, 4294901760
    %3210 = vmatpush2.xpose.msra.mxu0 %v3209
    %3211 = vmatprep.subr.mxu0 0.0
    %v3212 = vand.u32 %v506, 4294901760
    %3213 = vmatpush2.xpose.msra.mxu0 %v3212
    %3214 = vmatprep.mubr.f32.mxu0 0.0
    %v3215 = vand.u32 %v167, 4294901760
    %v3216 = vsub.f32 %v167, %v3215
    %v3217 = vand.u32 %v3216, 4294901760
    %v3218 = vsub.f32 %v3216, %v3217
    %v3219 = vand.u32 %v3218, 4294901760
    %3220 = vmatmul.mubr.f32.gmra.mxu0 %v3219
    %v3221 = vpop.f32.mrf.mxu0
    %v3222 = vadd.f32 0.0, %v3221
    %v3223 = vpop.f32.mrf.mxu0
    %v3224 = vadd.f32 0.0, %v3223
    %3225 = vdwg.mxu0
    %3226 = vmatprep.subr.mxu0 0.0
    %v3227 = vand.u32 %v503, 4294901760
    %v3228 = vsub.f32 %v503, %v3227
    %v3229 = vand.u32 %v3228, 4294901760
    %v3230 = vsub.f32 %v3228, %v3229
    %v3231 = vand.u32 %v3230, 4294901760
    %3232 = vmatpush1.xpose.msra.mxu0 %v3231
    %3233 = vmatprep.subr.mxu0 0.0
    %v3234 = vand.u32 %v500, 4294901760
    %v3235 = vsub.f32 %v500, %v3234
    %v3236 = vand.u32 %v3235, 4294901760
    %v3237 = vsub.f32 %v3235, %v3236
    %v3238 = vand.u32 %v3237, 4294901760
    %3239 = vmatpush1.xpose.msra.mxu0 %v3238
    %3240 = vmatprep.subr.mxu0 0.0
    %v3241 = vand.u32 %v497, 4294901760
    %v3242 = vsub.f32 %v497, %v3241
    %v3243 = vand.u32 %v3242, 4294901760
    %v3244 = vsub.f32 %v3242, %v3243
    %v3245 = vand.u32 %v3244, 4294901760
    %3246 = vmatpush1.xpose.msra.mxu0 %v3245
    %3247 = vmatprep.subr.mxu0 0.0
    %v3248 = vand.u32 %v494, 4294901760
    %v3249 = vsub.f32 %v494, %v3248
    %v3250 = vand.u32 %v3249, 4294901760
    %v3251 = vsub.f32 %v3249, %v3250
    %v3252 = vand.u32 %v3251, 4294901760
    %3253 = vmatpush1.xpose.msra.mxu0 %v3252
    %3254 = vmatprep.subr.mxu0 0.0
    %v3255 = vand.u32 %v491, 4294901760
    %v3256 = vsub.f32 %v491, %v3255
    %v3257 = vand.u32 %v3256, 4294901760
    %v3258 = vsub.f32 %v3256, %v3257
    %v3259 = vand.u32 %v3258, 4294901760
    %3260 = vmatpush1.xpose.msra.mxu0 %v3259
    %3261 = vmatprep.subr.mxu0 0.0
    %v3262 = vand.u32 %v488, 4294901760
    %v3263 = vsub.f32 %v488, %v3262
    %v3264 = vand.u32 %v3263, 4294901760
    %v3265 = vsub.f32 %v3263, %v3264
    %v3266 = vand.u32 %v3265, 4294901760
    %3267 = vmatpush1.xpose.msra.mxu0 %v3266
    %3268 = vmatprep.subr.mxu0 0.0
    %v3269 = vand.u32 %v485, 4294901760
    %v3270 = vsub.f32 %v485, %v3269
    %v3271 = vand.u32 %v3270, 4294901760
    %v3272 = vsub.f32 %v3270, %v3271
    %v3273 = vand.u32 %v3272, 4294901760
    %3274 = vmatpush1.xpose.msra.mxu0 %v3273
    %3275 = vmatprep.subr.mxu0 0.0
    %v3276 = vand.u32 %v482, 4294901760
    %v3277 = vsub.f32 %v482, %v3276
    %v3278 = vand.u32 %v3277, 4294901760
    %v3279 = vsub.f32 %v3277, %v3278
    %v3280 = vand.u32 %v3279, 4294901760
    %3281 = vmatpush1.xpose.msra.mxu0 %v3280
    %3282 = vmatprep.subr.mxu0 0.0
    %v3283 = vand.u32 %v479, 4294901760
    %v3284 = vsub.f32 %v479, %v3283
    %v3285 = vand.u32 %v3284, 4294901760
    %v3286 = vsub.f32 %v3284, %v3285
    %v3287 = vand.u32 %v3286, 4294901760
    %3288 = vmatpush1.xpose.msra.mxu0 %v3287
    %3289 = vmatprep.subr.mxu0 0.0
    %v3290 = vand.u32 %v476, 4294901760
    %v3291 = vsub.f32 %v476, %v3290
    %v3292 = vand.u32 %v3291, 4294901760
    %v3293 = vsub.f32 %v3291, %v3292
    %v3294 = vand.u32 %v3293, 4294901760
    %3295 = vmatpush1.xpose.msra.mxu0 %v3294
    %3296 = vmatprep.subr.mxu0 0.0
    %v3297 = vand.u32 %v473, 4294901760
    %v3298 = vsub.f32 %v473, %v3297
    %v3299 = vand.u32 %v3298, 4294901760
    %v3300 = vsub.f32 %v3298, %v3299
    %v3301 = vand.u32 %v3300, 4294901760
    %3302 = vmatpush1.xpose.msra.mxu0 %v3301
    %3303 = vmatprep.subr.mxu0 0.0
    %v3304 = vand.u32 %v470, 4294901760
    %v3305 = vsub.f32 %v470, %v3304
    %v3306 = vand.u32 %v3305, 4294901760
    %v3307 = vsub.f32 %v3305, %v3306
    %v3308 = vand.u32 %v3307, 4294901760
    %3309 = vmatpush1.xpose.msra.mxu0 %v3308
    %3310 = vmatprep.subr.mxu0 0.0
    %v3311 = vand.u32 %v467, 4294901760
    %v3312 = vsub.f32 %v467, %v3311
    %v3313 = vand.u32 %v3312, 4294901760
    %v3314 = vsub.f32 %v3312, %v3313
    %v3315 = vand.u32 %v3314, 4294901760
    %3316 = vmatpush1.xpose.msra.mxu0 %v3315
    %3317 = vmatprep.subr.mxu0 0.0
    %v3318 = vand.u32 %v464, 4294901760
    %v3319 = vsub.f32 %v464, %v3318
    %v3320 = vand.u32 %v3319, 4294901760
    %v3321 = vsub.f32 %v3319, %v3320
    %v3322 = vand.u32 %v3321, 4294901760
    %3323 = vmatpush1.xpose.msra.mxu0 %v3322
    %3324 = vmatprep.subr.mxu0 0.0
    %v3325 = vand.u32 %v461, 4294901760
    %v3326 = vsub.f32 %v461, %v3325
    %v3327 = vand.u32 %v3326, 4294901760
    %v3328 = vsub.f32 %v3326, %v3327
    %v3329 = vand.u32 %v3328, 4294901760
    %3330 = vmatpush1.xpose.msra.mxu0 %v3329
    %3331 = vmatprep.subr.mxu0 0.0
    %v3332 = vand.u32 %v458, 4294901760
    %v3333 = vsub.f32 %v458, %v3332
    %v3334 = vand.u32 %v3333, 4294901760
    %v3335 = vsub.f32 %v3333, %v3334
    %v3336 = vand.u32 %v3335, 4294901760
    %3337 = vmatpush1.xpose.msra.mxu0 %v3336
    %3338 = vmatprep.subr.mxu0 0.0
    %v3339 = vand.u32 %v551, 4294901760
    %v3340 = vsub.f32 %v551, %v3339
    %v3341 = vand.u32 %v3340, 4294901760
    %v3342 = vsub.f32 %v3340, %v3341
    %v3343 = vand.u32 %v3342, 4294901760
    %3344 = vmatpush2.xpose.msra.mxu0 %v3343
    %3345 = vmatprep.subr.mxu0 0.0
    %v3346 = vand.u32 %v548, 4294901760
    %v3347 = vsub.f32 %v548, %v3346
    %v3348 = vand.u32 %v3347, 4294901760
    %v3349 = vsub.f32 %v3347, %v3348
    %v3350 = vand.u32 %v3349, 4294901760
    %3351 = vmatpush2.xpose.msra.mxu0 %v3350
    %3352 = vmatprep.subr.mxu0 0.0
    %v3353 = vand.u32 %v545, 4294901760
    %v3354 = vsub.f32 %v545, %v3353
    %v3355 = vand.u32 %v3354, 4294901760
    %v3356 = vsub.f32 %v3354, %v3355
    %v3357 = vand.u32 %v3356, 4294901760
    %3358 = vmatpush2.xpose.msra.mxu0 %v3357
    %3359 = vmatprep.subr.mxu0 0.0
    %v3360 = vand.u32 %v542, 4294901760
    %v3361 = vsub.f32 %v542, %v3360
    %v3362 = vand.u32 %v3361, 4294901760
    %v3363 = vsub.f32 %v3361, %v3362
    %v3364 = vand.u32 %v3363, 4294901760
    %3365 = vmatpush2.xpose.msra.mxu0 %v3364
    %3366 = vmatprep.subr.mxu0 0.0
    %v3367 = vand.u32 %v539, 4294901760
    %v3368 = vsub.f32 %v539, %v3367
    %v3369 = vand.u32 %v3368, 4294901760
    %v3370 = vsub.f32 %v3368, %v3369
    %v3371 = vand.u32 %v3370, 4294901760
    %3372 = vmatpush2.xpose.msra.mxu0 %v3371
    %3373 = vmatprep.subr.mxu0 0.0
    %v3374 = vand.u32 %v536, 4294901760
    %v3375 = vsub.f32 %v536, %v3374
    %v3376 = vand.u32 %v3375, 4294901760
    %v3377 = vsub.f32 %v3375, %v3376
    %v3378 = vand.u32 %v3377, 4294901760
    %3379 = vmatpush2.xpose.msra.mxu0 %v3378
    %3380 = vmatprep.subr.mxu0 0.0
    %v3381 = vand.u32 %v533, 4294901760
    %v3382 = vsub.f32 %v533, %v3381
    %v3383 = vand.u32 %v3382, 4294901760
    %v3384 = vsub.f32 %v3382, %v3383
    %v3385 = vand.u32 %v3384, 4294901760
    %3386 = vmatpush2.xpose.msra.mxu0 %v3385
    %3387 = vmatprep.subr.mxu0 0.0
    %v3388 = vand.u32 %v530, 4294901760
    %v3389 = vsub.f32 %v530, %v3388
    %v3390 = vand.u32 %v3389, 4294901760
    %v3391 = vsub.f32 %v3389, %v3390
    %v3392 = vand.u32 %v3391, 4294901760
    %3393 = vmatpush2.xpose.msra.mxu0 %v3392
    %3394 = vmatprep.subr.mxu0 0.0
    %v3395 = vand.u32 %v527, 4294901760
    %v3396 = vsub.f32 %v527, %v3395
    %v3397 = vand.u32 %v3396, 4294901760
    %v3398 = vsub.f32 %v3396, %v3397
    %v3399 = vand.u32 %v3398, 4294901760
    %3400 = vmatpush2.xpose.msra.mxu0 %v3399
    %3401 = vmatprep.subr.mxu0 0.0
    %v3402 = vand.u32 %v524, 4294901760
    %v3403 = vsub.f32 %v524, %v3402
    %v3404 = vand.u32 %v3403, 4294901760
    %v3405 = vsub.f32 %v3403, %v3404
    %v3406 = vand.u32 %v3405, 4294901760
    %3407 = vmatpush2.xpose.msra.mxu0 %v3406
    %3408 = vmatprep.subr.mxu0 0.0
    %v3409 = vand.u32 %v521, 4294901760
    %v3410 = vsub.f32 %v521, %v3409
    %v3411 = vand.u32 %v3410, 4294901760
    %v3412 = vsub.f32 %v3410, %v3411
    %v3413 = vand.u32 %v3412, 4294901760
    %3414 = vmatpush2.xpose.msra.mxu0 %v3413
    %3415 = vmatprep.subr.mxu0 0.0
    %v3416 = vand.u32 %v518, 4294901760
    %v3417 = vsub.f32 %v518, %v3416
    %v3418 = vand.u32 %v3417, 4294901760
    %v3419 = vsub.f32 %v3417, %v3418
    %v3420 = vand.u32 %v3419, 4294901760
    %3421 = vmatpush2.xpose.msra.mxu0 %v3420
    %3422 = vmatprep.subr.mxu0 0.0
    %v3423 = vand.u32 %v515, 4294901760
    %v3424 = vsub.f32 %v515, %v3423
    %v3425 = vand.u32 %v3424, 4294901760
    %v3426 = vsub.f32 %v3424, %v3425
    %v3427 = vand.u32 %v3426, 4294901760
    %3428 = vmatpush2.xpose.msra.mxu0 %v3427
    %3429 = vmatprep.subr.mxu0 0.0
    %v3430 = vand.u32 %v512, 4294901760
    %v3431 = vsub.f32 %v512, %v3430
    %v3432 = vand.u32 %v3431, 4294901760
    %v3433 = vsub.f32 %v3431, %v3432
    %v3434 = vand.u32 %v3433, 4294901760
    %3435 = vmatpush2.xpose.msra.mxu0 %v3434
    %3436 = vmatprep.subr.mxu0 0.0
    %v3437 = vand.u32 %v509, 4294901760
    %v3438 = vsub.f32 %v509, %v3437
    %v3439 = vand.u32 %v3438, 4294901760
    %v3440 = vsub.f32 %v3438, %v3439
    %v3441 = vand.u32 %v3440, 4294901760
    %3442 = vmatpush2.xpose.msra.mxu0 %v3441
    %3443 = vmatprep.subr.mxu0 0.0
    %v3444 = vand.u32 %v506, 4294901760
    %v3445 = vsub.f32 %v506, %v3444
    %v3446 = vand.u32 %v3445, 4294901760
    %v3447 = vsub.f32 %v3445, %v3446
    %v3448 = vand.u32 %v3447, 4294901760
    %3449 = vmatpush2.xpose.msra.mxu0 %v3448
    %3450 = vmatprep.mubr.f32.mxu0 0.0
    %v3451 = vand.u32 %v167, 4294901760
    %3452 = vmatmul.mubr.f32.gmra.mxu0 %v3451
    %v3453 = vpop.f32.mrf.mxu0
    %v3454 = vadd.f32 %v3222, %v3453
    %v3455 = vpop.f32.mrf.mxu0
    %v3456 = vadd.f32 %v3224, %v3455
    %3457 = vdwg.mxu0
    %3458 = vmatprep.subr.mxu0 0.0
    %v3459 = vand.u32 %v503, 4294901760
    %v3460 = vsub.f32 %v503, %v3459
    %3461 = vmatpush1.xpose.msra.mxu0 %v3460
    %3462 = vmatprep.subr.mxu0 0.0
    %v3463 = vand.u32 %v500, 4294901760
    %v3464 = vsub.f32 %v500, %v3463
    %3465 = vmatpush1.xpose.msra.mxu0 %v3464
    %3466 = vmatprep.subr.mxu0 0.0
    %v3467 = vand.u32 %v497, 4294901760
    %v3468 = vsub.f32 %v497, %v3467
    %3469 = vmatpush1.xpose.msra.mxu0 %v3468
    %3470 = vmatprep.subr.mxu0 0.0
    %v3471 = vand.u32 %v494, 4294901760
    %v3472 = vsub.f32 %v494, %v3471
    %3473 = vmatpush1.xpose.msra.mxu0 %v3472
    %3474 = vmatprep.subr.mxu0 0.0
    %v3475 = vand.u32 %v491, 4294901760
    %v3476 = vsub.f32 %v491, %v3475
    %3477 = vmatpush1.xpose.msra.mxu0 %v3476
    %3478 = vmatprep.subr.mxu0 0.0
    %v3479 = vand.u32 %v488, 4294901760
    %v3480 = vsub.f32 %v488, %v3479
    %3481 = vmatpush1.xpose.msra.mxu0 %v3480
    %3482 = vmatprep.subr.mxu0 0.0
    %v3483 = vand.u32 %v485, 4294901760
    %v3484 = vsub.f32 %v485, %v3483
    %3485 = vmatpush1.xpose.msra.mxu0 %v3484
    %3486 = vmatprep.subr.mxu0 0.0
    %v3487 = vand.u32 %v482, 4294901760
    %v3488 = vsub.f32 %v482, %v3487
    %3489 = vmatpush1.xpose.msra.mxu0 %v3488
    %3490 = vmatprep.subr.mxu0 0.0
    %v3491 = vand.u32 %v479, 4294901760
    %v3492 = vsub.f32 %v479, %v3491
    %3493 = vmatpush1.xpose.msra.mxu0 %v3492
    %3494 = vmatprep.subr.mxu0 0.0
    %v3495 = vand.u32 %v476, 4294901760
    %v3496 = vsub.f32 %v476, %v3495
    %3497 = vmatpush1.xpose.msra.mxu0 %v3496
    %3498 = vmatprep.subr.mxu0 0.0
    %v3499 = vand.u32 %v473, 4294901760
    %v3500 = vsub.f32 %v473, %v3499
    %3501 = vmatpush1.xpose.msra.mxu0 %v3500
    %3502 = vmatprep.subr.mxu0 0.0
    %v3503 = vand.u32 %v470, 4294901760
    %v3504 = vsub.f32 %v470, %v3503
    %3505 = vmatpush1.xpose.msra.mxu0 %v3504
    %3506 = vmatprep.subr.mxu0 0.0
    %v3507 = vand.u32 %v467, 4294901760
    %v3508 = vsub.f32 %v467, %v3507
    %3509 = vmatpush1.xpose.msra.mxu0 %v3508
    %3510 = vmatprep.subr.mxu0 0.0
    %v3511 = vand.u32 %v464, 4294901760
    %v3512 = vsub.f32 %v464, %v3511
    %3513 = vmatpush1.xpose.msra.mxu0 %v3512
    %3514 = vmatprep.subr.mxu0 0.0
    %v3515 = vand.u32 %v461, 4294901760
    %v3516 = vsub.f32 %v461, %v3515
    %3517 = vmatpush1.xpose.msra.mxu0 %v3516
    %3518 = vmatprep.subr.mxu0 0.0
    %v3519 = vand.u32 %v458, 4294901760
    %v3520 = vsub.f32 %v458, %v3519
    %3521 = vmatpush1.xpose.msra.mxu0 %v3520
    %3522 = vmatprep.subr.mxu0 0.0
    %v3523 = vand.u32 %v551, 4294901760
    %v3524 = vsub.f32 %v551, %v3523
    %3525 = vmatpush2.xpose.msra.mxu0 %v3524
    %3526 = vmatprep.subr.mxu0 0.0
    %v3527 = vand.u32 %v548, 4294901760
    %v3528 = vsub.f32 %v548, %v3527
    %3529 = vmatpush2.xpose.msra.mxu0 %v3528
    %3530 = vmatprep.subr.mxu0 0.0
    %v3531 = vand.u32 %v545, 4294901760
    %v3532 = vsub.f32 %v545, %v3531
    %3533 = vmatpush2.xpose.msra.mxu0 %v3532
    %3534 = vmatprep.subr.mxu0 0.0
    %v3535 = vand.u32 %v542, 4294901760
    %v3536 = vsub.f32 %v542, %v3535
    %3537 = vmatpush2.xpose.msra.mxu0 %v3536
    %3538 = vmatprep.subr.mxu0 0.0
    %v3539 = vand.u32 %v539, 4294901760
    %v3540 = vsub.f32 %v539, %v3539
    %3541 = vmatpush2.xpose.msra.mxu0 %v3540
    %3542 = vmatprep.subr.mxu0 0.0
    %v3543 = vand.u32 %v536, 4294901760
    %v3544 = vsub.f32 %v536, %v3543
    %3545 = vmatpush2.xpose.msra.mxu0 %v3544
    %3546 = vmatprep.subr.mxu0 0.0
    %v3547 = vand.u32 %v533, 4294901760
    %v3548 = vsub.f32 %v533, %v3547
    %3549 = vmatpush2.xpose.msra.mxu0 %v3548
    %3550 = vmatprep.subr.mxu0 0.0
    %v3551 = vand.u32 %v530, 4294901760
    %v3552 = vsub.f32 %v530, %v3551
    %3553 = vmatpush2.xpose.msra.mxu0 %v3552
    %3554 = vmatprep.subr.mxu0 0.0
    %v3555 = vand.u32 %v527, 4294901760
    %v3556 = vsub.f32 %v527, %v3555
    %3557 = vmatpush2.xpose.msra.mxu0 %v3556
    %3558 = vmatprep.subr.mxu0 0.0
    %v3559 = vand.u32 %v524, 4294901760
    %v3560 = vsub.f32 %v524, %v3559
    %3561 = vmatpush2.xpose.msra.mxu0 %v3560
    %3562 = vmatprep.subr.mxu0 0.0
    %v3563 = vand.u32 %v521, 4294901760
    %v3564 = vsub.f32 %v521, %v3563
    %3565 = vmatpush2.xpose.msra.mxu0 %v3564
    %3566 = vmatprep.subr.mxu0 0.0
    %v3567 = vand.u32 %v518, 4294901760
    %v3568 = vsub.f32 %v518, %v3567
    %3569 = vmatpush2.xpose.msra.mxu0 %v3568
    %3570 = vmatprep.subr.mxu0 0.0
    %v3571 = vand.u32 %v515, 4294901760
    %v3572 = vsub.f32 %v515, %v3571
    %3573 = vmatpush2.xpose.msra.mxu0 %v3572
    %3574 = vmatprep.subr.mxu0 0.0
    %v3575 = vand.u32 %v512, 4294901760
    %v3576 = vsub.f32 %v512, %v3575
    %3577 = vmatpush2.xpose.msra.mxu0 %v3576
    %3578 = vmatprep.subr.mxu0 0.0
    %v3579 = vand.u32 %v509, 4294901760
    %v3580 = vsub.f32 %v509, %v3579
    %3581 = vmatpush2.xpose.msra.mxu0 %v3580
    %3582 = vmatprep.subr.mxu0 0.0
    %v3583 = vand.u32 %v506, 4294901760
    %v3584 = vsub.f32 %v506, %v3583
    %3585 = vmatpush2.xpose.msra.mxu0 %v3584
    %3586 = vmatprep.mubr.f32.mxu0 0.0
    %v3587 = vand.u32 %v167, 4294901760
    %v3588 = vsub.f32 %v167, %v3587
    %3589 = vmatmul.mubr.f32.gmra.mxu0 %v3588
    %v3590 = vpop.f32.mrf.mxu0
    %v3591 = vadd.f32 %v3454, %v3590
    %v3592 = vpop.f32.mrf.mxu0
    %v3593 = vadd.f32 %v3456, %v3592
    %3594 = vdwg.mxu0
    %3595 = vmatprep.subr.mxu0 0.0
    %v3596 = vand.u32 %v503, 4294901760
    %3597 = vmatpush1.xpose.msra.mxu0 %v3596
    %3598 = vmatprep.subr.mxu0 0.0
    %v3599 = vand.u32 %v500, 4294901760
    %3600 = vmatpush1.xpose.msra.mxu0 %v3599
    %3601 = vmatprep.subr.mxu0 0.0
    %v3602 = vand.u32 %v497, 4294901760
    %3603 = vmatpush1.xpose.msra.mxu0 %v3602
    %3604 = vmatprep.subr.mxu0 0.0
    %v3605 = vand.u32 %v494, 4294901760
    %3606 = vmatpush1.xpose.msra.mxu0 %v3605
    %3607 = vmatprep.subr.mxu0 0.0
    %v3608 = vand.u32 %v491, 4294901760
    %3609 = vmatpush1.xpose.msra.mxu0 %v3608
    %3610 = vmatprep.subr.mxu0 0.0
    %v3611 = vand.u32 %v488, 4294901760
    %3612 = vmatpush1.xpose.msra.mxu0 %v3611
    %3613 = vmatprep.subr.mxu0 0.0
    %v3614 = vand.u32 %v485, 4294901760
    %3615 = vmatpush1.xpose.msra.mxu0 %v3614
    %3616 = vmatprep.subr.mxu0 0.0
    %v3617 = vand.u32 %v482, 4294901760
    %3618 = vmatpush1.xpose.msra.mxu0 %v3617
    %3619 = vmatprep.subr.mxu0 0.0
    %v3620 = vand.u32 %v479, 4294901760
    %3621 = vmatpush1.xpose.msra.mxu0 %v3620
    %3622 = vmatprep.subr.mxu0 0.0
    %v3623 = vand.u32 %v476, 4294901760
    %3624 = vmatpush1.xpose.msra.mxu0 %v3623
    %3625 = vmatprep.subr.mxu0 0.0
    %v3626 = vand.u32 %v473, 4294901760
    %3627 = vmatpush1.xpose.msra.mxu0 %v3626
    %3628 = vmatprep.subr.mxu0 0.0
    %v3629 = vand.u32 %v470, 4294901760
    %3630 = vmatpush1.xpose.msra.mxu0 %v3629
    %3631 = vmatprep.subr.mxu0 0.0
    %v3632 = vand.u32 %v467, 4294901760
    %3633 = vmatpush1.xpose.msra.mxu0 %v3632
    %3634 = vmatprep.subr.mxu0 0.0
    %v3635 = vand.u32 %v464, 4294901760
    %3636 = vmatpush1.xpose.msra.mxu0 %v3635
    %3637 = vmatprep.subr.mxu0 0.0
    %v3638 = vand.u32 %v461, 4294901760
    %3639 = vmatpush1.xpose.msra.mxu0 %v3638
    %3640 = vmatprep.subr.mxu0 0.0
    %v3641 = vand.u32 %v458, 4294901760
    %3642 = vmatpush1.xpose.msra.mxu0 %v3641
    %3643 = vmatprep.subr.mxu0 0.0
    %v3644 = vand.u32 %v551, 4294901760
    %3645 = vmatpush2.xpose.msra.mxu0 %v3644
    %3646 = vmatprep.subr.mxu0 0.0
    %v3647 = vand.u32 %v548, 4294901760
    %3648 = vmatpush2.xpose.msra.mxu0 %v3647
    %3649 = vmatprep.subr.mxu0 0.0
    %v3650 = vand.u32 %v545, 4294901760
    %3651 = vmatpush2.xpose.msra.mxu0 %v3650
    %3652 = vmatprep.subr.mxu0 0.0
    %v3653 = vand.u32 %v542, 4294901760
    %3654 = vmatpush2.xpose.msra.mxu0 %v3653
    %3655 = vmatprep.subr.mxu0 0.0
    %v3656 = vand.u32 %v539, 4294901760
    %3657 = vmatpush2.xpose.msra.mxu0 %v3656
    %3658 = vmatprep.subr.mxu0 0.0
    %v3659 = vand.u32 %v536, 4294901760
    %3660 = vmatpush2.xpose.msra.mxu0 %v3659
    %3661 = vmatprep.subr.mxu0 0.0
    %v3662 = vand.u32 %v533, 4294901760
    %3663 = vmatpush2.xpose.msra.mxu0 %v3662
    %3664 = vmatprep.subr.mxu0 0.0
    %v3665 = vand.u32 %v530, 4294901760
    %3666 = vmatpush2.xpose.msra.mxu0 %v3665
    %3667 = vmatprep.subr.mxu0 0.0
    %v3668 = vand.u32 %v527, 4294901760
    %3669 = vmatpush2.xpose.msra.mxu0 %v3668
    %3670 = vmatprep.subr.mxu0 0.0
    %v3671 = vand.u32 %v524, 4294901760
    %3672 = vmatpush2.xpose.msra.mxu0 %v3671
    %3673 = vmatprep.subr.mxu0 0.0
    %v3674 = vand.u32 %v521, 4294901760
    %3675 = vmatpush2.xpose.msra.mxu0 %v3674
    %3676 = vmatprep.subr.mxu0 0.0
    %v3677 = vand.u32 %v518, 4294901760
    %3678 = vmatpush2.xpose.msra.mxu0 %v3677
    %3679 = vmatprep.subr.mxu0 0.0
    %v3680 = vand.u32 %v515, 4294901760
    %3681 = vmatpush2.xpose.msra.mxu0 %v3680
    %3682 = vmatprep.subr.mxu0 0.0
    %v3683 = vand.u32 %v512, 4294901760
    %3684 = vmatpush2.xpose.msra.mxu0 %v3683
    %3685 = vmatprep.subr.mxu0 0.0
    %v3686 = vand.u32 %v509, 4294901760
    %3687 = vmatpush2.xpose.msra.mxu0 %v3686
    %3688 = vmatprep.subr.mxu0 0.0
    %v3689 = vand.u32 %v506, 4294901760
    %3690 = vmatpush2.xpose.msra.mxu0 %v3689
    %3691 = vmatprep.mubr.f32.mxu0 0.0
    %v3692 = vand.u32 %v167, 4294901760
    %v3693 = vsub.f32 %v167, %v3692
    %v3694 = vand.u32 %v3693, 4294901760
    %3695 = vmatmul.mubr.f32.gmra.mxu0 %v3694
    %v3696 = vpop.f32.mrf.mxu0
    %v3697 = vadd.f32 %v3591, %v3696
    %v3698 = vpop.f32.mrf.mxu0
    %v3699 = vadd.f32 %v3593, %v3698
    %3700 = vdwg.mxu0
    %3701 = vmatprep.subr.mxu0 0.0
    %v3702 = vand.u32 %v503, 4294901760
    %v3703 = vsub.f32 %v503, %v3702
    %v3704 = vand.u32 %v3703, 4294901760
    %3705 = vmatpush1.xpose.msra.mxu0 %v3704
    %3706 = vmatprep.subr.mxu0 0.0
    %v3707 = vand.u32 %v500, 4294901760
    %v3708 = vsub.f32 %v500, %v3707
    %v3709 = vand.u32 %v3708, 4294901760
    %3710 = vmatpush1.xpose.msra.mxu0 %v3709
    %3711 = vmatprep.subr.mxu0 0.0
    %v3712 = vand.u32 %v497, 4294901760
    %v3713 = vsub.f32 %v497, %v3712
    %v3714 = vand.u32 %v3713, 4294901760
    %3715 = vmatpush1.xpose.msra.mxu0 %v3714
    %3716 = vmatprep.subr.mxu0 0.0
    %v3717 = vand.u32 %v494, 4294901760
    %v3718 = vsub.f32 %v494, %v3717
    %v3719 = vand.u32 %v3718, 4294901760
    %3720 = vmatpush1.xpose.msra.mxu0 %v3719
    %3721 = vmatprep.subr.mxu0 0.0
    %v3722 = vand.u32 %v491, 4294901760
    %v3723 = vsub.f32 %v491, %v3722
    %v3724 = vand.u32 %v3723, 4294901760
    %3725 = vmatpush1.xpose.msra.mxu0 %v3724
    %3726 = vmatprep.subr.mxu0 0.0
    %v3727 = vand.u32 %v488, 4294901760
    %v3728 = vsub.f32 %v488, %v3727
    %v3729 = vand.u32 %v3728, 4294901760
    %3730 = vmatpush1.xpose.msra.mxu0 %v3729
    %3731 = vmatprep.subr.mxu0 0.0
    %v3732 = vand.u32 %v485, 4294901760
    %v3733 = vsub.f32 %v485, %v3732
    %v3734 = vand.u32 %v3733, 4294901760
    %3735 = vmatpush1.xpose.msra.mxu0 %v3734
    %3736 = vmatprep.subr.mxu0 0.0
    %v3737 = vand.u32 %v482, 4294901760
    %v3738 = vsub.f32 %v482, %v3737
    %v3739 = vand.u32 %v3738, 4294901760
    %3740 = vmatpush1.xpose.msra.mxu0 %v3739
    %3741 = vmatprep.subr.mxu0 0.0
    %v3742 = vand.u32 %v479, 4294901760
    %v3743 = vsub.f32 %v479, %v3742
    %v3744 = vand.u32 %v3743, 4294901760
    %3745 = vmatpush1.xpose.msra.mxu0 %v3744
    %3746 = vmatprep.subr.mxu0 0.0
    %v3747 = vand.u32 %v476, 4294901760
    %v3748 = vsub.f32 %v476, %v3747
    %v3749 = vand.u32 %v3748, 4294901760
    %3750 = vmatpush1.xpose.msra.mxu0 %v3749
    %3751 = vmatprep.subr.mxu0 0.0
    %v3752 = vand.u32 %v473, 4294901760
    %v3753 = vsub.f32 %v473, %v3752
    %v3754 = vand.u32 %v3753, 4294901760
    %3755 = vmatpush1.xpose.msra.mxu0 %v3754
    %3756 = vmatprep.subr.mxu0 0.0
    %v3757 = vand.u32 %v470, 4294901760
    %v3758 = vsub.f32 %v470, %v3757
    %v3759 = vand.u32 %v3758, 4294901760
    %3760 = vmatpush1.xpose.msra.mxu0 %v3759
    %3761 = vmatprep.subr.mxu0 0.0
    %v3762 = vand.u32 %v467, 4294901760
    %v3763 = vsub.f32 %v467, %v3762
    %v3764 = vand.u32 %v3763, 4294901760
    %3765 = vmatpush1.xpose.msra.mxu0 %v3764
    %3766 = vmatprep.subr.mxu0 0.0
    %v3767 = vand.u32 %v464, 4294901760
    %v3768 = vsub.f32 %v464, %v3767
    %v3769 = vand.u32 %v3768, 4294901760
    %3770 = vmatpush1.xpose.msra.mxu0 %v3769
    %3771 = vmatprep.subr.mxu0 0.0
    %v3772 = vand.u32 %v461, 4294901760
    %v3773 = vsub.f32 %v461, %v3772
    %v3774 = vand.u32 %v3773, 4294901760
    %3775 = vmatpush1.xpose.msra.mxu0 %v3774
    %3776 = vmatprep.subr.mxu0 0.0
    %v3777 = vand.u32 %v458, 4294901760
    %v3778 = vsub.f32 %v458, %v3777
    %v3779 = vand.u32 %v3778, 4294901760
    %3780 = vmatpush1.xpose.msra.mxu0 %v3779
    %3781 = vmatprep.subr.mxu0 0.0
    %v3782 = vand.u32 %v551, 4294901760
    %v3783 = vsub.f32 %v551, %v3782
    %v3784 = vand.u32 %v3783, 4294901760
    %3785 = vmatpush2.xpose.msra.mxu0 %v3784
    %3786 = vmatprep.subr.mxu0 0.0
    %v3787 = vand.u32 %v548, 4294901760
    %v3788 = vsub.f32 %v548, %v3787
    %v3789 = vand.u32 %v3788, 4294901760
    %3790 = vmatpush2.xpose.msra.mxu0 %v3789
    %3791 = vmatprep.subr.mxu0 0.0
    %v3792 = vand.u32 %v545, 4294901760
    %v3793 = vsub.f32 %v545, %v3792
    %v3794 = vand.u32 %v3793, 4294901760
    %3795 = vmatpush2.xpose.msra.mxu0 %v3794
    %3796 = vmatprep.subr.mxu0 0.0
    %v3797 = vand.u32 %v542, 4294901760
    %v3798 = vsub.f32 %v542, %v3797
    %v3799 = vand.u32 %v3798, 4294901760
    %3800 = vmatpush2.xpose.msra.mxu0 %v3799
    %3801 = vmatprep.subr.mxu0 0.0
    %v3802 = vand.u32 %v539, 4294901760
    %v3803 = vsub.f32 %v539, %v3802
    %v3804 = vand.u32 %v3803, 4294901760
    %3805 = vmatpush2.xpose.msra.mxu0 %v3804
    %3806 = vmatprep.subr.mxu0 0.0
    %v3807 = vand.u32 %v536, 4294901760
    %v3808 = vsub.f32 %v536, %v3807
    %v3809 = vand.u32 %v3808, 4294901760
    %3810 = vmatpush2.xpose.msra.mxu0 %v3809
    %3811 = vmatprep.subr.mxu0 0.0
    %v3812 = vand.u32 %v533, 4294901760
    %v3813 = vsub.f32 %v533, %v3812
    %v3814 = vand.u32 %v3813, 4294901760
    %3815 = vmatpush2.xpose.msra.mxu0 %v3814
    %3816 = vmatprep.subr.mxu0 0.0
    %v3817 = vand.u32 %v530, 4294901760
    %v3818 = vsub.f32 %v530, %v3817
    %v3819 = vand.u32 %v3818, 4294901760
    %3820 = vmatpush2.xpose.msra.mxu0 %v3819
    %3821 = vmatprep.subr.mxu0 0.0
    %v3822 = vand.u32 %v527, 4294901760
    %v3823 = vsub.f32 %v527, %v3822
    %v3824 = vand.u32 %v3823, 4294901760
    %3825 = vmatpush2.xpose.msra.mxu0 %v3824
    %3826 = vmatprep.subr.mxu0 0.0
    %v3827 = vand.u32 %v524, 4294901760
    %v3828 = vsub.f32 %v524, %v3827
    %v3829 = vand.u32 %v3828, 4294901760
    %3830 = vmatpush2.xpose.msra.mxu0 %v3829
    %3831 = vmatprep.subr.mxu0 0.0
    %v3832 = vand.u32 %v521, 4294901760
    %v3833 = vsub.f32 %v521, %v3832
    %v3834 = vand.u32 %v3833, 4294901760
    %3835 = vmatpush2.xpose.msra.mxu0 %v3834
    %3836 = vmatprep.subr.mxu0 0.0
    %v3837 = vand.u32 %v518, 4294901760
    %v3838 = vsub.f32 %v518, %v3837
    %v3839 = vand.u32 %v3838, 4294901760
    %3840 = vmatpush2.xpose.msra.mxu0 %v3839
    %3841 = vmatprep.subr.mxu0 0.0
    %v3842 = vand.u32 %v515, 4294901760
    %v3843 = vsub.f32 %v515, %v3842
    %v3844 = vand.u32 %v3843, 4294901760
    %3845 = vmatpush2.xpose.msra.mxu0 %v3844
    %3846 = vmatprep.subr.mxu0 0.0
    %v3847 = vand.u32 %v512, 4294901760
    %v3848 = vsub.f32 %v512, %v3847
    %v3849 = vand.u32 %v3848, 4294901760
    %3850 = vmatpush2.xpose.msra.mxu0 %v3849
    %3851 = vmatprep.subr.mxu0 0.0
    %v3852 = vand.u32 %v509, 4294901760
    %v3853 = vsub.f32 %v509, %v3852
    %v3854 = vand.u32 %v3853, 4294901760
    %3855 = vmatpush2.xpose.msra.mxu0 %v3854
    %3856 = vmatprep.subr.mxu0 0.0
    %v3857 = vand.u32 %v506, 4294901760
    %v3858 = vsub.f32 %v506, %v3857
    %v3859 = vand.u32 %v3858, 4294901760
    %3860 = vmatpush2.xpose.msra.mxu0 %v3859
    %3861 = vmatprep.mubr.f32.mxu0 0.0
    %v3862 = vand.u32 %v167, 4294901760
    %3863 = vmatmul.mubr.f32.gmra.mxu0 %v3862
    %v3864 = vpop.f32.mrf.mxu0
    %v3865 = vadd.f32 %v3697, %v3864
    %v3866 = vpop.f32.mrf.mxu0
    %v3867 = vadd.f32 %v3699, %v3866
    %3868 = vdwg.mxu0
    %3869 = vmatprep.subr.mxu0 0.0
    %v3870 = vand.u32 %v503, 4294901760
    %3871 = vmatpush1.xpose.msra.mxu0 %v3870
    %3872 = vmatprep.subr.mxu0 0.0
    %v3873 = vand.u32 %v500, 4294901760
    %3874 = vmatpush1.xpose.msra.mxu0 %v3873
    %3875 = vmatprep.subr.mxu0 0.0
    %v3876 = vand.u32 %v497, 4294901760
    %3877 = vmatpush1.xpose.msra.mxu0 %v3876
    %3878 = vmatprep.subr.mxu0 0.0
    %v3879 = vand.u32 %v494, 4294901760
    %3880 = vmatpush1.xpose.msra.mxu0 %v3879
    %3881 = vmatprep.subr.mxu0 0.0
    %v3882 = vand.u32 %v491, 4294901760
    %3883 = vmatpush1.xpose.msra.mxu0 %v3882
    %3884 = vmatprep.subr.mxu0 0.0
    %v3885 = vand.u32 %v488, 4294901760
    %3886 = vmatpush1.xpose.msra.mxu0 %v3885
    %3887 = vmatprep.subr.mxu0 0.0
    %v3888 = vand.u32 %v485, 4294901760
    %3889 = vmatpush1.xpose.msra.mxu0 %v3888
    %3890 = vmatprep.subr.mxu0 0.0
    %v3891 = vand.u32 %v482, 4294901760
    %3892 = vmatpush1.xpose.msra.mxu0 %v3891
    %3893 = vmatprep.subr.mxu0 0.0
    %v3894 = vand.u32 %v479, 4294901760
    %3895 = vmatpush1.xpose.msra.mxu0 %v3894
    %3896 = vmatprep.subr.mxu0 0.0
    %v3897 = vand.u32 %v476, 4294901760
    %3898 = vmatpush1.xpose.msra.mxu0 %v3897
    %3899 = vmatprep.subr.mxu0 0.0
    %v3900 = vand.u32 %v473, 4294901760
    %3901 = vmatpush1.xpose.msra.mxu0 %v3900
    %3902 = vmatprep.subr.mxu0 0.0
    %v3903 = vand.u32 %v470, 4294901760
    %3904 = vmatpush1.xpose.msra.mxu0 %v3903
    %3905 = vmatprep.subr.mxu0 0.0
    %v3906 = vand.u32 %v467, 4294901760
    %3907 = vmatpush1.xpose.msra.mxu0 %v3906
    %3908 = vmatprep.subr.mxu0 0.0
    %v3909 = vand.u32 %v464, 4294901760
    %3910 = vmatpush1.xpose.msra.mxu0 %v3909
    %3911 = vmatprep.subr.mxu0 0.0
    %v3912 = vand.u32 %v461, 4294901760
    %3913 = vmatpush1.xpose.msra.mxu0 %v3912
    %3914 = vmatprep.subr.mxu0 0.0
    %v3915 = vand.u32 %v458, 4294901760
    %3916 = vmatpush1.xpose.msra.mxu0 %v3915
    %3917 = vmatprep.subr.mxu0 0.0
    %v3918 = vand.u32 %v551, 4294901760
    %3919 = vmatpush2.xpose.msra.mxu0 %v3918
    %3920 = vmatprep.subr.mxu0 0.0
    %v3921 = vand.u32 %v548, 4294901760
    %3922 = vmatpush2.xpose.msra.mxu0 %v3921
    %3923 = vmatprep.subr.mxu0 0.0
    %v3924 = vand.u32 %v545, 4294901760
    %3925 = vmatpush2.xpose.msra.mxu0 %v3924
    %3926 = vmatprep.subr.mxu0 0.0
    %v3927 = vand.u32 %v542, 4294901760
    %3928 = vmatpush2.xpose.msra.mxu0 %v3927
    %3929 = vmatprep.subr.mxu0 0.0
    %v3930 = vand.u32 %v539, 4294901760
    %3931 = vmatpush2.xpose.msra.mxu0 %v3930
    %3932 = vmatprep.subr.mxu0 0.0
    %v3933 = vand.u32 %v536, 4294901760
    %3934 = vmatpush2.xpose.msra.mxu0 %v3933
    %3935 = vmatprep.subr.mxu0 0.0
    %v3936 = vand.u32 %v533, 4294901760
    %3937 = vmatpush2.xpose.msra.mxu0 %v3936
    %3938 = vmatprep.subr.mxu0 0.0
    %v3939 = vand.u32 %v530, 4294901760
    %3940 = vmatpush2.xpose.msra.mxu0 %v3939
    %3941 = vmatprep.subr.mxu0 0.0
    %v3942 = vand.u32 %v527, 4294901760
    %3943 = vmatpush2.xpose.msra.mxu0 %v3942
    %3944 = vmatprep.subr.mxu0 0.0
    %v3945 = vand.u32 %v524, 4294901760
    %3946 = vmatpush2.xpose.msra.mxu0 %v3945
    %3947 = vmatprep.subr.mxu0 0.0
    %v3948 = vand.u32 %v521, 4294901760
    %3949 = vmatpush2.xpose.msra.mxu0 %v3948
    %3950 = vmatprep.subr.mxu0 0.0
    %v3951 = vand.u32 %v518, 4294901760
    %3952 = vmatpush2.xpose.msra.mxu0 %v3951
    %3953 = vmatprep.subr.mxu0 0.0
    %v3954 = vand.u32 %v515, 4294901760
    %3955 = vmatpush2.xpose.msra.mxu0 %v3954
    %3956 = vmatprep.subr.mxu0 0.0
    %v3957 = vand.u32 %v512, 4294901760
    %3958 = vmatpush2.xpose.msra.mxu0 %v3957
    %3959 = vmatprep.subr.mxu0 0.0
    %v3960 = vand.u32 %v509, 4294901760
    %3961 = vmatpush2.xpose.msra.mxu0 %v3960
    %3962 = vmatprep.subr.mxu0 0.0
    %v3963 = vand.u32 %v506, 4294901760
    %3964 = vmatpush2.xpose.msra.mxu0 %v3963
    %3965 = vmatprep.mubr.f32.mxu0 0.0
    %v3966 = vand.u32 %v167, 4294901760
    %3967 = vmatmul.mubr.f32.gmra.mxu0 %v3966
    %v3968 = vpop.f32.mrf.mxu0
    %v3969 = vadd.f32 %v3865, %v3968
    %v3970 = vpop.f32.mrf.mxu0
    %v3971 = vadd.f32 %v3867, %v3970
    %3972 = vdwg.mxu0
    %v3981 = vcombine.low %v1404, %v1406
    %v3982 = vcombine.low %v2259, %v2261
    %v3983 = vcombine.low %v3114, %v3116
    %v3984 = vcombine.low %v3969, %v3971
    %v3986 = vunpack.c.l.s4 1966171168
    %v3987 = vunpack.c.0.s8 %v3986
    %v3988 = vlaneseq
    %v3989 = vshrl.u32 %v3988, 7
    %v3990 = vsub.s32 %v3987, %v3989
    %v3991 = vrot.slane %v3981, %v3990
    %v3993 = vunpack.c.l.s4 1966171168
    %v3994 = vunpack.c.0.s8 %v3993
    %v3995 = vlaneseq
    %v3996 = vshrl.u32 %v3995, 7
    %v3997 = vsub.s32 %v3994, %v3996
    %v3998 = vrot.slane %v3982, %v3997
    %v4000 = vunpack.c.l.s4 1966171168
    %v4001 = vunpack.c.0.s8 %v4000
    %v4002 = vlaneseq
    %v4003 = vshrl.u32 %v4002, 7
    %v4004 = vsub.s32 %v4001, %v4003
    %v4005 = vrot.slane %v3983, %v4004
    %v4007 = vunpack.c.l.s4 1966171168
    %v4008 = vunpack.c.0.s8 %v4007
    %v4009 = vlaneseq
    %v4010 = vshrl.u32 %v4009, 7
    %v4011 = vsub.s32 %v4008, %v4010
    %v4012 = vrot.slane %v3984, %v4011
    %v4013 = vcombine.low %v3991, %v3998
    %v4014 = vcombine.low %v4005, %v4012
    %v4016 = vunpack.c.l.s4 1966171168
    %v4017 = vunpack.c.0.s8 %v4016
    %v4018 = vlaneseq
    %v4019 = vshrl.u32 %v4018, 7
    %v4020 = vsub.s32 %v4017, %v4019
    %v4021 = vrot.slane %v4013, %v4020
    %v4023 = vunpack.c.l.s4 1966171168
    %v4024 = vunpack.c.0.s8 %v4023
    %v4025 = vlaneseq
    %v4026 = vshrl.u32 %v4025, 7
    %v4027 = vsub.s32 %v4024, %v4026
    %v4028 = vrot.slane %v4014, %v4027
    %v4029 = vcombine.low %v4021, %v4028
    %v4031 = vadd.f32 %v164, %v4029
    %4032 = vst [vmem:[#allocation2] sm:$0xff] %v4031
    // Predicated region
    $region22: #{tpu_custom_call.1} parent=1 // pred_check
      %p4033 = pneg %p30
    $region23: #{tpu_custom_call.1} parent=1 // pred_check_branch
      %4035 = sbr.rel (%p4033) target = $region25
    $region24: #{tpu_custom_call.1} parent=1 // pred_region
      %v4036 = vld [vmem:[#allocation2] sm:$0xff]
      %s4037 = sld [smem:[#allocation3]]
      %v4038 = vstv %s4037
      %v4039 = vadd.f32 %v4036, %v4038
      %4041 = vst [vmem:[#allocation7] ss:$8 sm:$0x1] %v4039
      %4042 = vst [vmem:[#allocation7] ss:$8 sm:$0x0] %v4039
      %v4043 = vrot.slane %v4039, 1
      %s4046 = scalar_lea.vmem [#allocation7], 1
      %4047 = vst [vmem:[%s4046] ss:$8 sm:$0x1] %v4043
      %4048 = vst [vmem:[%s4046] ss:$8 sm:$0x0] %v4043
      %v4049 = vrot.slane %v4039, 2
      %s4052 = scalar_lea.vmem [#allocation7], 2
      %4053 = vst [vmem:[%s4052] ss:$8 sm:$0x1] %v4049
      %4054 = vst [vmem:[%s4052] ss:$8 sm:$0x0] %v4049
      %v4055 = vrot.slane %v4039, 3
      %s4058 = scalar_lea.vmem [#allocation7], 3
      %4059 = vst [vmem:[%s4058] ss:$8 sm:$0x1] %v4055
      %4060 = vst [vmem:[%s4058] ss:$8 sm:$0x0] %v4055
      %v4061 = vrot.slane %v4039, 4
      %s4064 = scalar_lea.vmem [#allocation7], 4
      %4065 = vst [vmem:[%s4064] ss:$8 sm:$0x1] %v4061
      %4066 = vst [vmem:[%s4064] ss:$8 sm:$0x0] %v4061
      %v4067 = vrot.slane %v4039, 5
      %s4070 = scalar_lea.vmem [#allocation7], 5
      %4071 = vst [vmem:[%s4070] ss:$8 sm:$0x1] %v4067
      %4072 = vst [vmem:[%s4070] ss:$8 sm:$0x0] %v4067
      %v4073 = vrot.slane %v4039, 6
      %s4076 = scalar_lea.vmem [#allocation7], 6
      %4077 = vst [vmem:[%s4076] ss:$8 sm:$0x1] %v4073
      %4078 = vst [vmem:[%s4076] ss:$8 sm:$0x0] %v4073
      %v4079 = vrot.slane %v4039, 7
      %s4082 = scalar_lea.vmem [#allocation7], 7
      %4083 = vst [vmem:[%s4082] ss:$8 sm:$0x1] %v4079
      %4084 = vst [vmem:[%s4082] ss:$8 sm:$0x0] %v4079
    $region25: #{tpu_custom_call.1} parent=1 // pred_fallthru
      _
    // Predicated region
    $region26: #{tpu_custom_call.1} parent=1 // pred_check
      _
    $region27: #{tpu_custom_call.1} parent=1 // pred_check_branch
      %4086 = sbr.rel (0) target = $region29
    $region28: #{tpu_custom_call.1} parent=1 // pred_region
      %s4088 = ssub.s32 128, 128
      %4089 = vsyncadd [#allocation6], %s4088
      %s4091 = sshll.u32 [#allocation7], 4
      %s4092 = int_to_ptr.vmem [resolvable:$true] %s4091
      %4094 = dma.vmem_to_hbm [thread:$0]  %s4092, 128, %s3, [#allocation6]
    $region29: #{tpu_custom_call.1} parent=1 // pred_fallthru
      _
    // Predicated region
    $region30: #{tpu_custom_call.1} parent=1 // pred_check
      _
    $region31: #{tpu_custom_call.1} parent=1 // pred_check_branch
      %4096 = sbr.rel (0) target = $region33
    $region32: #{tpu_custom_call.1} parent=1 // pred_region
      %4097 = dma.done [#allocation6], 128
    $region33: #{tpu_custom_call.1} parent=1 // pred_fallthru
      _
    %4098 = vsyncpa [#allocation5], 1
    %4099 = vsyncpa [#allocation6], 1

</llo_original>
